<compile_context>
chip_gen: v5e
topology: v5e:2x2
jax: 0.10.0
libtpu: 0.0.40
codegen_flags: <defaults>
</compile_context>

<pallas_src>
from functools import partial

import numpy as np
import jax
import jax.numpy as jnp
from jax.experimental import pallas as pl
from jax.experimental.pallas import tpu as pltpu


def temporal_attn_kernel(x_ref, bias_ref, w_ref, blin_ref, a_ref, o_ref, *,
                         alpha, window, n_feat, embed, block_b):
    K, F, E, Bb = window, n_feat, embed, block_b

    x = x_ref[...]                                   # (F, K, Bb), batch on lanes
    xs = [x[f] for f in range(F)]                    # F slabs of (K, Bb)

    # Fused L/R projection: single pass over x, scalar weights from SMEM.
    # L[c], R[c] are (K_time, Bb) slabs.
    L, R = [], []
    for c in range(E):
        lc = xs[0] * w_ref[c, 0] + blin_ref[c]       # lin bias folded into L half
        rc = xs[0] * w_ref[c, F]
        for f in range(1, F):
            lc = lc + xs[f] * w_ref[c, f]
            rc = rc + xs[f] * w_ref[c, F + f]
        L.append(lc)
        R.append(rc)

    # Scores e[j] (one (K_i, Bb) slab per key index j), accumulated directly on
    # top of the attention bias (bias passed pre-transposed / lane-broadcast).
    e_slabs = []
    for j in range(K):
        ej = bias_ref[j]                             # (K_i, Bb)
        for c in range(E):
            zc = L[c] + R[c][j:j + 1, :]             # (K_i, Bb) + (1, Bb) sublane bcast
            zc = jnp.where(zc > 0.0, zc, alpha * zc) # LeakyReLU(alpha)
            ej = ej + a_ref[c] * zc                  # a[c] is an SMEM scalar
        e_slabs.append(ej)

    # softmax over j (torch dim=2): plain vreg max/add chains across the K_j
    # slabs, exact divide (no approx reciprocal).
    m = e_slabs[0]
    for j in range(1, K):
        m = jnp.maximum(m, e_slabs[j])
    p_slabs = [jnp.exp(e_slabs[j] - m) for j in range(K)]
    s = p_slabs[0]
    for j in range(1, K):
        s = s + p_slabs[j]
    inv = 1.0 / s
    attn = [p_slabs[j] * inv for j in range(K)]      # attn[j] = attention[:, :, j]

    # h[f, i, b] = sigmoid( sum_j attn[j][i, b] * x[f, j, b] )
    for f in range(F):
        acc = attn[0] * x[f, 0:1, :]
        for j in range(1, K):
            acc = acc + attn[j] * x[f, j:j + 1, :]
        o_ref[f] = jax.nn.sigmoid(acc)               # lane-dense (K_i, Bb) store


def _pick_num_blocks(batch):
    """One grid step per TensorCore (2 on v7x, else 1); keep the per-step lane
    width (batch per block) <= 128 to bound vreg pressure."""
    try:
        kind = jax.devices()[0].device_kind.lower()
    except Exception:
        kind = ""
    cores = 2 if ("v7" in kind or "tpu7" in kind) else 1
    g = cores if (batch % cores == 0) else 1
    while batch // g > 128 and batch % (2 * g) == 0:
        g *= 2
    return g


def temporal_attention(x, lin_w, lin_b, a, bias, alpha, num_blocks=None):
    """x: (B, K, F) f32. lin_w: (E, 2F) nn.Linear weight. lin_b: (E,). a: (E, 1). bias: (K, K)."""
    B, K, F = x.shape
    E = lin_w.shape[0]
    G = num_blocks if num_blocks is not None else _pick_num_blocks(B)
    if B % G != 0:
        G = 1
    Bb = B // G

    # Wrapper-side layout plumbing: batch-in-lanes slabs.
    x_fkb = jnp.asarray(x, jnp.float32).reshape(G, Bb, K, F).transpose(0, 3, 2, 1)      # (G, F, K, Bb)
    bias_t = jnp.broadcast_to(jnp.asarray(bias, jnp.float32).T[:, :, None], (K, K, Bb)) # (K_j, K_i, Bb)
    w = jnp.asarray(lin_w, jnp.float32)                    # (E, 2F) -> SMEM scalars
    blin = jnp.asarray(lin_b, jnp.float32).reshape(E)      # SMEM
    avec = jnp.asarray(a, jnp.float32).reshape(E)          # SMEM

    kernel = partial(temporal_attn_kernel, alpha=float(alpha),
                     window=K, n_feat=F, embed=E, block_b=Bb)

    out = pl.pallas_call(
        kernel,
        out_shape=jax.ShapeDtypeStruct((G, F, K, Bb), jnp.float32),
        grid_spec=pltpu.PrefetchScalarGridSpec(
            num_scalar_prefetch=0,
            grid=(G,),
            in_specs=[
                pl.BlockSpec((None, F, K, Bb), lambda g: (g, 0, 0, 0)),   # x, batch on lanes
                pl.BlockSpec((K, K, Bb), lambda g: (0, 0, 0)),            # bias^T, lane-broadcast
                pl.BlockSpec(memory_space=pltpu.MemorySpace.SMEM),        # lin weight (E, 2F)
                pl.BlockSpec(memory_space=pltpu.MemorySpace.SMEM),        # lin bias (E,)
                pl.BlockSpec(memory_space=pltpu.MemorySpace.SMEM),        # attention vector a (E,)
            ],
            out_specs=pl.BlockSpec((None, F, K, Bb), lambda g: (g, 0, 0, 0)),
        ),
        compiler_params=pltpu.CompilerParams(dimension_semantics=("parallel",)),
    )(x_fkb, bias_t, w, blin, avec)

    return out.transpose(0, 3, 2, 1).reshape(B, K, F)      # back to (B, K, F)


def reference_jax(x, lin_w, lin_b, a, bias, alpha):
    """Pure-JAX reference matching the PyTorch forward (eval mode)."""
    B, K, F = x.shape
    E = lin_w.shape[0]
    w1t = lin_w[:, :F].T
    w2t = lin_w[:, F:].T
    L = x @ w1t + lin_b[None, None, :]                    # (B, K, E)
    R = x @ w2t                                           # (B, K, E)
    z = L[:, :, None, :] + R[:, None, :, :]               # (B, K, K, E)
    z = jnp.where(z > 0, z, alpha * z)
    e = jnp.einsum("bijk,k->bij", z, a.reshape(E)) + bias[None]
    attn = jax.nn.softmax(e, axis=-1)
    return jax.nn.sigmoid(jnp.einsum("bij,bjf->bif", attn, x))


def xavier_uniform(key, shape, gain=1.0):
    fan_out, fan_in = shape[0], shape[1]
    bound = gain * np.sqrt(6.0 / (fan_in + fan_out))
    return jax.random.uniform(key, shape, jnp.float32, -bound, bound)


if __name__ == "__main__":
    # Module config: n_features=4, window_size=8, dropout=0.2, alpha=0.2,
    # embed_dim=None -> embed_dim = 2 * n_features = 8 (GATv2), use_bias=True.
    # Batch = 64 so the batch-in-lanes layout gets 64 live lanes per grid step.
    B, K, F = 64, 8, 4
    alpha = 0.2
    E = 2 * F                      # embed_dim after GATv2 doubling
    lin_in = 2 * F                 # lin input dim for GATv2

    key = jax.random.PRNGKey(0)
    k_x, k_w, k_b, k_a, k_bias = jax.random.split(key, 5)

    x = jax.random.normal(k_x, (B, K, F), jnp.float32)
    lin_w = xavier_uniform(k_w, (E, lin_in))                               # nn.Linear weight (out, in)
    lin_b = jax.random.uniform(k_b, (E,), jnp.float32,
                               -1.0 / np.sqrt(lin_in), 1.0 / np.sqrt(lin_in))
    a = xavier_uniform(k_a, (E, 1), gain=1.414)                            # attention vector
    bias = jax.random.normal(k_bias, (K, K), jnp.float32) * 0.1            # (window, window) bias

    out = temporal_attention(x, lin_w, lin_b, a, bias, alpha)
    out = jax.block_until_ready(out)

    ref = jax.block_until_ready(reference_jax(x, lin_w, lin_b, a, bias, alpha))
    # Exact softmax divide -> tight tolerance again.
    np.testing.assert_allclose(np.asarray(out), np.asarray(ref), rtol=1e-5, atol=1e-5)

    print("KERNEL_OK")
</pallas_src>

<mosaic_0001>
module attributes {stable_mosaic.version = 11 : i64} {
  func.func @temporal_attn_kernel(%arg0: i32, %arg1: memref<1x4x8x64xf32, #tpu.memory_space<vmem>>, %arg2: memref<8x8x64xf32, #tpu.memory_space<vmem>>, %arg3: memref<8x8xf32, #tpu.memory_space<smem>>, %arg4: memref<8xf32, #tpu.memory_space<smem>>, %arg5: memref<8xf32, #tpu.memory_space<smem>>, %arg6: memref<1x4x8x64xf32, #tpu.memory_space<vmem>>) attributes {dimension_semantics = [#tpu.dimension_semantics<parallel>], iteration_bounds = array<i64: 1>, scalar_prefetch = 0 : i64, scratch_operands = 0 : i64, tpu.core_type = #tpu.core_type<tc>, window_params = [{transform_indices = @transform_0, window_bounds = array<i64: 1, 4, 8, 64>}, {pipeline_mode = #tpu.pipeline_mode<synchronous>, transform_indices = @transform_1, window_bounds = array<i64: 8, 8, 64>}, {transform_indices = @transform_2, window_bounds = array<i64: 8, 8>}, {transform_indices = @transform_3, window_bounds = array<i64: 8>}, {transform_indices = @transform_4, window_bounds = array<i64: 8>}, {transform_indices = @transform_5, window_bounds = array<i64: 1, 4, 8, 64>}]} {
    %c0 = arith.constant 0 : index
    %c0_0 = arith.constant 0 : index
    %c0_1 = arith.constant 0 : index
    %c0_2 = arith.constant 0 : index
    %0 = vector.load %arg1[%c0, %c0_0, %c0_1, %c0_2] : memref<1x4x8x64xf32, #tpu.memory_space<vmem>>, vector<1x4x8x64xf32>
    %1 = vector.shape_cast %0 : vector<1x4x8x64xf32> to vector<4x8x64xf32>
    %2 = vector.extract_strided_slice %1 {offsets = [0, 0, 0], sizes = [1, 8, 64], strides = [1, 1, 1]} : vector<4x8x64xf32> to vector<1x8x64xf32>
    %3 = vector.shape_cast %2 : vector<1x8x64xf32> to vector<8x64xf32>
    %4 = vector.extract_strided_slice %1 {offsets = [1, 0, 0], sizes = [1, 8, 64], strides = [1, 1, 1]} : vector<4x8x64xf32> to vector<1x8x64xf32>
    %5 = vector.shape_cast %4 : vector<1x8x64xf32> to vector<8x64xf32>
    %6 = vector.extract_strided_slice %1 {offsets = [2, 0, 0], sizes = [1, 8, 64], strides = [1, 1, 1]} : vector<4x8x64xf32> to vector<1x8x64xf32>
    %7 = vector.shape_cast %6 : vector<1x8x64xf32> to vector<8x64xf32>
    %8 = vector.extract_strided_slice %1 {offsets = [3, 0, 0], sizes = [1, 8, 64], strides = [1, 1, 1]} : vector<4x8x64xf32> to vector<1x8x64xf32>
    %9 = vector.shape_cast %8 : vector<1x8x64xf32> to vector<8x64xf32>
    %c0_3 = arith.constant 0 : index
    %c0_4 = arith.constant 0 : index
    %10 = memref.load %arg3[%c0_3, %c0_4] : memref<8x8xf32, #tpu.memory_space<smem>>
    %11 = vector.broadcast %10 : f32 to vector<8x64xf32>
    %12 = arith.mulf %3, %11 : vector<8x64xf32>
    %c0_5 = arith.constant 0 : index
    %13 = memref.load %arg4[%c0_5] : memref<8xf32, #tpu.memory_space<smem>>
    %14 = vector.broadcast %13 : f32 to vector<8x64xf32>
    %15 = arith.addf %12, %14 : vector<8x64xf32>
    %c0_6 = arith.constant 0 : index
    %c4 = arith.constant 4 : index
    %16 = memref.load %arg3[%c0_6, %c4] : memref<8x8xf32, #tpu.memory_space<smem>>
    %17 = vector.broadcast %16 : f32 to vector<8x64xf32>
    %18 = arith.mulf %3, %17 : vector<8x64xf32>
    %c0_7 = arith.constant 0 : index
    %c1 = arith.constant 1 : index
    %19 = memref.load %arg3[%c0_7, %c1] : memref<8x8xf32, #tpu.memory_space<smem>>
    %20 = vector.broadcast %19 : f32 to vector<8x64xf32>
    %21 = arith.mulf %5, %20 : vector<8x64xf32>
    %22 = arith.addf %15, %21 : vector<8x64xf32>
    %c0_8 = arith.constant 0 : index
    %c5 = arith.constant 5 : index
    %23 = memref.load %arg3[%c0_8, %c5] : memref<8x8xf32, #tpu.memory_space<smem>>
    %24 = vector.broadcast %23 : f32 to vector<8x64xf32>
    %25 = arith.mulf %5, %24 : vector<8x64xf32>
    %26 = arith.addf %18, %25 : vector<8x64xf32>
    %c0_9 = arith.constant 0 : index
    %c2 = arith.constant 2 : index
    %27 = memref.load %arg3[%c0_9, %c2] : memref<8x8xf32, #tpu.memory_space<smem>>
    %28 = vector.broadcast %27 : f32 to vector<8x64xf32>
    %29 = arith.mulf %7, %28 : vector<8x64xf32>
    %30 = arith.addf %22, %29 : vector<8x64xf32>
    %c0_10 = arith.constant 0 : index
    %c6 = arith.constant 6 : index
    %31 = memref.load %arg3[%c0_10, %c6] : memref<8x8xf32, #tpu.memory_space<smem>>
    %32 = vector.broadcast %31 : f32 to vector<8x64xf32>
    %33 = arith.mulf %7, %32 : vector<8x64xf32>
    %34 = arith.addf %26, %33 : vector<8x64xf32>
    %c0_11 = arith.constant 0 : index
    %c3 = arith.constant 3 : index
    %35 = memref.load %arg3[%c0_11, %c3] : memref<8x8xf32, #tpu.memory_space<smem>>
    %36 = vector.broadcast %35 : f32 to vector<8x64xf32>
    %37 = arith.mulf %9, %36 : vector<8x64xf32>
    %38 = arith.addf %30, %37 : vector<8x64xf32>
    %c0_12 = arith.constant 0 : index
    %c7 = arith.constant 7 : index
    %39 = memref.load %arg3[%c0_12, %c7] : memref<8x8xf32, #tpu.memory_space<smem>>
    %40 = vector.broadcast %39 : f32 to vector<8x64xf32>
    %41 = arith.mulf %9, %40 : vector<8x64xf32>
    %42 = arith.addf %34, %41 : vector<8x64xf32>
    %c1_13 = arith.constant 1 : index
    %c0_14 = arith.constant 0 : index
    %43 = memref.load %arg3[%c1_13, %c0_14] : memref<8x8xf32, #tpu.memory_space<smem>>
    %44 = vector.broadcast %43 : f32 to vector<8x64xf32>
    %45 = arith.mulf %3, %44 : vector<8x64xf32>
    %c1_15 = arith.constant 1 : index
    %46 = memref.load %arg4[%c1_15] : memref<8xf32, #tpu.memory_space<smem>>
    %47 = vector.broadcast %46 : f32 to vector<8x64xf32>
    %48 = arith.addf %45, %47 : vector<8x64xf32>
    %c1_16 = arith.constant 1 : index
    %c4_17 = arith.constant 4 : index
    %49 = memref.load %arg3[%c1_16, %c4_17] : memref<8x8xf32, #tpu.memory_space<smem>>
    %50 = vector.broadcast %49 : f32 to vector<8x64xf32>
    %51 = arith.mulf %3, %50 : vector<8x64xf32>
    %c1_18 = arith.constant 1 : index
    %c1_19 = arith.constant 1 : index
    %52 = memref.load %arg3[%c1_18, %c1_19] : memref<8x8xf32, #tpu.memory_space<smem>>
    %53 = vector.broadcast %52 : f32 to vector<8x64xf32>
    %54 = arith.mulf %5, %53 : vector<8x64xf32>
    %55 = arith.addf %48, %54 : vector<8x64xf32>
    %c1_20 = arith.constant 1 : index
    %c5_21 = arith.constant 5 : index
    %56 = memref.load %arg3[%c1_20, %c5_21] : memref<8x8xf32, #tpu.memory_space<smem>>
    %57 = vector.broadcast %56 : f32 to vector<8x64xf32>
    %58 = arith.mulf %5, %57 : vector<8x64xf32>
    %59 = arith.addf %51, %58 : vector<8x64xf32>
    %c1_22 = arith.constant 1 : index
    %c2_23 = arith.constant 2 : index
    %60 = memref.load %arg3[%c1_22, %c2_23] : memref<8x8xf32, #tpu.memory_space<smem>>
    %61 = vector.broadcast %60 : f32 to vector<8x64xf32>
    %62 = arith.mulf %7, %61 : vector<8x64xf32>
    %63 = arith.addf %55, %62 : vector<8x64xf32>
    %c1_24 = arith.constant 1 : index
    %c6_25 = arith.constant 6 : index
    %64 = memref.load %arg3[%c1_24, %c6_25] : memref<8x8xf32, #tpu.memory_space<smem>>
    %65 = vector.broadcast %64 : f32 to vector<8x64xf32>
    %66 = arith.mulf %7, %65 : vector<8x64xf32>
    %67 = arith.addf %59, %66 : vector<8x64xf32>
    %c1_26 = arith.constant 1 : index
    %c3_27 = arith.constant 3 : index
    %68 = memref.load %arg3[%c1_26, %c3_27] : memref<8x8xf32, #tpu.memory_space<smem>>
    %69 = vector.broadcast %68 : f32 to vector<8x64xf32>
    %70 = arith.mulf %9, %69 : vector<8x64xf32>
    %71 = arith.addf %63, %70 : vector<8x64xf32>
    %c1_28 = arith.constant 1 : index
    %c7_29 = arith.constant 7 : index
    %72 = memref.load %arg3[%c1_28, %c7_29] : memref<8x8xf32, #tpu.memory_space<smem>>
    %73 = vector.broadcast %72 : f32 to vector<8x64xf32>
    %74 = arith.mulf %9, %73 : vector<8x64xf32>
    %75 = arith.addf %67, %74 : vector<8x64xf32>
    %c2_30 = arith.constant 2 : index
    %c0_31 = arith.constant 0 : index
    %76 = memref.load %arg3[%c2_30, %c0_31] : memref<8x8xf32, #tpu.memory_space<smem>>
    %77 = vector.broadcast %76 : f32 to vector<8x64xf32>
    %78 = arith.mulf %3, %77 : vector<8x64xf32>
    %c2_32 = arith.constant 2 : index
    %79 = memref.load %arg4[%c2_32] : memref<8xf32, #tpu.memory_space<smem>>
    %80 = vector.broadcast %79 : f32 to vector<8x64xf32>
    %81 = arith.addf %78, %80 : vector<8x64xf32>
    %c2_33 = arith.constant 2 : index
    %c4_34 = arith.constant 4 : index
    %82 = memref.load %arg3[%c2_33, %c4_34] : memref<8x8xf32, #tpu.memory_space<smem>>
    %83 = vector.broadcast %82 : f32 to vector<8x64xf32>
    %84 = arith.mulf %3, %83 : vector<8x64xf32>
    %c2_35 = arith.constant 2 : index
    %c1_36 = arith.constant 1 : index
    %85 = memref.load %arg3[%c2_35, %c1_36] : memref<8x8xf32, #tpu.memory_space<smem>>
    %86 = vector.broadcast %85 : f32 to vector<8x64xf32>
    %87 = arith.mulf %5, %86 : vector<8x64xf32>
    %88 = arith.addf %81, %87 : vector<8x64xf32>
    %c2_37 = arith.constant 2 : index
    %c5_38 = arith.constant 5 : index
    %89 = memref.load %arg3[%c2_37, %c5_38] : memref<8x8xf32, #tpu.memory_space<smem>>
    %90 = vector.broadcast %89 : f32 to vector<8x64xf32>
    %91 = arith.mulf %5, %90 : vector<8x64xf32>
    %92 = arith.addf %84, %91 : vector<8x64xf32>
    %c2_39 = arith.constant 2 : index
    %c2_40 = arith.constant 2 : index
    %93 = memref.load %arg3[%c2_39, %c2_40] : memref<8x8xf32, #tpu.memory_space<smem>>
    %94 = vector.broadcast %93 : f32 to vector<8x64xf32>
    %95 = arith.mulf %7, %94 : vector<8x64xf32>
    %96 = arith.addf %88, %95 : vector<8x64xf32>
    %c2_41 = arith.constant 2 : index
    %c6_42 = arith.constant 6 : index
    %97 = memref.load %arg3[%c2_41, %c6_42] : memref<8x8xf32, #tpu.memory_space<smem>>
    %98 = vector.broadcast %97 : f32 to vector<8x64xf32>
    %99 = arith.mulf %7, %98 : vector<8x64xf32>
    %100 = arith.addf %92, %99 : vector<8x64xf32>
    %c2_43 = arith.constant 2 : index
    %c3_44 = arith.constant 3 : index
    %101 = memref.load %arg3[%c2_43, %c3_44] : memref<8x8xf32, #tpu.memory_space<smem>>
    %102 = vector.broadcast %101 : f32 to vector<8x64xf32>
    %103 = arith.mulf %9, %102 : vector<8x64xf32>
    %104 = arith.addf %96, %103 : vector<8x64xf32>
    %c2_45 = arith.constant 2 : index
    %c7_46 = arith.constant 7 : index
    %105 = memref.load %arg3[%c2_45, %c7_46] : memref<8x8xf32, #tpu.memory_space<smem>>
    %106 = vector.broadcast %105 : f32 to vector<8x64xf32>
    %107 = arith.mulf %9, %106 : vector<8x64xf32>
    %108 = arith.addf %100, %107 : vector<8x64xf32>
    %c3_47 = arith.constant 3 : index
    %c0_48 = arith.constant 0 : index
    %109 = memref.load %arg3[%c3_47, %c0_48] : memref<8x8xf32, #tpu.memory_space<smem>>
    %110 = vector.broadcast %109 : f32 to vector<8x64xf32>
    %111 = arith.mulf %3, %110 : vector<8x64xf32>
    %c3_49 = arith.constant 3 : index
    %112 = memref.load %arg4[%c3_49] : memref<8xf32, #tpu.memory_space<smem>>
    %113 = vector.broadcast %112 : f32 to vector<8x64xf32>
    %114 = arith.addf %111, %113 : vector<8x64xf32>
    %c3_50 = arith.constant 3 : index
    %c4_51 = arith.constant 4 : index
    %115 = memref.load %arg3[%c3_50, %c4_51] : memref<8x8xf32, #tpu.memory_space<smem>>
    %116 = vector.broadcast %115 : f32 to vector<8x64xf32>
    %117 = arith.mulf %3, %116 : vector<8x64xf32>
    %c3_52 = arith.constant 3 : index
    %c1_53 = arith.constant 1 : index
    %118 = memref.load %arg3[%c3_52, %c1_53] : memref<8x8xf32, #tpu.memory_space<smem>>
    %119 = vector.broadcast %118 : f32 to vector<8x64xf32>
    %120 = arith.mulf %5, %119 : vector<8x64xf32>
    %121 = arith.addf %114, %120 : vector<8x64xf32>
    %c3_54 = arith.constant 3 : index
    %c5_55 = arith.constant 5 : index
    %122 = memref.load %arg3[%c3_54, %c5_55] : memref<8x8xf32, #tpu.memory_space<smem>>
    %123 = vector.broadcast %122 : f32 to vector<8x64xf32>
    %124 = arith.mulf %5, %123 : vector<8x64xf32>
    %125 = arith.addf %117, %124 : vector<8x64xf32>
    %c3_56 = arith.constant 3 : index
    %c2_57 = arith.constant 2 : index
    %126 = memref.load %arg3[%c3_56, %c2_57] : memref<8x8xf32, #tpu.memory_space<smem>>
    %127 = vector.broadcast %126 : f32 to vector<8x64xf32>
    %128 = arith.mulf %7, %127 : vector<8x64xf32>
    %129 = arith.addf %121, %128 : vector<8x64xf32>
    %c3_58 = arith.constant 3 : index
    %c6_59 = arith.constant 6 : index
    %130 = memref.load %arg3[%c3_58, %c6_59] : memref<8x8xf32, #tpu.memory_space<smem>>
    %131 = vector.broadcast %130 : f32 to vector<8x64xf32>
    %132 = arith.mulf %7, %131 : vector<8x64xf32>
    %133 = arith.addf %125, %132 : vector<8x64xf32>
    %c3_60 = arith.constant 3 : index
    %c3_61 = arith.constant 3 : index
    %134 = memref.load %arg3[%c3_60, %c3_61] : memref<8x8xf32, #tpu.memory_space<smem>>
    %135 = vector.broadcast %134 : f32 to vector<8x64xf32>
    %136 = arith.mulf %9, %135 : vector<8x64xf32>
    %137 = arith.addf %129, %136 : vector<8x64xf32>
    %c3_62 = arith.constant 3 : index
    %c7_63 = arith.constant 7 : index
    %138 = memref.load %arg3[%c3_62, %c7_63] : memref<8x8xf32, #tpu.memory_space<smem>>
    %139 = vector.broadcast %138 : f32 to vector<8x64xf32>
    %140 = arith.mulf %9, %139 : vector<8x64xf32>
    %141 = arith.addf %133, %140 : vector<8x64xf32>
    %c4_64 = arith.constant 4 : index
    %c0_65 = arith.constant 0 : index
    %142 = memref.load %arg3[%c4_64, %c0_65] : memref<8x8xf32, #tpu.memory_space<smem>>
    %143 = vector.broadcast %142 : f32 to vector<8x64xf32>
    %144 = arith.mulf %3, %143 : vector<8x64xf32>
    %c4_66 = arith.constant 4 : index
    %145 = memref.load %arg4[%c4_66] : memref<8xf32, #tpu.memory_space<smem>>
    %146 = vector.broadcast %145 : f32 to vector<8x64xf32>
    %147 = arith.addf %144, %146 : vector<8x64xf32>
    %c4_67 = arith.constant 4 : index
    %c4_68 = arith.constant 4 : index
    %148 = memref.load %arg3[%c4_67, %c4_68] : memref<8x8xf32, #tpu.memory_space<smem>>
    %149 = vector.broadcast %148 : f32 to vector<8x64xf32>
    %150 = arith.mulf %3, %149 : vector<8x64xf32>
    %c4_69 = arith.constant 4 : index
    %c1_70 = arith.constant 1 : index
    %151 = memref.load %arg3[%c4_69, %c1_70] : memref<8x8xf32, #tpu.memory_space<smem>>
    %152 = vector.broadcast %151 : f32 to vector<8x64xf32>
    %153 = arith.mulf %5, %152 : vector<8x64xf32>
    %154 = arith.addf %147, %153 : vector<8x64xf32>
    %c4_71 = arith.constant 4 : index
    %c5_72 = arith.constant 5 : index
    %155 = memref.load %arg3[%c4_71, %c5_72] : memref<8x8xf32, #tpu.memory_space<smem>>
    %156 = vector.broadcast %155 : f32 to vector<8x64xf32>
    %157 = arith.mulf %5, %156 : vector<8x64xf32>
    %158 = arith.addf %150, %157 : vector<8x64xf32>
    %c4_73 = arith.constant 4 : index
    %c2_74 = arith.constant 2 : index
    %159 = memref.load %arg3[%c4_73, %c2_74] : memref<8x8xf32, #tpu.memory_space<smem>>
    %160 = vector.broadcast %159 : f32 to vector<8x64xf32>
    %161 = arith.mulf %7, %160 : vector<8x64xf32>
    %162 = arith.addf %154, %161 : vector<8x64xf32>
    %c4_75 = arith.constant 4 : index
    %c6_76 = arith.constant 6 : index
    %163 = memref.load %arg3[%c4_75, %c6_76] : memref<8x8xf32, #tpu.memory_space<smem>>
    %164 = vector.broadcast %163 : f32 to vector<8x64xf32>
    %165 = arith.mulf %7, %164 : vector<8x64xf32>
    %166 = arith.addf %158, %165 : vector<8x64xf32>
    %c4_77 = arith.constant 4 : index
    %c3_78 = arith.constant 3 : index
    %167 = memref.load %arg3[%c4_77, %c3_78] : memref<8x8xf32, #tpu.memory_space<smem>>
    %168 = vector.broadcast %167 : f32 to vector<8x64xf32>
    %169 = arith.mulf %9, %168 : vector<8x64xf32>
    %170 = arith.addf %162, %169 : vector<8x64xf32>
    %c4_79 = arith.constant 4 : index
    %c7_80 = arith.constant 7 : index
    %171 = memref.load %arg3[%c4_79, %c7_80] : memref<8x8xf32, #tpu.memory_space<smem>>
    %172 = vector.broadcast %171 : f32 to vector<8x64xf32>
    %173 = arith.mulf %9, %172 : vector<8x64xf32>
    %174 = arith.addf %166, %173 : vector<8x64xf32>
    %c5_81 = arith.constant 5 : index
    %c0_82 = arith.constant 0 : index
    %175 = memref.load %arg3[%c5_81, %c0_82] : memref<8x8xf32, #tpu.memory_space<smem>>
    %176 = vector.broadcast %175 : f32 to vector<8x64xf32>
    %177 = arith.mulf %3, %176 : vector<8x64xf32>
    %c5_83 = arith.constant 5 : index
    %178 = memref.load %arg4[%c5_83] : memref<8xf32, #tpu.memory_space<smem>>
    %179 = vector.broadcast %178 : f32 to vector<8x64xf32>
    %180 = arith.addf %177, %179 : vector<8x64xf32>
    %c5_84 = arith.constant 5 : index
    %c4_85 = arith.constant 4 : index
    %181 = memref.load %arg3[%c5_84, %c4_85] : memref<8x8xf32, #tpu.memory_space<smem>>
    %182 = vector.broadcast %181 : f32 to vector<8x64xf32>
    %183 = arith.mulf %3, %182 : vector<8x64xf32>
    %c5_86 = arith.constant 5 : index
    %c1_87 = arith.constant 1 : index
    %184 = memref.load %arg3[%c5_86, %c1_87] : memref<8x8xf32, #tpu.memory_space<smem>>
    %185 = vector.broadcast %184 : f32 to vector<8x64xf32>
    %186 = arith.mulf %5, %185 : vector<8x64xf32>
    %187 = arith.addf %180, %186 : vector<8x64xf32>
    %c5_88 = arith.constant 5 : index
    %c5_89 = arith.constant 5 : index
    %188 = memref.load %arg3[%c5_88, %c5_89] : memref<8x8xf32, #tpu.memory_space<smem>>
    %189 = vector.broadcast %188 : f32 to vector<8x64xf32>
    %190 = arith.mulf %5, %189 : vector<8x64xf32>
    %191 = arith.addf %183, %190 : vector<8x64xf32>
    %c5_90 = arith.constant 5 : index
    %c2_91 = arith.constant 2 : index
    %192 = memref.load %arg3[%c5_90, %c2_91] : memref<8x8xf32, #tpu.memory_space<smem>>
    %193 = vector.broadcast %192 : f32 to vector<8x64xf32>
    %194 = arith.mulf %7, %193 : vector<8x64xf32>
    %195 = arith.addf %187, %194 : vector<8x64xf32>
    %c5_92 = arith.constant 5 : index
    %c6_93 = arith.constant 6 : index
    %196 = memref.load %arg3[%c5_92, %c6_93] : memref<8x8xf32, #tpu.memory_space<smem>>
    %197 = vector.broadcast %196 : f32 to vector<8x64xf32>
    %198 = arith.mulf %7, %197 : vector<8x64xf32>
    %199 = arith.addf %191, %198 : vector<8x64xf32>
    %c5_94 = arith.constant 5 : index
    %c3_95 = arith.constant 3 : index
    %200 = memref.load %arg3[%c5_94, %c3_95] : memref<8x8xf32, #tpu.memory_space<smem>>
    %201 = vector.broadcast %200 : f32 to vector<8x64xf32>
    %202 = arith.mulf %9, %201 : vector<8x64xf32>
    %203 = arith.addf %195, %202 : vector<8x64xf32>
    %c5_96 = arith.constant 5 : index
    %c7_97 = arith.constant 7 : index
    %204 = memref.load %arg3[%c5_96, %c7_97] : memref<8x8xf32, #tpu.memory_space<smem>>
    %205 = vector.broadcast %204 : f32 to vector<8x64xf32>
    %206 = arith.mulf %9, %205 : vector<8x64xf32>
    %207 = arith.addf %199, %206 : vector<8x64xf32>
    %c6_98 = arith.constant 6 : index
    %c0_99 = arith.constant 0 : index
    %208 = memref.load %arg3[%c6_98, %c0_99] : memref<8x8xf32, #tpu.memory_space<smem>>
    %209 = vector.broadcast %208 : f32 to vector<8x64xf32>
    %210 = arith.mulf %3, %209 : vector<8x64xf32>
    %c6_100 = arith.constant 6 : index
    %211 = memref.load %arg4[%c6_100] : memref<8xf32, #tpu.memory_space<smem>>
    %212 = vector.broadcast %211 : f32 to vector<8x64xf32>
    %213 = arith.addf %210, %212 : vector<8x64xf32>
    %c6_101 = arith.constant 6 : index
    %c4_102 = arith.constant 4 : index
    %214 = memref.load %arg3[%c6_101, %c4_102] : memref<8x8xf32, #tpu.memory_space<smem>>
    %215 = vector.broadcast %214 : f32 to vector<8x64xf32>
    %216 = arith.mulf %3, %215 : vector<8x64xf32>
    %c6_103 = arith.constant 6 : index
    %c1_104 = arith.constant 1 : index
    %217 = memref.load %arg3[%c6_103, %c1_104] : memref<8x8xf32, #tpu.memory_space<smem>>
    %218 = vector.broadcast %217 : f32 to vector<8x64xf32>
    %219 = arith.mulf %5, %218 : vector<8x64xf32>
    %220 = arith.addf %213, %219 : vector<8x64xf32>
    %c6_105 = arith.constant 6 : index
    %c5_106 = arith.constant 5 : index
    %221 = memref.load %arg3[%c6_105, %c5_106] : memref<8x8xf32, #tpu.memory_space<smem>>
    %222 = vector.broadcast %221 : f32 to vector<8x64xf32>
    %223 = arith.mulf %5, %222 : vector<8x64xf32>
    %224 = arith.addf %216, %223 : vector<8x64xf32>
    %c6_107 = arith.constant 6 : index
    %c2_108 = arith.constant 2 : index
    %225 = memref.load %arg3[%c6_107, %c2_108] : memref<8x8xf32, #tpu.memory_space<smem>>
    %226 = vector.broadcast %225 : f32 to vector<8x64xf32>
    %227 = arith.mulf %7, %226 : vector<8x64xf32>
    %228 = arith.addf %220, %227 : vector<8x64xf32>
    %c6_109 = arith.constant 6 : index
    %c6_110 = arith.constant 6 : index
    %229 = memref.load %arg3[%c6_109, %c6_110] : memref<8x8xf32, #tpu.memory_space<smem>>
    %230 = vector.broadcast %229 : f32 to vector<8x64xf32>
    %231 = arith.mulf %7, %230 : vector<8x64xf32>
    %232 = arith.addf %224, %231 : vector<8x64xf32>
    %c6_111 = arith.constant 6 : index
    %c3_112 = arith.constant 3 : index
    %233 = memref.load %arg3[%c6_111, %c3_112] : memref<8x8xf32, #tpu.memory_space<smem>>
    %234 = vector.broadcast %233 : f32 to vector<8x64xf32>
    %235 = arith.mulf %9, %234 : vector<8x64xf32>
    %236 = arith.addf %228, %235 : vector<8x64xf32>
    %c6_113 = arith.constant 6 : index
    %c7_114 = arith.constant 7 : index
    %237 = memref.load %arg3[%c6_113, %c7_114] : memref<8x8xf32, #tpu.memory_space<smem>>
    %238 = vector.broadcast %237 : f32 to vector<8x64xf32>
    %239 = arith.mulf %9, %238 : vector<8x64xf32>
    %240 = arith.addf %232, %239 : vector<8x64xf32>
    %c7_115 = arith.constant 7 : index
    %c0_116 = arith.constant 0 : index
    %241 = memref.load %arg3[%c7_115, %c0_116] : memref<8x8xf32, #tpu.memory_space<smem>>
    %242 = vector.broadcast %241 : f32 to vector<8x64xf32>
    %243 = arith.mulf %3, %242 : vector<8x64xf32>
    %c7_117 = arith.constant 7 : index
    %244 = memref.load %arg4[%c7_117] : memref<8xf32, #tpu.memory_space<smem>>
    %245 = vector.broadcast %244 : f32 to vector<8x64xf32>
    %246 = arith.addf %243, %245 : vector<8x64xf32>
    %c7_118 = arith.constant 7 : index
    %c4_119 = arith.constant 4 : index
    %247 = memref.load %arg3[%c7_118, %c4_119] : memref<8x8xf32, #tpu.memory_space<smem>>
    %248 = vector.broadcast %247 : f32 to vector<8x64xf32>
    %249 = arith.mulf %3, %248 : vector<8x64xf32>
    %c7_120 = arith.constant 7 : index
    %c1_121 = arith.constant 1 : index
    %250 = memref.load %arg3[%c7_120, %c1_121] : memref<8x8xf32, #tpu.memory_space<smem>>
    %251 = vector.broadcast %250 : f32 to vector<8x64xf32>
    %252 = arith.mulf %5, %251 : vector<8x64xf32>
    %253 = arith.addf %246, %252 : vector<8x64xf32>
    %c7_122 = arith.constant 7 : index
    %c5_123 = arith.constant 5 : index
    %254 = memref.load %arg3[%c7_122, %c5_123] : memref<8x8xf32, #tpu.memory_space<smem>>
    %255 = vector.broadcast %254 : f32 to vector<8x64xf32>
    %256 = arith.mulf %5, %255 : vector<8x64xf32>
    %257 = arith.addf %249, %256 : vector<8x64xf32>
    %c7_124 = arith.constant 7 : index
    %c2_125 = arith.constant 2 : index
    %258 = memref.load %arg3[%c7_124, %c2_125] : memref<8x8xf32, #tpu.memory_space<smem>>
    %259 = vector.broadcast %258 : f32 to vector<8x64xf32>
    %260 = arith.mulf %7, %259 : vector<8x64xf32>
    %261 = arith.addf %253, %260 : vector<8x64xf32>
    %c7_126 = arith.constant 7 : index
    %c6_127 = arith.constant 6 : index
    %262 = memref.load %arg3[%c7_126, %c6_127] : memref<8x8xf32, #tpu.memory_space<smem>>
    %263 = vector.broadcast %262 : f32 to vector<8x64xf32>
    %264 = arith.mulf %7, %263 : vector<8x64xf32>
    %265 = arith.addf %257, %264 : vector<8x64xf32>
    %c7_128 = arith.constant 7 : index
    %c3_129 = arith.constant 3 : index
    %266 = memref.load %arg3[%c7_128, %c3_129] : memref<8x8xf32, #tpu.memory_space<smem>>
    %267 = vector.broadcast %266 : f32 to vector<8x64xf32>
    %268 = arith.mulf %9, %267 : vector<8x64xf32>
    %269 = arith.addf %261, %268 : vector<8x64xf32>
    %c7_130 = arith.constant 7 : index
    %c7_131 = arith.constant 7 : index
    %270 = memref.load %arg3[%c7_130, %c7_131] : memref<8x8xf32, #tpu.memory_space<smem>>
    %271 = vector.broadcast %270 : f32 to vector<8x64xf32>
    %272 = arith.mulf %9, %271 : vector<8x64xf32>
    %273 = arith.addf %265, %272 : vector<8x64xf32>
    %c0_132 = arith.constant 0 : index
    %c0_133 = arith.constant 0 : index
    %c0_134 = arith.constant 0 : index
    %274 = vector.load %arg2[%c0_132, %c0_133, %c0_134] : memref<8x8x64xf32, #tpu.memory_space<vmem>>, vector<1x8x64xf32>
    %275 = vector.shape_cast %274 : vector<1x8x64xf32> to vector<8x64xf32>
    %276 = vector.extract_strided_slice %42 {offsets = [0, 0], sizes = [1, 64], strides = [1, 1]} : vector<8x64xf32> to vector<1x64xf32>
    %277 = vector.broadcast %276 : vector<1x64xf32> to vector<8x64xf32>
    %278 = arith.addf %38, %277 : vector<8x64xf32>
    %cst = arith.constant 0.000000e+00 : f32
    %279 = vector.broadcast %cst : f32 to vector<8x64xf32>
    %280 = arith.cmpf ogt, %278, %279 : vector<8x64xf32>
    %cst_135 = arith.constant 2.000000e-01 : f32
    %281 = vector.broadcast %cst_135 : f32 to vector<8x64xf32>
    %282 = arith.mulf %281, %278 : vector<8x64xf32>
    %283 = arith.select %280, %278, %282 : vector<8x64xi1>, vector<8x64xf32>
    %c0_136 = arith.constant 0 : index
    %284 = memref.load %arg5[%c0_136] : memref<8xf32, #tpu.memory_space<smem>>
    %285 = vector.broadcast %284 : f32 to vector<8x64xf32>
    %286 = arith.mulf %285, %283 : vector<8x64xf32>
    %287 = arith.addf %275, %286 : vector<8x64xf32>
    %288 = vector.extract_strided_slice %75 {offsets = [0, 0], sizes = [1, 64], strides = [1, 1]} : vector<8x64xf32> to vector<1x64xf32>
    %289 = vector.broadcast %288 : vector<1x64xf32> to vector<8x64xf32>
    %290 = arith.addf %71, %289 : vector<8x64xf32>
    %cst_137 = arith.constant 0.000000e+00 : f32
    %291 = vector.broadcast %cst_137 : f32 to vector<8x64xf32>
    %292 = arith.cmpf ogt, %290, %291 : vector<8x64xf32>
    %cst_138 = arith.constant 2.000000e-01 : f32
    %293 = vector.broadcast %cst_138 : f32 to vector<8x64xf32>
    %294 = arith.mulf %293, %290 : vector<8x64xf32>
    %295 = arith.select %292, %290, %294 : vector<8x64xi1>, vector<8x64xf32>
    %c1_139 = arith.constant 1 : index
    %296 = memref.load %arg5[%c1_139] : memref<8xf32, #tpu.memory_space<smem>>
    %297 = vector.broadcast %296 : f32 to vector<8x64xf32>
    %298 = arith.mulf %297, %295 : vector<8x64xf32>
    %299 = arith.addf %287, %298 : vector<8x64xf32>
    %300 = vector.extract_strided_slice %108 {offsets = [0, 0], sizes = [1, 64], strides = [1, 1]} : vector<8x64xf32> to vector<1x64xf32>
    %301 = vector.broadcast %300 : vector<1x64xf32> to vector<8x64xf32>
    %302 = arith.addf %104, %301 : vector<8x64xf32>
    %cst_140 = arith.constant 0.000000e+00 : f32
    %303 = vector.broadcast %cst_140 : f32 to vector<8x64xf32>
    %304 = arith.cmpf ogt, %302, %303 : vector<8x64xf32>
    %cst_141 = arith.constant 2.000000e-01 : f32
    %305 = vector.broadcast %cst_141 : f32 to vector<8x64xf32>
    %306 = arith.mulf %305, %302 : vector<8x64xf32>
    %307 = arith.select %304, %302, %306 : vector<8x64xi1>, vector<8x64xf32>
    %c2_142 = arith.constant 2 : index
    %308 = memref.load %arg5[%c2_142] : memref<8xf32, #tpu.memory_space<smem>>
    %309 = vector.broadcast %308 : f32 to vector<8x64xf32>
    %310 = arith.mulf %309, %307 : vector<8x64xf32>
    %311 = arith.addf %299, %310 : vector<8x64xf32>
    %312 = vector.extract_strided_slice %141 {offsets = [0, 0], sizes = [1, 64], strides = [1, 1]} : vector<8x64xf32> to vector<1x64xf32>
    %313 = vector.broadcast %312 : vector<1x64xf32> to vector<8x64xf32>
    %314 = arith.addf %137, %313 : vector<8x64xf32>
    %cst_143 = arith.constant 0.000000e+00 : f32
    %315 = vector.broadcast %cst_143 : f32 to vector<8x64xf32>
    %316 = arith.cmpf ogt, %314, %315 : vector<8x64xf32>
    %cst_144 = arith.constant 2.000000e-01 : f32
    %317 = vector.broadcast %cst_144 : f32 to vector<8x64xf32>
    %318 = arith.mulf %317, %314 : vector<8x64xf32>
    %319 = arith.select %316, %314, %318 : vector<8x64xi1>, vector<8x64xf32>
    %c3_145 = arith.constant 3 : index
    %320 = memref.load %arg5[%c3_145] : memref<8xf32, #tpu.memory_space<smem>>
    %321 = vector.broadcast %320 : f32 to vector<8x64xf32>
    %322 = arith.mulf %321, %319 : vector<8x64xf32>
    %323 = arith.addf %311, %322 : vector<8x64xf32>
    %324 = vector.extract_strided_slice %174 {offsets = [0, 0], sizes = [1, 64], strides = [1, 1]} : vector<8x64xf32> to vector<1x64xf32>
    %325 = vector.broadcast %324 : vector<1x64xf32> to vector<8x64xf32>
    %326 = arith.addf %170, %325 : vector<8x64xf32>
    %cst_146 = arith.constant 0.000000e+00 : f32
    %327 = vector.broadcast %cst_146 : f32 to vector<8x64xf32>
    %328 = arith.cmpf ogt, %326, %327 : vector<8x64xf32>
    %cst_147 = arith.constant 2.000000e-01 : f32
    %329 = vector.broadcast %cst_147 : f32 to vector<8x64xf32>
    %330 = arith.mulf %329, %326 : vector<8x64xf32>
    %331 = arith.select %328, %326, %330 : vector<8x64xi1>, vector<8x64xf32>
    %c4_148 = arith.constant 4 : index
    %332 = memref.load %arg5[%c4_148] : memref<8xf32, #tpu.memory_space<smem>>
    %333 = vector.broadcast %332 : f32 to vector<8x64xf32>
    %334 = arith.mulf %333, %331 : vector<8x64xf32>
    %335 = arith.addf %323, %334 : vector<8x64xf32>
    %336 = vector.extract_strided_slice %207 {offsets = [0, 0], sizes = [1, 64], strides = [1, 1]} : vector<8x64xf32> to vector<1x64xf32>
    %337 = vector.broadcast %336 : vector<1x64xf32> to vector<8x64xf32>
    %338 = arith.addf %203, %337 : vector<8x64xf32>
    %cst_149 = arith.constant 0.000000e+00 : f32
    %339 = vector.broadcast %cst_149 : f32 to vector<8x64xf32>
    %340 = arith.cmpf ogt, %338, %339 : vector<8x64xf32>
    %cst_150 = arith.constant 2.000000e-01 : f32
    %341 = vector.broadcast %cst_150 : f32 to vector<8x64xf32>
    %342 = arith.mulf %341, %338 : vector<8x64xf32>
    %343 = arith.select %340, %338, %342 : vector<8x64xi1>, vector<8x64xf32>
    %c5_151 = arith.constant 5 : index
    %344 = memref.load %arg5[%c5_151] : memref<8xf32, #tpu.memory_space<smem>>
    %345 = vector.broadcast %344 : f32 to vector<8x64xf32>
    %346 = arith.mulf %345, %343 : vector<8x64xf32>
    %347 = arith.addf %335, %346 : vector<8x64xf32>
    %348 = vector.extract_strided_slice %240 {offsets = [0, 0], sizes = [1, 64], strides = [1, 1]} : vector<8x64xf32> to vector<1x64xf32>
    %349 = vector.broadcast %348 : vector<1x64xf32> to vector<8x64xf32>
    %350 = arith.addf %236, %349 : vector<8x64xf32>
    %cst_152 = arith.constant 0.000000e+00 : f32
    %351 = vector.broadcast %cst_152 : f32 to vector<8x64xf32>
    %352 = arith.cmpf ogt, %350, %351 : vector<8x64xf32>
    %cst_153 = arith.constant 2.000000e-01 : f32
    %353 = vector.broadcast %cst_153 : f32 to vector<8x64xf32>
    %354 = arith.mulf %353, %350 : vector<8x64xf32>
    %355 = arith.select %352, %350, %354 : vector<8x64xi1>, vector<8x64xf32>
    %c6_154 = arith.constant 6 : index
    %356 = memref.load %arg5[%c6_154] : memref<8xf32, #tpu.memory_space<smem>>
    %357 = vector.broadcast %356 : f32 to vector<8x64xf32>
    %358 = arith.mulf %357, %355 : vector<8x64xf32>
    %359 = arith.addf %347, %358 : vector<8x64xf32>
    %360 = vector.extract_strided_slice %273 {offsets = [0, 0], sizes = [1, 64], strides = [1, 1]} : vector<8x64xf32> to vector<1x64xf32>
    %361 = vector.broadcast %360 : vector<1x64xf32> to vector<8x64xf32>
    %362 = arith.addf %269, %361 : vector<8x64xf32>
    %cst_155 = arith.constant 0.000000e+00 : f32
    %363 = vector.broadcast %cst_155 : f32 to vector<8x64xf32>
    %364 = arith.cmpf ogt, %362, %363 : vector<8x64xf32>
    %cst_156 = arith.constant 2.000000e-01 : f32
    %365 = vector.broadcast %cst_156 : f32 to vector<8x64xf32>
    %366 = arith.mulf %365, %362 : vector<8x64xf32>
    %367 = arith.select %364, %362, %366 : vector<8x64xi1>, vector<8x64xf32>
    %c7_157 = arith.constant 7 : index
    %368 = memref.load %arg5[%c7_157] : memref<8xf32, #tpu.memory_space<smem>>
    %369 = vector.broadcast %368 : f32 to vector<8x64xf32>
    %370 = arith.mulf %369, %367 : vector<8x64xf32>
    %371 = arith.addf %359, %370 : vector<8x64xf32>
    %c1_158 = arith.constant 1 : index
    %c0_159 = arith.constant 0 : index
    %c0_160 = arith.constant 0 : index
    %372 = vector.load %arg2[%c1_158, %c0_159, %c0_160] : memref<8x8x64xf32, #tpu.memory_space<vmem>>, vector<1x8x64xf32>
    %373 = vector.shape_cast %372 : vector<1x8x64xf32> to vector<8x64xf32>
    %374 = vector.extract_strided_slice %42 {offsets = [1, 0], sizes = [1, 64], strides = [1, 1]} : vector<8x64xf32> to vector<1x64xf32>
    %375 = vector.broadcast %374 : vector<1x64xf32> to vector<8x64xf32>
    %376 = arith.addf %38, %375 : vector<8x64xf32>
    %cst_161 = arith.constant 0.000000e+00 : f32
    %377 = vector.broadcast %cst_161 : f32 to vector<8x64xf32>
    %378 = arith.cmpf ogt, %376, %377 : vector<8x64xf32>
    %cst_162 = arith.constant 2.000000e-01 : f32
    %379 = vector.broadcast %cst_162 : f32 to vector<8x64xf32>
    %380 = arith.mulf %379, %376 : vector<8x64xf32>
    %381 = arith.select %378, %376, %380 : vector<8x64xi1>, vector<8x64xf32>
    %c0_163 = arith.constant 0 : index
    %382 = memref.load %arg5[%c0_163] : memref<8xf32, #tpu.memory_space<smem>>
    %383 = vector.broadcast %382 : f32 to vector<8x64xf32>
    %384 = arith.mulf %383, %381 : vector<8x64xf32>
    %385 = arith.addf %373, %384 : vector<8x64xf32>
    %386 = vector.extract_strided_slice %75 {offsets = [1, 0], sizes = [1, 64], strides = [1, 1]} : vector<8x64xf32> to vector<1x64xf32>
    %387 = vector.broadcast %386 : vector<1x64xf32> to vector<8x64xf32>
    %388 = arith.addf %71, %387 : vector<8x64xf32>
    %cst_164 = arith.constant 0.000000e+00 : f32
    %389 = vector.broadcast %cst_164 : f32 to vector<8x64xf32>
    %390 = arith.cmpf ogt, %388, %389 : vector<8x64xf32>
    %cst_165 = arith.constant 2.000000e-01 : f32
    %391 = vector.broadcast %cst_165 : f32 to vector<8x64xf32>
    %392 = arith.mulf %391, %388 : vector<8x64xf32>
    %393 = arith.select %390, %388, %392 : vector<8x64xi1>, vector<8x64xf32>
    %c1_166 = arith.constant 1 : index
    %394 = memref.load %arg5[%c1_166] : memref<8xf32, #tpu.memory_space<smem>>
    %395 = vector.broadcast %394 : f32 to vector<8x64xf32>
    %396 = arith.mulf %395, %393 : vector<8x64xf32>
    %397 = arith.addf %385, %396 : vector<8x64xf32>
    %398 = vector.extract_strided_slice %108 {offsets = [1, 0], sizes = [1, 64], strides = [1, 1]} : vector<8x64xf32> to vector<1x64xf32>
    %399 = vector.broadcast %398 : vector<1x64xf32> to vector<8x64xf32>
    %400 = arith.addf %104, %399 : vector<8x64xf32>
    %cst_167 = arith.constant 0.000000e+00 : f32
    %401 = vector.broadcast %cst_167 : f32 to vector<8x64xf32>
    %402 = arith.cmpf ogt, %400, %401 : vector<8x64xf32>
    %cst_168 = arith.constant 2.000000e-01 : f32
    %403 = vector.broadcast %cst_168 : f32 to vector<8x64xf32>
    %404 = arith.mulf %403, %400 : vector<8x64xf32>
    %405 = arith.select %402, %400, %404 : vector<8x64xi1>, vector<8x64xf32>
    %c2_169 = arith.constant 2 : index
    %406 = memref.load %arg5[%c2_169] : memref<8xf32, #tpu.memory_space<smem>>
    %407 = vector.broadcast %406 : f32 to vector<8x64xf32>
    %408 = arith.mulf %407, %405 : vector<8x64xf32>
    %409 = arith.addf %397, %408 : vector<8x64xf32>
    %410 = vector.extract_strided_slice %141 {offsets = [1, 0], sizes = [1, 64], strides = [1, 1]} : vector<8x64xf32> to vector<1x64xf32>
    %411 = vector.broadcast %410 : vector<1x64xf32> to vector<8x64xf32>
    %412 = arith.addf %137, %411 : vector<8x64xf32>
    %cst_170 = arith.constant 0.000000e+00 : f32
    %413 = vector.broadcast %cst_170 : f32 to vector<8x64xf32>
    %414 = arith.cmpf ogt, %412, %413 : vector<8x64xf32>
    %cst_171 = arith.constant 2.000000e-01 : f32
    %415 = vector.broadcast %cst_171 : f32 to vector<8x64xf32>
    %416 = arith.mulf %415, %412 : vector<8x64xf32>
    %417 = arith.select %414, %412, %416 : vector<8x64xi1>, vector<8x64xf32>
    %c3_172 = arith.constant 3 : index
    %418 = memref.load %arg5[%c3_172] : memref<8xf32, #tpu.memory_space<smem>>
    %419 = vector.broadcast %418 : f32 to vector<8x64xf32>
    %420 = arith.mulf %419, %417 : vector<8x64xf32>
    %421 = arith.addf %409, %420 : vector<8x64xf32>
    %422 = vector.extract_strided_slice %174 {offsets = [1, 0], sizes = [1, 64], strides = [1, 1]} : vector<8x64xf32> to vector<1x64xf32>
    %423 = vector.broadcast %422 : vector<1x64xf32> to vector<8x64xf32>
    %424 = arith.addf %170, %423 : vector<8x64xf32>
    %cst_173 = arith.constant 0.000000e+00 : f32
    %425 = vector.broadcast %cst_173 : f32 to vector<8x64xf32>
    %426 = arith.cmpf ogt, %424, %425 : vector<8x64xf32>
    %cst_174 = arith.constant 2.000000e-01 : f32
    %427 = vector.broadcast %cst_174 : f32 to vector<8x64xf32>
    %428 = arith.mulf %427, %424 : vector<8x64xf32>
    %429 = arith.select %426, %424, %428 : vector<8x64xi1>, vector<8x64xf32>
    %c4_175 = arith.constant 4 : index
    %430 = memref.load %arg5[%c4_175] : memref<8xf32, #tpu.memory_space<smem>>
    %431 = vector.broadcast %430 : f32 to vector<8x64xf32>
    %432 = arith.mulf %431, %429 : vector<8x64xf32>
    %433 = arith.addf %421, %432 : vector<8x64xf32>
    %434 = vector.extract_strided_slice %207 {offsets = [1, 0], sizes = [1, 64], strides = [1, 1]} : vector<8x64xf32> to vector<1x64xf32>
    %435 = vector.broadcast %434 : vector<1x64xf32> to vector<8x64xf32>
    %436 = arith.addf %203, %435 : vector<8x64xf32>
    %cst_176 = arith.constant 0.000000e+00 : f32
    %437 = vector.broadcast %cst_176 : f32 to vector<8x64xf32>
    %438 = arith.cmpf ogt, %436, %437 : vector<8x64xf32>
    %cst_177 = arith.constant 2.000000e-01 : f32
    %439 = vector.broadcast %cst_177 : f32 to vector<8x64xf32>
    %440 = arith.mulf %439, %436 : vector<8x64xf32>
    %441 = arith.select %438, %436, %440 : vector<8x64xi1>, vector<8x64xf32>
    %c5_178 = arith.constant 5 : index
    %442 = memref.load %arg5[%c5_178] : memref<8xf32, #tpu.memory_space<smem>>
    %443 = vector.broadcast %442 : f32 to vector<8x64xf32>
    %444 = arith.mulf %443, %441 : vector<8x64xf32>
    %445 = arith.addf %433, %444 : vector<8x64xf32>
    %446 = vector.extract_strided_slice %240 {offsets = [1, 0], sizes = [1, 64], strides = [1, 1]} : vector<8x64xf32> to vector<1x64xf32>
    %447 = vector.broadcast %446 : vector<1x64xf32> to vector<8x64xf32>
    %448 = arith.addf %236, %447 : vector<8x64xf32>
    %cst_179 = arith.constant 0.000000e+00 : f32
    %449 = vector.broadcast %cst_179 : f32 to vector<8x64xf32>
    %450 = arith.cmpf ogt, %448, %449 : vector<8x64xf32>
    %cst_180 = arith.constant 2.000000e-01 : f32
    %451 = vector.broadcast %cst_180 : f32 to vector<8x64xf32>
    %452 = arith.mulf %451, %448 : vector<8x64xf32>
    %453 = arith.select %450, %448, %452 : vector<8x64xi1>, vector<8x64xf32>
    %c6_181 = arith.constant 6 : index
    %454 = memref.load %arg5[%c6_181] : memref<8xf32, #tpu.memory_space<smem>>
    %455 = vector.broadcast %454 : f32 to vector<8x64xf32>
    %456 = arith.mulf %455, %453 : vector<8x64xf32>
    %457 = arith.addf %445, %456 : vector<8x64xf32>
    %458 = vector.extract_strided_slice %273 {offsets = [1, 0], sizes = [1, 64], strides = [1, 1]} : vector<8x64xf32> to vector<1x64xf32>
    %459 = vector.broadcast %458 : vector<1x64xf32> to vector<8x64xf32>
    %460 = arith.addf %269, %459 : vector<8x64xf32>
    %cst_182 = arith.constant 0.000000e+00 : f32
    %461 = vector.broadcast %cst_182 : f32 to vector<8x64xf32>
    %462 = arith.cmpf ogt, %460, %461 : vector<8x64xf32>
    %cst_183 = arith.constant 2.000000e-01 : f32
    %463 = vector.broadcast %cst_183 : f32 to vector<8x64xf32>
    %464 = arith.mulf %463, %460 : vector<8x64xf32>
    %465 = arith.select %462, %460, %464 : vector<8x64xi1>, vector<8x64xf32>
    %c7_184 = arith.constant 7 : index
    %466 = memref.load %arg5[%c7_184] : memref<8xf32, #tpu.memory_space<smem>>
    %467 = vector.broadcast %466 : f32 to vector<8x64xf32>
    %468 = arith.mulf %467, %465 : vector<8x64xf32>
    %469 = arith.addf %457, %468 : vector<8x64xf32>
    %c2_185 = arith.constant 2 : index
    %c0_186 = arith.constant 0 : index
    %c0_187 = arith.constant 0 : index
    %470 = vector.load %arg2[%c2_185, %c0_186, %c0_187] : memref<8x8x64xf32, #tpu.memory_space<vmem>>, vector<1x8x64xf32>
    %471 = vector.shape_cast %470 : vector<1x8x64xf32> to vector<8x64xf32>
    %472 = vector.extract_strided_slice %42 {offsets = [2, 0], sizes = [1, 64], strides = [1, 1]} : vector<8x64xf32> to vector<1x64xf32>
    %473 = vector.broadcast %472 : vector<1x64xf32> to vector<8x64xf32>
    %474 = arith.addf %38, %473 : vector<8x64xf32>
    %cst_188 = arith.constant 0.000000e+00 : f32
    %475 = vector.broadcast %cst_188 : f32 to vector<8x64xf32>
    %476 = arith.cmpf ogt, %474, %475 : vector<8x64xf32>
    %cst_189 = arith.constant 2.000000e-01 : f32
    %477 = vector.broadcast %cst_189 : f32 to vector<8x64xf32>
    %478 = arith.mulf %477, %474 : vector<8x64xf32>
    %479 = arith.select %476, %474, %478 : vector<8x64xi1>, vector<8x64xf32>
    %c0_190 = arith.constant 0 : index
    %480 = memref.load %arg5[%c0_190] : memref<8xf32, #tpu.memory_space<smem>>
    %481 = vector.broadcast %480 : f32 to vector<8x64xf32>
    %482 = arith.mulf %481, %479 : vector<8x64xf32>
    %483 = arith.addf %471, %482 : vector<8x64xf32>
    %484 = vector.extract_strided_slice %75 {offsets = [2, 0], sizes = [1, 64], strides = [1, 1]} : vector<8x64xf32> to vector<1x64xf32>
    %485 = vector.broadcast %484 : vector<1x64xf32> to vector<8x64xf32>
    %486 = arith.addf %71, %485 : vector<8x64xf32>
    %cst_191 = arith.constant 0.000000e+00 : f32
    %487 = vector.broadcast %cst_191 : f32 to vector<8x64xf32>
    %488 = arith.cmpf ogt, %486, %487 : vector<8x64xf32>
    %cst_192 = arith.constant 2.000000e-01 : f32
    %489 = vector.broadcast %cst_192 : f32 to vector<8x64xf32>
    %490 = arith.mulf %489, %486 : vector<8x64xf32>
    %491 = arith.select %488, %486, %490 : vector<8x64xi1>, vector<8x64xf32>
    %c1_193 = arith.constant 1 : index
    %492 = memref.load %arg5[%c1_193] : memref<8xf32, #tpu.memory_space<smem>>
    %493 = vector.broadcast %492 : f32 to vector<8x64xf32>
    %494 = arith.mulf %493, %491 : vector<8x64xf32>
    %495 = arith.addf %483, %494 : vector<8x64xf32>
    %496 = vector.extract_strided_slice %108 {offsets = [2, 0], sizes = [1, 64], strides = [1, 1]} : vector<8x64xf32> to vector<1x64xf32>
    %497 = vector.broadcast %496 : vector<1x64xf32> to vector<8x64xf32>
    %498 = arith.addf %104, %497 : vector<8x64xf32>
    %cst_194 = arith.constant 0.000000e+00 : f32
    %499 = vector.broadcast %cst_194 : f32 to vector<8x64xf32>
    %500 = arith.cmpf ogt, %498, %499 : vector<8x64xf32>
    %cst_195 = arith.constant 2.000000e-01 : f32
    %501 = vector.broadcast %cst_195 : f32 to vector<8x64xf32>
    %502 = arith.mulf %501, %498 : vector<8x64xf32>
    %503 = arith.select %500, %498, %502 : vector<8x64xi1>, vector<8x64xf32>
    %c2_196 = arith.constant 2 : index
    %504 = memref.load %arg5[%c2_196] : memref<8xf32, #tpu.memory_space<smem>>
    %505 = vector.broadcast %504 : f32 to vector<8x64xf32>
    %506 = arith.mulf %505, %503 : vector<8x64xf32>
    %507 = arith.addf %495, %506 : vector<8x64xf32>
    %508 = vector.extract_strided_slice %141 {offsets = [2, 0], sizes = [1, 64], strides = [1, 1]} : vector<8x64xf32> to vector<1x64xf32>
    %509 = vector.broadcast %508 : vector<1x64xf32> to vector<8x64xf32>
    %510 = arith.addf %137, %509 : vector<8x64xf32>
    %cst_197 = arith.constant 0.000000e+00 : f32
    %511 = vector.broadcast %cst_197 : f32 to vector<8x64xf32>
    %512 = arith.cmpf ogt, %510, %511 : vector<8x64xf32>
    %cst_198 = arith.constant 2.000000e-01 : f32
    %513 = vector.broadcast %cst_198 : f32 to vector<8x64xf32>
    %514 = arith.mulf %513, %510 : vector<8x64xf32>
    %515 = arith.select %512, %510, %514 : vector<8x64xi1>, vector<8x64xf32>
    %c3_199 = arith.constant 3 : index
    %516 = memref.load %arg5[%c3_199] : memref<8xf32, #tpu.memory_space<smem>>
    %517 = vector.broadcast %516 : f32 to vector<8x64xf32>
    %518 = arith.mulf %517, %515 : vector<8x64xf32>
    %519 = arith.addf %507, %518 : vector<8x64xf32>
    %520 = vector.extract_strided_slice %174 {offsets = [2, 0], sizes = [1, 64], strides = [1, 1]} : vector<8x64xf32> to vector<1x64xf32>
    %521 = vector.broadcast %520 : vector<1x64xf32> to vector<8x64xf32>
    %522 = arith.addf %170, %521 : vector<8x64xf32>
    %cst_200 = arith.constant 0.000000e+00 : f32
    %523 = vector.broadcast %cst_200 : f32 to vector<8x64xf32>
    %524 = arith.cmpf ogt, %522, %523 : vector<8x64xf32>
    %cst_201 = arith.constant 2.000000e-01 : f32
    %525 = vector.broadcast %cst_201 : f32 to vector<8x64xf32>
    %526 = arith.mulf %525, %522 : vector<8x64xf32>
    %527 = arith.select %524, %522, %526 : vector<8x64xi1>, vector<8x64xf32>
    %c4_202 = arith.constant 4 : index
    %528 = memref.load %arg5[%c4_202] : memref<8xf32, #tpu.memory_space<smem>>
    %529 = vector.broadcast %528 : f32 to vector<8x64xf32>
    %530 = arith.mulf %529, %527 : vector<8x64xf32>
    %531 = arith.addf %519, %530 : vector<8x64xf32>
    %532 = vector.extract_strided_slice %207 {offsets = [2, 0], sizes = [1, 64], strides = [1, 1]} : vector<8x64xf32> to vector<1x64xf32>
    %533 = vector.broadcast %532 : vector<1x64xf32> to vector<8x64xf32>
    %534 = arith.addf %203, %533 : vector<8x64xf32>
    %cst_203 = arith.constant 0.000000e+00 : f32
    %535 = vector.broadcast %cst_203 : f32 to vector<8x64xf32>
    %536 = arith.cmpf ogt, %534, %535 : vector<8x64xf32>
    %cst_204 = arith.constant 2.000000e-01 : f32
    %537 = vector.broadcast %cst_204 : f32 to vector<8x64xf32>
    %538 = arith.mulf %537, %534 : vector<8x64xf32>
    %539 = arith.select %536, %534, %538 : vector<8x64xi1>, vector<8x64xf32>
    %c5_205 = arith.constant 5 : index
    %540 = memref.load %arg5[%c5_205] : memref<8xf32, #tpu.memory_space<smem>>
    %541 = vector.broadcast %540 : f32 to vector<8x64xf32>
    %542 = arith.mulf %541, %539 : vector<8x64xf32>
    %543 = arith.addf %531, %542 : vector<8x64xf32>
    %544 = vector.extract_strided_slice %240 {offsets = [2, 0], sizes = [1, 64], strides = [1, 1]} : vector<8x64xf32> to vector<1x64xf32>
    %545 = vector.broadcast %544 : vector<1x64xf32> to vector<8x64xf32>
    %546 = arith.addf %236, %545 : vector<8x64xf32>
    %cst_206 = arith.constant 0.000000e+00 : f32
    %547 = vector.broadcast %cst_206 : f32 to vector<8x64xf32>
    %548 = arith.cmpf ogt, %546, %547 : vector<8x64xf32>
    %cst_207 = arith.constant 2.000000e-01 : f32
    %549 = vector.broadcast %cst_207 : f32 to vector<8x64xf32>
    %550 = arith.mulf %549, %546 : vector<8x64xf32>
    %551 = arith.select %548, %546, %550 : vector<8x64xi1>, vector<8x64xf32>
    %c6_208 = arith.constant 6 : index
    %552 = memref.load %arg5[%c6_208] : memref<8xf32, #tpu.memory_space<smem>>
    %553 = vector.broadcast %552 : f32 to vector<8x64xf32>
    %554 = arith.mulf %553, %551 : vector<8x64xf32>
    %555 = arith.addf %543, %554 : vector<8x64xf32>
    %556 = vector.extract_strided_slice %273 {offsets = [2, 0], sizes = [1, 64], strides = [1, 1]} : vector<8x64xf32> to vector<1x64xf32>
    %557 = vector.broadcast %556 : vector<1x64xf32> to vector<8x64xf32>
    %558 = arith.addf %269, %557 : vector<8x64xf32>
    %cst_209 = arith.constant 0.000000e+00 : f32
    %559 = vector.broadcast %cst_209 : f32 to vector<8x64xf32>
    %560 = arith.cmpf ogt, %558, %559 : vector<8x64xf32>
    %cst_210 = arith.constant 2.000000e-01 : f32
    %561 = vector.broadcast %cst_210 : f32 to vector<8x64xf32>
    %562 = arith.mulf %561, %558 : vector<8x64xf32>
    %563 = arith.select %560, %558, %562 : vector<8x64xi1>, vector<8x64xf32>
    %c7_211 = arith.constant 7 : index
    %564 = memref.load %arg5[%c7_211] : memref<8xf32, #tpu.memory_space<smem>>
    %565 = vector.broadcast %564 : f32 to vector<8x64xf32>
    %566 = arith.mulf %565, %563 : vector<8x64xf32>
    %567 = arith.addf %555, %566 : vector<8x64xf32>
    %c3_212 = arith.constant 3 : index
    %c0_213 = arith.constant 0 : index
    %c0_214 = arith.constant 0 : index
    %568 = vector.load %arg2[%c3_212, %c0_213, %c0_214] : memref<8x8x64xf32, #tpu.memory_space<vmem>>, vector<1x8x64xf32>
    %569 = vector.shape_cast %568 : vector<1x8x64xf32> to vector<8x64xf32>
    %570 = vector.extract_strided_slice %42 {offsets = [3, 0], sizes = [1, 64], strides = [1, 1]} : vector<8x64xf32> to vector<1x64xf32>
    %571 = vector.broadcast %570 : vector<1x64xf32> to vector<8x64xf32>
    %572 = arith.addf %38, %571 : vector<8x64xf32>
    %cst_215 = arith.constant 0.000000e+00 : f32
    %573 = vector.broadcast %cst_215 : f32 to vector<8x64xf32>
    %574 = arith.cmpf ogt, %572, %573 : vector<8x64xf32>
    %cst_216 = arith.constant 2.000000e-01 : f32
    %575 = vector.broadcast %cst_216 : f32 to vector<8x64xf32>
    %576 = arith.mulf %575, %572 : vector<8x64xf32>
    %577 = arith.select %574, %572, %576 : vector<8x64xi1>, vector<8x64xf32>
    %c0_217 = arith.constant 0 : index
    %578 = memref.load %arg5[%c0_217] : memref<8xf32, #tpu.memory_space<smem>>
    %579 = vector.broadcast %578 : f32 to vector<8x64xf32>
    %580 = arith.mulf %579, %577 : vector<8x64xf32>
    %581 = arith.addf %569, %580 : vector<8x64xf32>
    %582 = vector.extract_strided_slice %75 {offsets = [3, 0], sizes = [1, 64], strides = [1, 1]} : vector<8x64xf32> to vector<1x64xf32>
    %583 = vector.broadcast %582 : vector<1x64xf32> to vector<8x64xf32>
    %584 = arith.addf %71, %583 : vector<8x64xf32>
    %cst_218 = arith.constant 0.000000e+00 : f32
    %585 = vector.broadcast %cst_218 : f32 to vector<8x64xf32>
    %586 = arith.cmpf ogt, %584, %585 : vector<8x64xf32>
    %cst_219 = arith.constant 2.000000e-01 : f32
    %587 = vector.broadcast %cst_219 : f32 to vector<8x64xf32>
    %588 = arith.mulf %587, %584 : vector<8x64xf32>
    %589 = arith.select %586, %584, %588 : vector<8x64xi1>, vector<8x64xf32>
    %c1_220 = arith.constant 1 : index
    %590 = memref.load %arg5[%c1_220] : memref<8xf32, #tpu.memory_space<smem>>
    %591 = vector.broadcast %590 : f32 to vector<8x64xf32>
    %592 = arith.mulf %591, %589 : vector<8x64xf32>
    %593 = arith.addf %581, %592 : vector<8x64xf32>
    %594 = vector.extract_strided_slice %108 {offsets = [3, 0], sizes = [1, 64], strides = [1, 1]} : vector<8x64xf32> to vector<1x64xf32>
    %595 = vector.broadcast %594 : vector<1x64xf32> to vector<8x64xf32>
    %596 = arith.addf %104, %595 : vector<8x64xf32>
    %cst_221 = arith.constant 0.000000e+00 : f32
    %597 = vector.broadcast %cst_221 : f32 to vector<8x64xf32>
    %598 = arith.cmpf ogt, %596, %597 : vector<8x64xf32>
    %cst_222 = arith.constant 2.000000e-01 : f32
    %599 = vector.broadcast %cst_222 : f32 to vector<8x64xf32>
    %600 = arith.mulf %599, %596 : vector<8x64xf32>
    %601 = arith.select %598, %596, %600 : vector<8x64xi1>, vector<8x64xf32>
    %c2_223 = arith.constant 2 : index
    %602 = memref.load %arg5[%c2_223] : memref<8xf32, #tpu.memory_space<smem>>
    %603 = vector.broadcast %602 : f32 to vector<8x64xf32>
    %604 = arith.mulf %603, %601 : vector<8x64xf32>
    %605 = arith.addf %593, %604 : vector<8x64xf32>
    %606 = vector.extract_strided_slice %141 {offsets = [3, 0], sizes = [1, 64], strides = [1, 1]} : vector<8x64xf32> to vector<1x64xf32>
    %607 = vector.broadcast %606 : vector<1x64xf32> to vector<8x64xf32>
    %608 = arith.addf %137, %607 : vector<8x64xf32>
    %cst_224 = arith.constant 0.000000e+00 : f32
    %609 = vector.broadcast %cst_224 : f32 to vector<8x64xf32>
    %610 = arith.cmpf ogt, %608, %609 : vector<8x64xf32>
    %cst_225 = arith.constant 2.000000e-01 : f32
    %611 = vector.broadcast %cst_225 : f32 to vector<8x64xf32>
    %612 = arith.mulf %611, %608 : vector<8x64xf32>
    %613 = arith.select %610, %608, %612 : vector<8x64xi1>, vector<8x64xf32>
    %c3_226 = arith.constant 3 : index
    %614 = memref.load %arg5[%c3_226] : memref<8xf32, #tpu.memory_space<smem>>
    %615 = vector.broadcast %614 : f32 to vector<8x64xf32>
    %616 = arith.mulf %615, %613 : vector<8x64xf32>
    %617 = arith.addf %605, %616 : vector<8x64xf32>
    %618 = vector.extract_strided_slice %174 {offsets = [3, 0], sizes = [1, 64], strides = [1, 1]} : vector<8x64xf32> to vector<1x64xf32>
    %619 = vector.broadcast %618 : vector<1x64xf32> to vector<8x64xf32>
    %620 = arith.addf %170, %619 : vector<8x64xf32>
    %cst_227 = arith.constant 0.000000e+00 : f32
    %621 = vector.broadcast %cst_227 : f32 to vector<8x64xf32>
    %622 = arith.cmpf ogt, %620, %621 : vector<8x64xf32>
    %cst_228 = arith.constant 2.000000e-01 : f32
    %623 = vector.broadcast %cst_228 : f32 to vector<8x64xf32>
    %624 = arith.mulf %623, %620 : vector<8x64xf32>
    %625 = arith.select %622, %620, %624 : vector<8x64xi1>, vector<8x64xf32>
    %c4_229 = arith.constant 4 : index
    %626 = memref.load %arg5[%c4_229] : memref<8xf32, #tpu.memory_space<smem>>
    %627 = vector.broadcast %626 : f32 to vector<8x64xf32>
    %628 = arith.mulf %627, %625 : vector<8x64xf32>
    %629 = arith.addf %617, %628 : vector<8x64xf32>
    %630 = vector.extract_strided_slice %207 {offsets = [3, 0], sizes = [1, 64], strides = [1, 1]} : vector<8x64xf32> to vector<1x64xf32>
    %631 = vector.broadcast %630 : vector<1x64xf32> to vector<8x64xf32>
    %632 = arith.addf %203, %631 : vector<8x64xf32>
    %cst_230 = arith.constant 0.000000e+00 : f32
    %633 = vector.broadcast %cst_230 : f32 to vector<8x64xf32>
    %634 = arith.cmpf ogt, %632, %633 : vector<8x64xf32>
    %cst_231 = arith.constant 2.000000e-01 : f32
    %635 = vector.broadcast %cst_231 : f32 to vector<8x64xf32>
    %636 = arith.mulf %635, %632 : vector<8x64xf32>
    %637 = arith.select %634, %632, %636 : vector<8x64xi1>, vector<8x64xf32>
    %c5_232 = arith.constant 5 : index
    %638 = memref.load %arg5[%c5_232] : memref<8xf32, #tpu.memory_space<smem>>
    %639 = vector.broadcast %638 : f32 to vector<8x64xf32>
    %640 = arith.mulf %639, %637 : vector<8x64xf32>
    %641 = arith.addf %629, %640 : vector<8x64xf32>
    %642 = vector.extract_strided_slice %240 {offsets = [3, 0], sizes = [1, 64], strides = [1, 1]} : vector<8x64xf32> to vector<1x64xf32>
    %643 = vector.broadcast %642 : vector<1x64xf32> to vector<8x64xf32>
    %644 = arith.addf %236, %643 : vector<8x64xf32>
    %cst_233 = arith.constant 0.000000e+00 : f32
    %645 = vector.broadcast %cst_233 : f32 to vector<8x64xf32>
    %646 = arith.cmpf ogt, %644, %645 : vector<8x64xf32>
    %cst_234 = arith.constant 2.000000e-01 : f32
    %647 = vector.broadcast %cst_234 : f32 to vector<8x64xf32>
    %648 = arith.mulf %647, %644 : vector<8x64xf32>
    %649 = arith.select %646, %644, %648 : vector<8x64xi1>, vector<8x64xf32>
    %c6_235 = arith.constant 6 : index
    %650 = memref.load %arg5[%c6_235] : memref<8xf32, #tpu.memory_space<smem>>
    %651 = vector.broadcast %650 : f32 to vector<8x64xf32>
    %652 = arith.mulf %651, %649 : vector<8x64xf32>
    %653 = arith.addf %641, %652 : vector<8x64xf32>
    %654 = vector.extract_strided_slice %273 {offsets = [3, 0], sizes = [1, 64], strides = [1, 1]} : vector<8x64xf32> to vector<1x64xf32>
    %655 = vector.broadcast %654 : vector<1x64xf32> to vector<8x64xf32>
    %656 = arith.addf %269, %655 : vector<8x64xf32>
    %cst_236 = arith.constant 0.000000e+00 : f32
    %657 = vector.broadcast %cst_236 : f32 to vector<8x64xf32>
    %658 = arith.cmpf ogt, %656, %657 : vector<8x64xf32>
    %cst_237 = arith.constant 2.000000e-01 : f32
    %659 = vector.broadcast %cst_237 : f32 to vector<8x64xf32>
    %660 = arith.mulf %659, %656 : vector<8x64xf32>
    %661 = arith.select %658, %656, %660 : vector<8x64xi1>, vector<8x64xf32>
    %c7_238 = arith.constant 7 : index
    %662 = memref.load %arg5[%c7_238] : memref<8xf32, #tpu.memory_space<smem>>
    %663 = vector.broadcast %662 : f32 to vector<8x64xf32>
    %664 = arith.mulf %663, %661 : vector<8x64xf32>
    %665 = arith.addf %653, %664 : vector<8x64xf32>
    %c4_239 = arith.constant 4 : index
    %c0_240 = arith.constant 0 : index
    %c0_241 = arith.constant 0 : index
    %666 = vector.load %arg2[%c4_239, %c0_240, %c0_241] : memref<8x8x64xf32, #tpu.memory_space<vmem>>, vector<1x8x64xf32>
    %667 = vector.shape_cast %666 : vector<1x8x64xf32> to vector<8x64xf32>
    %668 = vector.extract_strided_slice %42 {offsets = [4, 0], sizes = [1, 64], strides = [1, 1]} : vector<8x64xf32> to vector<1x64xf32>
    %669 = vector.broadcast %668 : vector<1x64xf32> to vector<8x64xf32>
    %670 = arith.addf %38, %669 : vector<8x64xf32>
    %cst_242 = arith.constant 0.000000e+00 : f32
    %671 = vector.broadcast %cst_242 : f32 to vector<8x64xf32>
    %672 = arith.cmpf ogt, %670, %671 : vector<8x64xf32>
    %cst_243 = arith.constant 2.000000e-01 : f32
    %673 = vector.broadcast %cst_243 : f32 to vector<8x64xf32>
    %674 = arith.mulf %673, %670 : vector<8x64xf32>
    %675 = arith.select %672, %670, %674 : vector<8x64xi1>, vector<8x64xf32>
    %c0_244 = arith.constant 0 : index
    %676 = memref.load %arg5[%c0_244] : memref<8xf32, #tpu.memory_space<smem>>
    %677 = vector.broadcast %676 : f32 to vector<8x64xf32>
    %678 = arith.mulf %677, %675 : vector<8x64xf32>
    %679 = arith.addf %667, %678 : vector<8x64xf32>
    %680 = vector.extract_strided_slice %75 {offsets = [4, 0], sizes = [1, 64], strides = [1, 1]} : vector<8x64xf32> to vector<1x64xf32>
    %681 = vector.broadcast %680 : vector<1x64xf32> to vector<8x64xf32>
    %682 = arith.addf %71, %681 : vector<8x64xf32>
    %cst_245 = arith.constant 0.000000e+00 : f32
    %683 = vector.broadcast %cst_245 : f32 to vector<8x64xf32>
    %684 = arith.cmpf ogt, %682, %683 : vector<8x64xf32>
    %cst_246 = arith.constant 2.000000e-01 : f32
    %685 = vector.broadcast %cst_246 : f32 to vector<8x64xf32>
    %686 = arith.mulf %685, %682 : vector<8x64xf32>
    %687 = arith.select %684, %682, %686 : vector<8x64xi1>, vector<8x64xf32>
    %c1_247 = arith.constant 1 : index
    %688 = memref.load %arg5[%c1_247] : memref<8xf32, #tpu.memory_space<smem>>
    %689 = vector.broadcast %688 : f32 to vector<8x64xf32>
    %690 = arith.mulf %689, %687 : vector<8x64xf32>
    %691 = arith.addf %679, %690 : vector<8x64xf32>
    %692 = vector.extract_strided_slice %108 {offsets = [4, 0], sizes = [1, 64], strides = [1, 1]} : vector<8x64xf32> to vector<1x64xf32>
    %693 = vector.broadcast %692 : vector<1x64xf32> to vector<8x64xf32>
    %694 = arith.addf %104, %693 : vector<8x64xf32>
    %cst_248 = arith.constant 0.000000e+00 : f32
    %695 = vector.broadcast %cst_248 : f32 to vector<8x64xf32>
    %696 = arith.cmpf ogt, %694, %695 : vector<8x64xf32>
    %cst_249 = arith.constant 2.000000e-01 : f32
    %697 = vector.broadcast %cst_249 : f32 to vector<8x64xf32>
    %698 = arith.mulf %697, %694 : vector<8x64xf32>
    %699 = arith.select %696, %694, %698 : vector<8x64xi1>, vector<8x64xf32>
    %c2_250 = arith.constant 2 : index
    %700 = memref.load %arg5[%c2_250] : memref<8xf32, #tpu.memory_space<smem>>
    %701 = vector.broadcast %700 : f32 to vector<8x64xf32>
    %702 = arith.mulf %701, %699 : vector<8x64xf32>
    %703 = arith.addf %691, %702 : vector<8x64xf32>
    %704 = vector.extract_strided_slice %141 {offsets = [4, 0], sizes = [1, 64], strides = [1, 1]} : vector<8x64xf32> to vector<1x64xf32>
    %705 = vector.broadcast %704 : vector<1x64xf32> to vector<8x64xf32>
    %706 = arith.addf %137, %705 : vector<8x64xf32>
    %cst_251 = arith.constant 0.000000e+00 : f32
    %707 = vector.broadcast %cst_251 : f32 to vector<8x64xf32>
    %708 = arith.cmpf ogt, %706, %707 : vector<8x64xf32>
    %cst_252 = arith.constant 2.000000e-01 : f32
    %709 = vector.broadcast %cst_252 : f32 to vector<8x64xf32>
    %710 = arith.mulf %709, %706 : vector<8x64xf32>
    %711 = arith.select %708, %706, %710 : vector<8x64xi1>, vector<8x64xf32>
    %c3_253 = arith.constant 3 : index
    %712 = memref.load %arg5[%c3_253] : memref<8xf32, #tpu.memory_space<smem>>
    %713 = vector.broadcast %712 : f32 to vector<8x64xf32>
    %714 = arith.mulf %713, %711 : vector<8x64xf32>
    %715 = arith.addf %703, %714 : vector<8x64xf32>
    %716 = vector.extract_strided_slice %174 {offsets = [4, 0], sizes = [1, 64], strides = [1, 1]} : vector<8x64xf32> to vector<1x64xf32>
    %717 = vector.broadcast %716 : vector<1x64xf32> to vector<8x64xf32>
    %718 = arith.addf %170, %717 : vector<8x64xf32>
    %cst_254 = arith.constant 0.000000e+00 : f32
    %719 = vector.broadcast %cst_254 : f32 to vector<8x64xf32>
    %720 = arith.cmpf ogt, %718, %719 : vector<8x64xf32>
    %cst_255 = arith.constant 2.000000e-01 : f32
    %721 = vector.broadcast %cst_255 : f32 to vector<8x64xf32>
    %722 = arith.mulf %721, %718 : vector<8x64xf32>
    %723 = arith.select %720, %718, %722 : vector<8x64xi1>, vector<8x64xf32>
    %c4_256 = arith.constant 4 : index
    %724 = memref.load %arg5[%c4_256] : memref<8xf32, #tpu.memory_space<smem>>
    %725 = vector.broadcast %724 : f32 to vector<8x64xf32>
    %726 = arith.mulf %725, %723 : vector<8x64xf32>
    %727 = arith.addf %715, %726 : vector<8x64xf32>
    %728 = vector.extract_strided_slice %207 {offsets = [4, 0], sizes = [1, 64], strides = [1, 1]} : vector<8x64xf32> to vector<1x64xf32>
    %729 = vector.broadcast %728 : vector<1x64xf32> to vector<8x64xf32>
    %730 = arith.addf %203, %729 : vector<8x64xf32>
    %cst_257 = arith.constant 0.000000e+00 : f32
    %731 = vector.broadcast %cst_257 : f32 to vector<8x64xf32>
    %732 = arith.cmpf ogt, %730, %731 : vector<8x64xf32>
    %cst_258 = arith.constant 2.000000e-01 : f32
    %733 = vector.broadcast %cst_258 : f32 to vector<8x64xf32>
    %734 = arith.mulf %733, %730 : vector<8x64xf32>
    %735 = arith.select %732, %730, %734 : vector<8x64xi1>, vector<8x64xf32>
    %c5_259 = arith.constant 5 : index
    %736 = memref.load %arg5[%c5_259] : memref<8xf32, #tpu.memory_space<smem>>
    %737 = vector.broadcast %736 : f32 to vector<8x64xf32>
    %738 = arith.mulf %737, %735 : vector<8x64xf32>
    %739 = arith.addf %727, %738 : vector<8x64xf32>
    %740 = vector.extract_strided_slice %240 {offsets = [4, 0], sizes = [1, 64], strides = [1, 1]} : vector<8x64xf32> to vector<1x64xf32>
    %741 = vector.broadcast %740 : vector<1x64xf32> to vector<8x64xf32>
    %742 = arith.addf %236, %741 : vector<8x64xf32>
    %cst_260 = arith.constant 0.000000e+00 : f32
    %743 = vector.broadcast %cst_260 : f32 to vector<8x64xf32>
    %744 = arith.cmpf ogt, %742, %743 : vector<8x64xf32>
    %cst_261 = arith.constant 2.000000e-01 : f32
    %745 = vector.broadcast %cst_261 : f32 to vector<8x64xf32>
    %746 = arith.mulf %745, %742 : vector<8x64xf32>
    %747 = arith.select %744, %742, %746 : vector<8x64xi1>, vector<8x64xf32>
    %c6_262 = arith.constant 6 : index
    %748 = memref.load %arg5[%c6_262] : memref<8xf32, #tpu.memory_space<smem>>
    %749 = vector.broadcast %748 : f32 to vector<8x64xf32>
    %750 = arith.mulf %749, %747 : vector<8x64xf32>
    %751 = arith.addf %739, %750 : vector<8x64xf32>
    %752 = vector.extract_strided_slice %273 {offsets = [4, 0], sizes = [1, 64], strides = [1, 1]} : vector<8x64xf32> to vector<1x64xf32>
    %753 = vector.broadcast %752 : vector<1x64xf32> to vector<8x64xf32>
    %754 = arith.addf %269, %753 : vector<8x64xf32>
    %cst_263 = arith.constant 0.000000e+00 : f32
    %755 = vector.broadcast %cst_263 : f32 to vector<8x64xf32>
    %756 = arith.cmpf ogt, %754, %755 : vector<8x64xf32>
    %cst_264 = arith.constant 2.000000e-01 : f32
    %757 = vector.broadcast %cst_264 : f32 to vector<8x64xf32>
    %758 = arith.mulf %757, %754 : vector<8x64xf32>
    %759 = arith.select %756, %754, %758 : vector<8x64xi1>, vector<8x64xf32>
    %c7_265 = arith.constant 7 : index
    %760 = memref.load %arg5[%c7_265] : memref<8xf32, #tpu.memory_space<smem>>
    %761 = vector.broadcast %760 : f32 to vector<8x64xf32>
    %762 = arith.mulf %761, %759 : vector<8x64xf32>
    %763 = arith.addf %751, %762 : vector<8x64xf32>
    %c5_266 = arith.constant 5 : index
    %c0_267 = arith.constant 0 : index
    %c0_268 = arith.constant 0 : index
    %764 = vector.load %arg2[%c5_266, %c0_267, %c0_268] : memref<8x8x64xf32, #tpu.memory_space<vmem>>, vector<1x8x64xf32>
    %765 = vector.shape_cast %764 : vector<1x8x64xf32> to vector<8x64xf32>
    %766 = vector.extract_strided_slice %42 {offsets = [5, 0], sizes = [1, 64], strides = [1, 1]} : vector<8x64xf32> to vector<1x64xf32>
    %767 = vector.broadcast %766 : vector<1x64xf32> to vector<8x64xf32>
    %768 = arith.addf %38, %767 : vector<8x64xf32>
    %cst_269 = arith.constant 0.000000e+00 : f32
    %769 = vector.broadcast %cst_269 : f32 to vector<8x64xf32>
    %770 = arith.cmpf ogt, %768, %769 : vector<8x64xf32>
    %cst_270 = arith.constant 2.000000e-01 : f32
    %771 = vector.broadcast %cst_270 : f32 to vector<8x64xf32>
    %772 = arith.mulf %771, %768 : vector<8x64xf32>
    %773 = arith.select %770, %768, %772 : vector<8x64xi1>, vector<8x64xf32>
    %c0_271 = arith.constant 0 : index
    %774 = memref.load %arg5[%c0_271] : memref<8xf32, #tpu.memory_space<smem>>
    %775 = vector.broadcast %774 : f32 to vector<8x64xf32>
    %776 = arith.mulf %775, %773 : vector<8x64xf32>
    %777 = arith.addf %765, %776 : vector<8x64xf32>
    %778 = vector.extract_strided_slice %75 {offsets = [5, 0], sizes = [1, 64], strides = [1, 1]} : vector<8x64xf32> to vector<1x64xf32>
    %779 = vector.broadcast %778 : vector<1x64xf32> to vector<8x64xf32>
    %780 = arith.addf %71, %779 : vector<8x64xf32>
    %cst_272 = arith.constant 0.000000e+00 : f32
    %781 = vector.broadcast %cst_272 : f32 to vector<8x64xf32>
    %782 = arith.cmpf ogt, %780, %781 : vector<8x64xf32>
    %cst_273 = arith.constant 2.000000e-01 : f32
    %783 = vector.broadcast %cst_273 : f32 to vector<8x64xf32>
    %784 = arith.mulf %783, %780 : vector<8x64xf32>
    %785 = arith.select %782, %780, %784 : vector<8x64xi1>, vector<8x64xf32>
    %c1_274 = arith.constant 1 : index
    %786 = memref.load %arg5[%c1_274] : memref<8xf32, #tpu.memory_space<smem>>
    %787 = vector.broadcast %786 : f32 to vector<8x64xf32>
    %788 = arith.mulf %787, %785 : vector<8x64xf32>
    %789 = arith.addf %777, %788 : vector<8x64xf32>
    %790 = vector.extract_strided_slice %108 {offsets = [5, 0], sizes = [1, 64], strides = [1, 1]} : vector<8x64xf32> to vector<1x64xf32>
    %791 = vector.broadcast %790 : vector<1x64xf32> to vector<8x64xf32>
    %792 = arith.addf %104, %791 : vector<8x64xf32>
    %cst_275 = arith.constant 0.000000e+00 : f32
    %793 = vector.broadcast %cst_275 : f32 to vector<8x64xf32>
    %794 = arith.cmpf ogt, %792, %793 : vector<8x64xf32>
    %cst_276 = arith.constant 2.000000e-01 : f32
    %795 = vector.broadcast %cst_276 : f32 to vector<8x64xf32>
    %796 = arith.mulf %795, %792 : vector<8x64xf32>
    %797 = arith.select %794, %792, %796 : vector<8x64xi1>, vector<8x64xf32>
    %c2_277 = arith.constant 2 : index
    %798 = memref.load %arg5[%c2_277] : memref<8xf32, #tpu.memory_space<smem>>
    %799 = vector.broadcast %798 : f32 to vector<8x64xf32>
    %800 = arith.mulf %799, %797 : vector<8x64xf32>
    %801 = arith.addf %789, %800 : vector<8x64xf32>
    %802 = vector.extract_strided_slice %141 {offsets = [5, 0], sizes = [1, 64], strides = [1, 1]} : vector<8x64xf32> to vector<1x64xf32>
    %803 = vector.broadcast %802 : vector<1x64xf32> to vector<8x64xf32>
    %804 = arith.addf %137, %803 : vector<8x64xf32>
    %cst_278 = arith.constant 0.000000e+00 : f32
    %805 = vector.broadcast %cst_278 : f32 to vector<8x64xf32>
    %806 = arith.cmpf ogt, %804, %805 : vector<8x64xf32>
    %cst_279 = arith.constant 2.000000e-01 : f32
    %807 = vector.broadcast %cst_279 : f32 to vector<8x64xf32>
    %808 = arith.mulf %807, %804 : vector<8x64xf32>
    %809 = arith.select %806, %804, %808 : vector<8x64xi1>, vector<8x64xf32>
    %c3_280 = arith.constant 3 : index
    %810 = memref.load %arg5[%c3_280] : memref<8xf32, #tpu.memory_space<smem>>
    %811 = vector.broadcast %810 : f32 to vector<8x64xf32>
    %812 = arith.mulf %811, %809 : vector<8x64xf32>
    %813 = arith.addf %801, %812 : vector<8x64xf32>
    %814 = vector.extract_strided_slice %174 {offsets = [5, 0], sizes = [1, 64], strides = [1, 1]} : vector<8x64xf32> to vector<1x64xf32>
    %815 = vector.broadcast %814 : vector<1x64xf32> to vector<8x64xf32>
    %816 = arith.addf %170, %815 : vector<8x64xf32>
    %cst_281 = arith.constant 0.000000e+00 : f32
    %817 = vector.broadcast %cst_281 : f32 to vector<8x64xf32>
    %818 = arith.cmpf ogt, %816, %817 : vector<8x64xf32>
    %cst_282 = arith.constant 2.000000e-01 : f32
    %819 = vector.broadcast %cst_282 : f32 to vector<8x64xf32>
    %820 = arith.mulf %819, %816 : vector<8x64xf32>
    %821 = arith.select %818, %816, %820 : vector<8x64xi1>, vector<8x64xf32>
    %c4_283 = arith.constant 4 : index
    %822 = memref.load %arg5[%c4_283] : memref<8xf32, #tpu.memory_space<smem>>
    %823 = vector.broadcast %822 : f32 to vector<8x64xf32>
    %824 = arith.mulf %823, %821 : vector<8x64xf32>
    %825 = arith.addf %813, %824 : vector<8x64xf32>
    %826 = vector.extract_strided_slice %207 {offsets = [5, 0], sizes = [1, 64], strides = [1, 1]} : vector<8x64xf32> to vector<1x64xf32>
    %827 = vector.broadcast %826 : vector<1x64xf32> to vector<8x64xf32>
    %828 = arith.addf %203, %827 : vector<8x64xf32>
    %cst_284 = arith.constant 0.000000e+00 : f32
    %829 = vector.broadcast %cst_284 : f32 to vector<8x64xf32>
    %830 = arith.cmpf ogt, %828, %829 : vector<8x64xf32>
    %cst_285 = arith.constant 2.000000e-01 : f32
    %831 = vector.broadcast %cst_285 : f32 to vector<8x64xf32>
    %832 = arith.mulf %831, %828 : vector<8x64xf32>
    %833 = arith.select %830, %828, %832 : vector<8x64xi1>, vector<8x64xf32>
    %c5_286 = arith.constant 5 : index
    %834 = memref.load %arg5[%c5_286] : memref<8xf32, #tpu.memory_space<smem>>
    %835 = vector.broadcast %834 : f32 to vector<8x64xf32>
    %836 = arith.mulf %835, %833 : vector<8x64xf32>
    %837 = arith.addf %825, %836 : vector<8x64xf32>
    %838 = vector.extract_strided_slice %240 {offsets = [5, 0], sizes = [1, 64], strides = [1, 1]} : vector<8x64xf32> to vector<1x64xf32>
    %839 = vector.broadcast %838 : vector<1x64xf32> to vector<8x64xf32>
    %840 = arith.addf %236, %839 : vector<8x64xf32>
    %cst_287 = arith.constant 0.000000e+00 : f32
    %841 = vector.broadcast %cst_287 : f32 to vector<8x64xf32>
    %842 = arith.cmpf ogt, %840, %841 : vector<8x64xf32>
    %cst_288 = arith.constant 2.000000e-01 : f32
    %843 = vector.broadcast %cst_288 : f32 to vector<8x64xf32>
    %844 = arith.mulf %843, %840 : vector<8x64xf32>
    %845 = arith.select %842, %840, %844 : vector<8x64xi1>, vector<8x64xf32>
    %c6_289 = arith.constant 6 : index
    %846 = memref.load %arg5[%c6_289] : memref<8xf32, #tpu.memory_space<smem>>
    %847 = vector.broadcast %846 : f32 to vector<8x64xf32>
    %848 = arith.mulf %847, %845 : vector<8x64xf32>
    %849 = arith.addf %837, %848 : vector<8x64xf32>
    %850 = vector.extract_strided_slice %273 {offsets = [5, 0], sizes = [1, 64], strides = [1, 1]} : vector<8x64xf32> to vector<1x64xf32>
    %851 = vector.broadcast %850 : vector<1x64xf32> to vector<8x64xf32>
    %852 = arith.addf %269, %851 : vector<8x64xf32>
    %cst_290 = arith.constant 0.000000e+00 : f32
    %853 = vector.broadcast %cst_290 : f32 to vector<8x64xf32>
    %854 = arith.cmpf ogt, %852, %853 : vector<8x64xf32>
    %cst_291 = arith.constant 2.000000e-01 : f32
    %855 = vector.broadcast %cst_291 : f32 to vector<8x64xf32>
    %856 = arith.mulf %855, %852 : vector<8x64xf32>
    %857 = arith.select %854, %852, %856 : vector<8x64xi1>, vector<8x64xf32>
    %c7_292 = arith.constant 7 : index
    %858 = memref.load %arg5[%c7_292] : memref<8xf32, #tpu.memory_space<smem>>
    %859 = vector.broadcast %858 : f32 to vector<8x64xf32>
    %860 = arith.mulf %859, %857 : vector<8x64xf32>
    %861 = arith.addf %849, %860 : vector<8x64xf32>
    %c6_293 = arith.constant 6 : index
    %c0_294 = arith.constant 0 : index
    %c0_295 = arith.constant 0 : index
    %862 = vector.load %arg2[%c6_293, %c0_294, %c0_295] : memref<8x8x64xf32, #tpu.memory_space<vmem>>, vector<1x8x64xf32>
    %863 = vector.shape_cast %862 : vector<1x8x64xf32> to vector<8x64xf32>
    %864 = vector.extract_strided_slice %42 {offsets = [6, 0], sizes = [1, 64], strides = [1, 1]} : vector<8x64xf32> to vector<1x64xf32>
    %865 = vector.broadcast %864 : vector<1x64xf32> to vector<8x64xf32>
    %866 = arith.addf %38, %865 : vector<8x64xf32>
    %cst_296 = arith.constant 0.000000e+00 : f32
    %867 = vector.broadcast %cst_296 : f32 to vector<8x64xf32>
    %868 = arith.cmpf ogt, %866, %867 : vector<8x64xf32>
    %cst_297 = arith.constant 2.000000e-01 : f32
    %869 = vector.broadcast %cst_297 : f32 to vector<8x64xf32>
    %870 = arith.mulf %869, %866 : vector<8x64xf32>
    %871 = arith.select %868, %866, %870 : vector<8x64xi1>, vector<8x64xf32>
    %c0_298 = arith.constant 0 : index
    %872 = memref.load %arg5[%c0_298] : memref<8xf32, #tpu.memory_space<smem>>
    %873 = vector.broadcast %872 : f32 to vector<8x64xf32>
    %874 = arith.mulf %873, %871 : vector<8x64xf32>
    %875 = arith.addf %863, %874 : vector<8x64xf32>
    %876 = vector.extract_strided_slice %75 {offsets = [6, 0], sizes = [1, 64], strides = [1, 1]} : vector<8x64xf32> to vector<1x64xf32>
    %877 = vector.broadcast %876 : vector<1x64xf32> to vector<8x64xf32>
    %878 = arith.addf %71, %877 : vector<8x64xf32>
    %cst_299 = arith.constant 0.000000e+00 : f32
    %879 = vector.broadcast %cst_299 : f32 to vector<8x64xf32>
    %880 = arith.cmpf ogt, %878, %879 : vector<8x64xf32>
    %cst_300 = arith.constant 2.000000e-01 : f32
    %881 = vector.broadcast %cst_300 : f32 to vector<8x64xf32>
    %882 = arith.mulf %881, %878 : vector<8x64xf32>
    %883 = arith.select %880, %878, %882 : vector<8x64xi1>, vector<8x64xf32>
    %c1_301 = arith.constant 1 : index
    %884 = memref.load %arg5[%c1_301] : memref<8xf32, #tpu.memory_space<smem>>
    %885 = vector.broadcast %884 : f32 to vector<8x64xf32>
    %886 = arith.mulf %885, %883 : vector<8x64xf32>
    %887 = arith.addf %875, %886 : vector<8x64xf32>
    %888 = vector.extract_strided_slice %108 {offsets = [6, 0], sizes = [1, 64], strides = [1, 1]} : vector<8x64xf32> to vector<1x64xf32>
    %889 = vector.broadcast %888 : vector<1x64xf32> to vector<8x64xf32>
    %890 = arith.addf %104, %889 : vector<8x64xf32>
    %cst_302 = arith.constant 0.000000e+00 : f32
    %891 = vector.broadcast %cst_302 : f32 to vector<8x64xf32>
    %892 = arith.cmpf ogt, %890, %891 : vector<8x64xf32>
    %cst_303 = arith.constant 2.000000e-01 : f32
    %893 = vector.broadcast %cst_303 : f32 to vector<8x64xf32>
    %894 = arith.mulf %893, %890 : vector<8x64xf32>
    %895 = arith.select %892, %890, %894 : vector<8x64xi1>, vector<8x64xf32>
    %c2_304 = arith.constant 2 : index
    %896 = memref.load %arg5[%c2_304] : memref<8xf32, #tpu.memory_space<smem>>
    %897 = vector.broadcast %896 : f32 to vector<8x64xf32>
    %898 = arith.mulf %897, %895 : vector<8x64xf32>
    %899 = arith.addf %887, %898 : vector<8x64xf32>
    %900 = vector.extract_strided_slice %141 {offsets = [6, 0], sizes = [1, 64], strides = [1, 1]} : vector<8x64xf32> to vector<1x64xf32>
    %901 = vector.broadcast %900 : vector<1x64xf32> to vector<8x64xf32>
    %902 = arith.addf %137, %901 : vector<8x64xf32>
    %cst_305 = arith.constant 0.000000e+00 : f32
    %903 = vector.broadcast %cst_305 : f32 to vector<8x64xf32>
    %904 = arith.cmpf ogt, %902, %903 : vector<8x64xf32>
    %cst_306 = arith.constant 2.000000e-01 : f32
    %905 = vector.broadcast %cst_306 : f32 to vector<8x64xf32>
    %906 = arith.mulf %905, %902 : vector<8x64xf32>
    %907 = arith.select %904, %902, %906 : vector<8x64xi1>, vector<8x64xf32>
    %c3_307 = arith.constant 3 : index
    %908 = memref.load %arg5[%c3_307] : memref<8xf32, #tpu.memory_space<smem>>
    %909 = vector.broadcast %908 : f32 to vector<8x64xf32>
    %910 = arith.mulf %909, %907 : vector<8x64xf32>
    %911 = arith.addf %899, %910 : vector<8x64xf32>
    %912 = vector.extract_strided_slice %174 {offsets = [6, 0], sizes = [1, 64], strides = [1, 1]} : vector<8x64xf32> to vector<1x64xf32>
    %913 = vector.broadcast %912 : vector<1x64xf32> to vector<8x64xf32>
    %914 = arith.addf %170, %913 : vector<8x64xf32>
    %cst_308 = arith.constant 0.000000e+00 : f32
    %915 = vector.broadcast %cst_308 : f32 to vector<8x64xf32>
    %916 = arith.cmpf ogt, %914, %915 : vector<8x64xf32>
    %cst_309 = arith.constant 2.000000e-01 : f32
    %917 = vector.broadcast %cst_309 : f32 to vector<8x64xf32>
    %918 = arith.mulf %917, %914 : vector<8x64xf32>
    %919 = arith.select %916, %914, %918 : vector<8x64xi1>, vector<8x64xf32>
    %c4_310 = arith.constant 4 : index
    %920 = memref.load %arg5[%c4_310] : memref<8xf32, #tpu.memory_space<smem>>
    %921 = vector.broadcast %920 : f32 to vector<8x64xf32>
    %922 = arith.mulf %921, %919 : vector<8x64xf32>
    %923 = arith.addf %911, %922 : vector<8x64xf32>
    %924 = vector.extract_strided_slice %207 {offsets = [6, 0], sizes = [1, 64], strides = [1, 1]} : vector<8x64xf32> to vector<1x64xf32>
    %925 = vector.broadcast %924 : vector<1x64xf32> to vector<8x64xf32>
    %926 = arith.addf %203, %925 : vector<8x64xf32>
    %cst_311 = arith.constant 0.000000e+00 : f32
    %927 = vector.broadcast %cst_311 : f32 to vector<8x64xf32>
    %928 = arith.cmpf ogt, %926, %927 : vector<8x64xf32>
    %cst_312 = arith.constant 2.000000e-01 : f32
    %929 = vector.broadcast %cst_312 : f32 to vector<8x64xf32>
    %930 = arith.mulf %929, %926 : vector<8x64xf32>
    %931 = arith.select %928, %926, %930 : vector<8x64xi1>, vector<8x64xf32>
    %c5_313 = arith.constant 5 : index
    %932 = memref.load %arg5[%c5_313] : memref<8xf32, #tpu.memory_space<smem>>
    %933 = vector.broadcast %932 : f32 to vector<8x64xf32>
    %934 = arith.mulf %933, %931 : vector<8x64xf32>
    %935 = arith.addf %923, %934 : vector<8x64xf32>
    %936 = vector.extract_strided_slice %240 {offsets = [6, 0], sizes = [1, 64], strides = [1, 1]} : vector<8x64xf32> to vector<1x64xf32>
    %937 = vector.broadcast %936 : vector<1x64xf32> to vector<8x64xf32>
    %938 = arith.addf %236, %937 : vector<8x64xf32>
    %cst_314 = arith.constant 0.000000e+00 : f32
    %939 = vector.broadcast %cst_314 : f32 to vector<8x64xf32>
    %940 = arith.cmpf ogt, %938, %939 : vector<8x64xf32>
    %cst_315 = arith.constant 2.000000e-01 : f32
    %941 = vector.broadcast %cst_315 : f32 to vector<8x64xf32>
    %942 = arith.mulf %941, %938 : vector<8x64xf32>
    %943 = arith.select %940, %938, %942 : vector<8x64xi1>, vector<8x64xf32>
    %c6_316 = arith.constant 6 : index
    %944 = memref.load %arg5[%c6_316] : memref<8xf32, #tpu.memory_space<smem>>
    %945 = vector.broadcast %944 : f32 to vector<8x64xf32>
    %946 = arith.mulf %945, %943 : vector<8x64xf32>
    %947 = arith.addf %935, %946 : vector<8x64xf32>
    %948 = vector.extract_strided_slice %273 {offsets = [6, 0], sizes = [1, 64], strides = [1, 1]} : vector<8x64xf32> to vector<1x64xf32>
    %949 = vector.broadcast %948 : vector<1x64xf32> to vector<8x64xf32>
    %950 = arith.addf %269, %949 : vector<8x64xf32>
    %cst_317 = arith.constant 0.000000e+00 : f32
    %951 = vector.broadcast %cst_317 : f32 to vector<8x64xf32>
    %952 = arith.cmpf ogt, %950, %951 : vector<8x64xf32>
    %cst_318 = arith.constant 2.000000e-01 : f32
    %953 = vector.broadcast %cst_318 : f32 to vector<8x64xf32>
    %954 = arith.mulf %953, %950 : vector<8x64xf32>
    %955 = arith.select %952, %950, %954 : vector<8x64xi1>, vector<8x64xf32>
    %c7_319 = arith.constant 7 : index
    %956 = memref.load %arg5[%c7_319] : memref<8xf32, #tpu.memory_space<smem>>
    %957 = vector.broadcast %956 : f32 to vector<8x64xf32>
    %958 = arith.mulf %957, %955 : vector<8x64xf32>
    %959 = arith.addf %947, %958 : vector<8x64xf32>
    %c7_320 = arith.constant 7 : index
    %c0_321 = arith.constant 0 : index
    %c0_322 = arith.constant 0 : index
    %960 = vector.load %arg2[%c7_320, %c0_321, %c0_322] : memref<8x8x64xf32, #tpu.memory_space<vmem>>, vector<1x8x64xf32>
    %961 = vector.shape_cast %960 : vector<1x8x64xf32> to vector<8x64xf32>
    %962 = vector.extract_strided_slice %42 {offsets = [7, 0], sizes = [1, 64], strides = [1, 1]} : vector<8x64xf32> to vector<1x64xf32>
    %963 = vector.broadcast %962 : vector<1x64xf32> to vector<8x64xf32>
    %964 = arith.addf %38, %963 : vector<8x64xf32>
    %cst_323 = arith.constant 0.000000e+00 : f32
    %965 = vector.broadcast %cst_323 : f32 to vector<8x64xf32>
    %966 = arith.cmpf ogt, %964, %965 : vector<8x64xf32>
    %cst_324 = arith.constant 2.000000e-01 : f32
    %967 = vector.broadcast %cst_324 : f32 to vector<8x64xf32>
    %968 = arith.mulf %967, %964 : vector<8x64xf32>
    %969 = arith.select %966, %964, %968 : vector<8x64xi1>, vector<8x64xf32>
    %c0_325 = arith.constant 0 : index
    %970 = memref.load %arg5[%c0_325] : memref<8xf32, #tpu.memory_space<smem>>
    %971 = vector.broadcast %970 : f32 to vector<8x64xf32>
    %972 = arith.mulf %971, %969 : vector<8x64xf32>
    %973 = arith.addf %961, %972 : vector<8x64xf32>
    %974 = vector.extract_strided_slice %75 {offsets = [7, 0], sizes = [1, 64], strides = [1, 1]} : vector<8x64xf32> to vector<1x64xf32>
    %975 = vector.broadcast %974 : vector<1x64xf32> to vector<8x64xf32>
    %976 = arith.addf %71, %975 : vector<8x64xf32>
    %cst_326 = arith.constant 0.000000e+00 : f32
    %977 = vector.broadcast %cst_326 : f32 to vector<8x64xf32>
    %978 = arith.cmpf ogt, %976, %977 : vector<8x64xf32>
    %cst_327 = arith.constant 2.000000e-01 : f32
    %979 = vector.broadcast %cst_327 : f32 to vector<8x64xf32>
    %980 = arith.mulf %979, %976 : vector<8x64xf32>
    %981 = arith.select %978, %976, %980 : vector<8x64xi1>, vector<8x64xf32>
    %c1_328 = arith.constant 1 : index
    %982 = memref.load %arg5[%c1_328] : memref<8xf32, #tpu.memory_space<smem>>
    %983 = vector.broadcast %982 : f32 to vector<8x64xf32>
    %984 = arith.mulf %983, %981 : vector<8x64xf32>
    %985 = arith.addf %973, %984 : vector<8x64xf32>
    %986 = vector.extract_strided_slice %108 {offsets = [7, 0], sizes = [1, 64], strides = [1, 1]} : vector<8x64xf32> to vector<1x64xf32>
    %987 = vector.broadcast %986 : vector<1x64xf32> to vector<8x64xf32>
    %988 = arith.addf %104, %987 : vector<8x64xf32>
    %cst_329 = arith.constant 0.000000e+00 : f32
    %989 = vector.broadcast %cst_329 : f32 to vector<8x64xf32>
    %990 = arith.cmpf ogt, %988, %989 : vector<8x64xf32>
    %cst_330 = arith.constant 2.000000e-01 : f32
    %991 = vector.broadcast %cst_330 : f32 to vector<8x64xf32>
    %992 = arith.mulf %991, %988 : vector<8x64xf32>
    %993 = arith.select %990, %988, %992 : vector<8x64xi1>, vector<8x64xf32>
    %c2_331 = arith.constant 2 : index
    %994 = memref.load %arg5[%c2_331] : memref<8xf32, #tpu.memory_space<smem>>
    %995 = vector.broadcast %994 : f32 to vector<8x64xf32>
    %996 = arith.mulf %995, %993 : vector<8x64xf32>
    %997 = arith.addf %985, %996 : vector<8x64xf32>
    %998 = vector.extract_strided_slice %141 {offsets = [7, 0], sizes = [1, 64], strides = [1, 1]} : vector<8x64xf32> to vector<1x64xf32>
    %999 = vector.broadcast %998 : vector<1x64xf32> to vector<8x64xf32>
    %1000 = arith.addf %137, %999 : vector<8x64xf32>
    %cst_332 = arith.constant 0.000000e+00 : f32
    %1001 = vector.broadcast %cst_332 : f32 to vector<8x64xf32>
    %1002 = arith.cmpf ogt, %1000, %1001 : vector<8x64xf32>
    %cst_333 = arith.constant 2.000000e-01 : f32
    %1003 = vector.broadcast %cst_333 : f32 to vector<8x64xf32>
    %1004 = arith.mulf %1003, %1000 : vector<8x64xf32>
    %1005 = arith.select %1002, %1000, %1004 : vector<8x64xi1>, vector<8x64xf32>
    %c3_334 = arith.constant 3 : index
    %1006 = memref.load %arg5[%c3_334] : memref<8xf32, #tpu.memory_space<smem>>
    %1007 = vector.broadcast %1006 : f32 to vector<8x64xf32>
    %1008 = arith.mulf %1007, %1005 : vector<8x64xf32>
    %1009 = arith.addf %997, %1008 : vector<8x64xf32>
    %1010 = vector.extract_strided_slice %174 {offsets = [7, 0], sizes = [1, 64], strides = [1, 1]} : vector<8x64xf32> to vector<1x64xf32>
    %1011 = vector.broadcast %1010 : vector<1x64xf32> to vector<8x64xf32>
    %1012 = arith.addf %170, %1011 : vector<8x64xf32>
    %cst_335 = arith.constant 0.000000e+00 : f32
    %1013 = vector.broadcast %cst_335 : f32 to vector<8x64xf32>
    %1014 = arith.cmpf ogt, %1012, %1013 : vector<8x64xf32>
    %cst_336 = arith.constant 2.000000e-01 : f32
    %1015 = vector.broadcast %cst_336 : f32 to vector<8x64xf32>
    %1016 = arith.mulf %1015, %1012 : vector<8x64xf32>
    %1017 = arith.select %1014, %1012, %1016 : vector<8x64xi1>, vector<8x64xf32>
    %c4_337 = arith.constant 4 : index
    %1018 = memref.load %arg5[%c4_337] : memref<8xf32, #tpu.memory_space<smem>>
    %1019 = vector.broadcast %1018 : f32 to vector<8x64xf32>
    %1020 = arith.mulf %1019, %1017 : vector<8x64xf32>
    %1021 = arith.addf %1009, %1020 : vector<8x64xf32>
    %1022 = vector.extract_strided_slice %207 {offsets = [7, 0], sizes = [1, 64], strides = [1, 1]} : vector<8x64xf32> to vector<1x64xf32>
    %1023 = vector.broadcast %1022 : vector<1x64xf32> to vector<8x64xf32>
    %1024 = arith.addf %203, %1023 : vector<8x64xf32>
    %cst_338 = arith.constant 0.000000e+00 : f32
    %1025 = vector.broadcast %cst_338 : f32 to vector<8x64xf32>
    %1026 = arith.cmpf ogt, %1024, %1025 : vector<8x64xf32>
    %cst_339 = arith.constant 2.000000e-01 : f32
    %1027 = vector.broadcast %cst_339 : f32 to vector<8x64xf32>
    %1028 = arith.mulf %1027, %1024 : vector<8x64xf32>
    %1029 = arith.select %1026, %1024, %1028 : vector<8x64xi1>, vector<8x64xf32>
    %c5_340 = arith.constant 5 : index
    %1030 = memref.load %arg5[%c5_340] : memref<8xf32, #tpu.memory_space<smem>>
    %1031 = vector.broadcast %1030 : f32 to vector<8x64xf32>
    %1032 = arith.mulf %1031, %1029 : vector<8x64xf32>
    %1033 = arith.addf %1021, %1032 : vector<8x64xf32>
    %1034 = vector.extract_strided_slice %240 {offsets = [7, 0], sizes = [1, 64], strides = [1, 1]} : vector<8x64xf32> to vector<1x64xf32>
    %1035 = vector.broadcast %1034 : vector<1x64xf32> to vector<8x64xf32>
    %1036 = arith.addf %236, %1035 : vector<8x64xf32>
    %cst_341 = arith.constant 0.000000e+00 : f32
    %1037 = vector.broadcast %cst_341 : f32 to vector<8x64xf32>
    %1038 = arith.cmpf ogt, %1036, %1037 : vector<8x64xf32>
    %cst_342 = arith.constant 2.000000e-01 : f32
    %1039 = vector.broadcast %cst_342 : f32 to vector<8x64xf32>
    %1040 = arith.mulf %1039, %1036 : vector<8x64xf32>
    %1041 = arith.select %1038, %1036, %1040 : vector<8x64xi1>, vector<8x64xf32>
    %c6_343 = arith.constant 6 : index
    %1042 = memref.load %arg5[%c6_343] : memref<8xf32, #tpu.memory_space<smem>>
    %1043 = vector.broadcast %1042 : f32 to vector<8x64xf32>
    %1044 = arith.mulf %1043, %1041 : vector<8x64xf32>
    %1045 = arith.addf %1033, %1044 : vector<8x64xf32>
    %1046 = vector.extract_strided_slice %273 {offsets = [7, 0], sizes = [1, 64], strides = [1, 1]} : vector<8x64xf32> to vector<1x64xf32>
    %1047 = vector.broadcast %1046 : vector<1x64xf32> to vector<8x64xf32>
    %1048 = arith.addf %269, %1047 : vector<8x64xf32>
    %cst_344 = arith.constant 0.000000e+00 : f32
    %1049 = vector.broadcast %cst_344 : f32 to vector<8x64xf32>
    %1050 = arith.cmpf ogt, %1048, %1049 : vector<8x64xf32>
    %cst_345 = arith.constant 2.000000e-01 : f32
    %1051 = vector.broadcast %cst_345 : f32 to vector<8x64xf32>
    %1052 = arith.mulf %1051, %1048 : vector<8x64xf32>
    %1053 = arith.select %1050, %1048, %1052 : vector<8x64xi1>, vector<8x64xf32>
    %c7_346 = arith.constant 7 : index
    %1054 = memref.load %arg5[%c7_346] : memref<8xf32, #tpu.memory_space<smem>>
    %1055 = vector.broadcast %1054 : f32 to vector<8x64xf32>
    %1056 = arith.mulf %1055, %1053 : vector<8x64xf32>
    %1057 = arith.addf %1045, %1056 : vector<8x64xf32>
    %1058 = arith.maximumf %371, %469 : vector<8x64xf32>
    %1059 = arith.maximumf %1058, %567 : vector<8x64xf32>
    %1060 = arith.maximumf %1059, %665 : vector<8x64xf32>
    %1061 = arith.maximumf %1060, %763 : vector<8x64xf32>
    %1062 = arith.maximumf %1061, %861 : vector<8x64xf32>
    %1063 = arith.maximumf %1062, %959 : vector<8x64xf32>
    %1064 = arith.maximumf %1063, %1057 : vector<8x64xf32>
    %1065 = arith.subf %371, %1064 : vector<8x64xf32>
    %1066 = math.exp %1065 : vector<8x64xf32>
    %1067 = arith.subf %469, %1064 : vector<8x64xf32>
    %1068 = math.exp %1067 : vector<8x64xf32>
    %1069 = arith.subf %567, %1064 : vector<8x64xf32>
    %1070 = math.exp %1069 : vector<8x64xf32>
    %1071 = arith.subf %665, %1064 : vector<8x64xf32>
    %1072 = math.exp %1071 : vector<8x64xf32>
    %1073 = arith.subf %763, %1064 : vector<8x64xf32>
    %1074 = math.exp %1073 : vector<8x64xf32>
    %1075 = arith.subf %861, %1064 : vector<8x64xf32>
    %1076 = math.exp %1075 : vector<8x64xf32>
    %1077 = arith.subf %959, %1064 : vector<8x64xf32>
    %1078 = math.exp %1077 : vector<8x64xf32>
    %1079 = arith.subf %1057, %1064 : vector<8x64xf32>
    %1080 = math.exp %1079 : vector<8x64xf32>
    %1081 = arith.addf %1066, %1068 : vector<8x64xf32>
    %1082 = arith.addf %1081, %1070 : vector<8x64xf32>
    %1083 = arith.addf %1082, %1072 : vector<8x64xf32>
    %1084 = arith.addf %1083, %1074 : vector<8x64xf32>
    %1085 = arith.addf %1084, %1076 : vector<8x64xf32>
    %1086 = arith.addf %1085, %1078 : vector<8x64xf32>
    %1087 = arith.addf %1086, %1080 : vector<8x64xf32>
    %cst_347 = arith.constant 1.000000e+00 : f32
    %1088 = vector.broadcast %cst_347 : f32 to vector<8x64xf32>
    %1089 = arith.divf %1088, %1087 : vector<8x64xf32>
    %1090 = arith.mulf %1066, %1089 : vector<8x64xf32>
    %1091 = arith.mulf %1068, %1089 : vector<8x64xf32>
    %1092 = arith.mulf %1070, %1089 : vector<8x64xf32>
    %1093 = arith.mulf %1072, %1089 : vector<8x64xf32>
    %1094 = arith.mulf %1074, %1089 : vector<8x64xf32>
    %1095 = arith.mulf %1076, %1089 : vector<8x64xf32>
    %1096 = arith.mulf %1078, %1089 : vector<8x64xf32>
    %1097 = arith.mulf %1080, %1089 : vector<8x64xf32>
    %1098 = vector.extract_strided_slice %1 {offsets = [0, 0, 0], sizes = [1, 1, 64], strides = [1, 1, 1]} : vector<4x8x64xf32> to vector<1x1x64xf32>
    %1099 = vector.shape_cast %1098 : vector<1x1x64xf32> to vector<1x64xf32>
    %1100 = vector.broadcast %1099 : vector<1x64xf32> to vector<8x64xf32>
    %1101 = arith.mulf %1090, %1100 : vector<8x64xf32>
    %1102 = vector.extract_strided_slice %1 {offsets = [0, 1, 0], sizes = [1, 1, 64], strides = [1, 1, 1]} : vector<4x8x64xf32> to vector<1x1x64xf32>
    %1103 = vector.shape_cast %1102 : vector<1x1x64xf32> to vector<1x64xf32>
    %1104 = vector.broadcast %1103 : vector<1x64xf32> to vector<8x64xf32>
    %1105 = arith.mulf %1091, %1104 : vector<8x64xf32>
    %1106 = arith.addf %1101, %1105 : vector<8x64xf32>
    %1107 = vector.extract_strided_slice %1 {offsets = [0, 2, 0], sizes = [1, 1, 64], strides = [1, 1, 1]} : vector<4x8x64xf32> to vector<1x1x64xf32>
    %1108 = vector.shape_cast %1107 : vector<1x1x64xf32> to vector<1x64xf32>
    %1109 = vector.broadcast %1108 : vector<1x64xf32> to vector<8x64xf32>
    %1110 = arith.mulf %1092, %1109 : vector<8x64xf32>
    %1111 = arith.addf %1106, %1110 : vector<8x64xf32>
    %1112 = vector.extract_strided_slice %1 {offsets = [0, 3, 0], sizes = [1, 1, 64], strides = [1, 1, 1]} : vector<4x8x64xf32> to vector<1x1x64xf32>
    %1113 = vector.shape_cast %1112 : vector<1x1x64xf32> to vector<1x64xf32>
    %1114 = vector.broadcast %1113 : vector<1x64xf32> to vector<8x64xf32>
    %1115 = arith.mulf %1093, %1114 : vector<8x64xf32>
    %1116 = arith.addf %1111, %1115 : vector<8x64xf32>
    %1117 = vector.extract_strided_slice %1 {offsets = [0, 4, 0], sizes = [1, 1, 64], strides = [1, 1, 1]} : vector<4x8x64xf32> to vector<1x1x64xf32>
    %1118 = vector.shape_cast %1117 : vector<1x1x64xf32> to vector<1x64xf32>
    %1119 = vector.broadcast %1118 : vector<1x64xf32> to vector<8x64xf32>
    %1120 = arith.mulf %1094, %1119 : vector<8x64xf32>
    %1121 = arith.addf %1116, %1120 : vector<8x64xf32>
    %1122 = vector.extract_strided_slice %1 {offsets = [0, 5, 0], sizes = [1, 1, 64], strides = [1, 1, 1]} : vector<4x8x64xf32> to vector<1x1x64xf32>
    %1123 = vector.shape_cast %1122 : vector<1x1x64xf32> to vector<1x64xf32>
    %1124 = vector.broadcast %1123 : vector<1x64xf32> to vector<8x64xf32>
    %1125 = arith.mulf %1095, %1124 : vector<8x64xf32>
    %1126 = arith.addf %1121, %1125 : vector<8x64xf32>
    %1127 = vector.extract_strided_slice %1 {offsets = [0, 6, 0], sizes = [1, 1, 64], strides = [1, 1, 1]} : vector<4x8x64xf32> to vector<1x1x64xf32>
    %1128 = vector.shape_cast %1127 : vector<1x1x64xf32> to vector<1x64xf32>
    %1129 = vector.broadcast %1128 : vector<1x64xf32> to vector<8x64xf32>
    %1130 = arith.mulf %1096, %1129 : vector<8x64xf32>
    %1131 = arith.addf %1126, %1130 : vector<8x64xf32>
    %1132 = vector.extract_strided_slice %1 {offsets = [0, 7, 0], sizes = [1, 1, 64], strides = [1, 1, 1]} : vector<4x8x64xf32> to vector<1x1x64xf32>
    %1133 = vector.shape_cast %1132 : vector<1x1x64xf32> to vector<1x64xf32>
    %1134 = vector.broadcast %1133 : vector<1x64xf32> to vector<8x64xf32>
    %1135 = arith.mulf %1097, %1134 : vector<8x64xf32>
    %1136 = arith.addf %1131, %1135 : vector<8x64xf32>
    %1137 = arith.negf %1136 : vector<8x64xf32>
    %1138 = math.exp %1137 : vector<8x64xf32>
    %cst_348 = arith.constant 1.000000e+00 : f32
    %1139 = vector.broadcast %cst_348 : f32 to vector<8x64xf32>
    %1140 = arith.addf %1139, %1138 : vector<8x64xf32>
    %1141 = arith.divf %1139, %1140 : vector<8x64xf32>
    %c0_349 = arith.constant 0 : index
    %c0_350 = arith.constant 0 : index
    %c0_351 = arith.constant 0 : index
    %c0_352 = arith.constant 0 : index
    %1142 = vector.load %arg6[%c0_349, %c0_350, %c0_351, %c0_352] : memref<1x4x8x64xf32, #tpu.memory_space<vmem>>, vector<1x1x8x64xf32>
    %1143 = vector.shape_cast %1142 : vector<1x1x8x64xf32> to vector<8x64xf32>
    %1144 = vector.shape_cast %1141 : vector<8x64xf32> to vector<1x1x8x64xf32>
    tpu.vector_store %arg6[%c0_349, %c0_350, %c0_351, %c0_352], %1144 {strides = array<i32>} : memref<1x4x8x64xf32, #tpu.memory_space<vmem>>, vector<1x1x8x64xf32>,
    %1145 = vector.extract_strided_slice %1 {offsets = [1, 0, 0], sizes = [1, 1, 64], strides = [1, 1, 1]} : vector<4x8x64xf32> to vector<1x1x64xf32>
    %1146 = vector.shape_cast %1145 : vector<1x1x64xf32> to vector<1x64xf32>
    %1147 = vector.broadcast %1146 : vector<1x64xf32> to vector<8x64xf32>
    %1148 = arith.mulf %1090, %1147 : vector<8x64xf32>
    %1149 = vector.extract_strided_slice %1 {offsets = [1, 1, 0], sizes = [1, 1, 64], strides = [1, 1, 1]} : vector<4x8x64xf32> to vector<1x1x64xf32>
    %1150 = vector.shape_cast %1149 : vector<1x1x64xf32> to vector<1x64xf32>
    %1151 = vector.broadcast %1150 : vector<1x64xf32> to vector<8x64xf32>
    %1152 = arith.mulf %1091, %1151 : vector<8x64xf32>
    %1153 = arith.addf %1148, %1152 : vector<8x64xf32>
    %1154 = vector.extract_strided_slice %1 {offsets = [1, 2, 0], sizes = [1, 1, 64], strides = [1, 1, 1]} : vector<4x8x64xf32> to vector<1x1x64xf32>
    %1155 = vector.shape_cast %1154 : vector<1x1x64xf32> to vector<1x64xf32>
    %1156 = vector.broadcast %1155 : vector<1x64xf32> to vector<8x64xf32>
    %1157 = arith.mulf %1092, %1156 : vector<8x64xf32>
    %1158 = arith.addf %1153, %1157 : vector<8x64xf32>
    %1159 = vector.extract_strided_slice %1 {offsets = [1, 3, 0], sizes = [1, 1, 64], strides = [1, 1, 1]} : vector<4x8x64xf32> to vector<1x1x64xf32>
    %1160 = vector.shape_cast %1159 : vector<1x1x64xf32> to vector<1x64xf32>
    %1161 = vector.broadcast %1160 : vector<1x64xf32> to vector<8x64xf32>
    %1162 = arith.mulf %1093, %1161 : vector<8x64xf32>
    %1163 = arith.addf %1158, %1162 : vector<8x64xf32>
    %1164 = vector.extract_strided_slice %1 {offsets = [1, 4, 0], sizes = [1, 1, 64], strides = [1, 1, 1]} : vector<4x8x64xf32> to vector<1x1x64xf32>
    %1165 = vector.shape_cast %1164 : vector<1x1x64xf32> to vector<1x64xf32>
    %1166 = vector.broadcast %1165 : vector<1x64xf32> to vector<8x64xf32>
    %1167 = arith.mulf %1094, %1166 : vector<8x64xf32>
    %1168 = arith.addf %1163, %1167 : vector<8x64xf32>
    %1169 = vector.extract_strided_slice %1 {offsets = [1, 5, 0], sizes = [1, 1, 64], strides = [1, 1, 1]} : vector<4x8x64xf32> to vector<1x1x64xf32>
    %1170 = vector.shape_cast %1169 : vector<1x1x64xf32> to vector<1x64xf32>
    %1171 = vector.broadcast %1170 : vector<1x64xf32> to vector<8x64xf32>
    %1172 = arith.mulf %1095, %1171 : vector<8x64xf32>
    %1173 = arith.addf %1168, %1172 : vector<8x64xf32>
    %1174 = vector.extract_strided_slice %1 {offsets = [1, 6, 0], sizes = [1, 1, 64], strides = [1, 1, 1]} : vector<4x8x64xf32> to vector<1x1x64xf32>
    %1175 = vector.shape_cast %1174 : vector<1x1x64xf32> to vector<1x64xf32>
    %1176 = vector.broadcast %1175 : vector<1x64xf32> to vector<8x64xf32>
    %1177 = arith.mulf %1096, %1176 : vector<8x64xf32>
    %1178 = arith.addf %1173, %1177 : vector<8x64xf32>
    %1179 = vector.extract_strided_slice %1 {offsets = [1, 7, 0], sizes = [1, 1, 64], strides = [1, 1, 1]} : vector<4x8x64xf32> to vector<1x1x64xf32>
    %1180 = vector.shape_cast %1179 : vector<1x1x64xf32> to vector<1x64xf32>
    %1181 = vector.broadcast %1180 : vector<1x64xf32> to vector<8x64xf32>
    %1182 = arith.mulf %1097, %1181 : vector<8x64xf32>
    %1183 = arith.addf %1178, %1182 : vector<8x64xf32>
    %1184 = arith.negf %1183 : vector<8x64xf32>
    %1185 = math.exp %1184 : vector<8x64xf32>
    %cst_353 = arith.constant 1.000000e+00 : f32
    %1186 = vector.broadcast %cst_353 : f32 to vector<8x64xf32>
    %1187 = arith.addf %1186, %1185 : vector<8x64xf32>
    %1188 = arith.divf %1186, %1187 : vector<8x64xf32>
    %c0_354 = arith.constant 0 : index
    %c1_355 = arith.constant 1 : index
    %c0_356 = arith.constant 0 : index
    %c0_357 = arith.constant 0 : index
    %1189 = vector.load %arg6[%c0_354, %c1_355, %c0_356, %c0_357] : memref<1x4x8x64xf32, #tpu.memory_space<vmem>>, vector<1x1x8x64xf32>
    %1190 = vector.shape_cast %1189 : vector<1x1x8x64xf32> to vector<8x64xf32>
    %1191 = vector.shape_cast %1188 : vector<8x64xf32> to vector<1x1x8x64xf32>
    tpu.vector_store %arg6[%c0_354, %c1_355, %c0_356, %c0_357], %1191 {strides = array<i32>} : memref<1x4x8x64xf32, #tpu.memory_space<vmem>>, vector<1x1x8x64xf32>,
    %1192 = vector.extract_strided_slice %1 {offsets = [2, 0, 0], sizes = [1, 1, 64], strides = [1, 1, 1]} : vector<4x8x64xf32> to vector<1x1x64xf32>
    %1193 = vector.shape_cast %1192 : vector<1x1x64xf32> to vector<1x64xf32>
    %1194 = vector.broadcast %1193 : vector<1x64xf32> to vector<8x64xf32>
    %1195 = arith.mulf %1090, %1194 : vector<8x64xf32>
    %1196 = vector.extract_strided_slice %1 {offsets = [2, 1, 0], sizes = [1, 1, 64], strides = [1, 1, 1]} : vector<4x8x64xf32> to vector<1x1x64xf32>
    %1197 = vector.shape_cast %1196 : vector<1x1x64xf32> to vector<1x64xf32>
    %1198 = vector.broadcast %1197 : vector<1x64xf32> to vector<8x64xf32>
    %1199 = arith.mulf %1091, %1198 : vector<8x64xf32>
    %1200 = arith.addf %1195, %1199 : vector<8x64xf32>
    %1201 = vector.extract_strided_slice %1 {offsets = [2, 2, 0], sizes = [1, 1, 64], strides = [1, 1, 1]} : vector<4x8x64xf32> to vector<1x1x64xf32>
    %1202 = vector.shape_cast %1201 : vector<1x1x64xf32> to vector<1x64xf32>
    %1203 = vector.broadcast %1202 : vector<1x64xf32> to vector<8x64xf32>
    %1204 = arith.mulf %1092, %1203 : vector<8x64xf32>
    %1205 = arith.addf %1200, %1204 : vector<8x64xf32>
    %1206 = vector.extract_strided_slice %1 {offsets = [2, 3, 0], sizes = [1, 1, 64], strides = [1, 1, 1]} : vector<4x8x64xf32> to vector<1x1x64xf32>
    %1207 = vector.shape_cast %1206 : vector<1x1x64xf32> to vector<1x64xf32>
    %1208 = vector.broadcast %1207 : vector<1x64xf32> to vector<8x64xf32>
    %1209 = arith.mulf %1093, %1208 : vector<8x64xf32>
    %1210 = arith.addf %1205, %1209 : vector<8x64xf32>
    %1211 = vector.extract_strided_slice %1 {offsets = [2, 4, 0], sizes = [1, 1, 64], strides = [1, 1, 1]} : vector<4x8x64xf32> to vector<1x1x64xf32>
    %1212 = vector.shape_cast %1211 : vector<1x1x64xf32> to vector<1x64xf32>
    %1213 = vector.broadcast %1212 : vector<1x64xf32> to vector<8x64xf32>
    %1214 = arith.mulf %1094, %1213 : vector<8x64xf32>
    %1215 = arith.addf %1210, %1214 : vector<8x64xf32>
    %1216 = vector.extract_strided_slice %1 {offsets = [2, 5, 0], sizes = [1, 1, 64], strides = [1, 1, 1]} : vector<4x8x64xf32> to vector<1x1x64xf32>
    %1217 = vector.shape_cast %1216 : vector<1x1x64xf32> to vector<1x64xf32>
    %1218 = vector.broadcast %1217 : vector<1x64xf32> to vector<8x64xf32>
    %1219 = arith.mulf %1095, %1218 : vector<8x64xf32>
    %1220 = arith.addf %1215, %1219 : vector<8x64xf32>
    %1221 = vector.extract_strided_slice %1 {offsets = [2, 6, 0], sizes = [1, 1, 64], strides = [1, 1, 1]} : vector<4x8x64xf32> to vector<1x1x64xf32>
    %1222 = vector.shape_cast %1221 : vector<1x1x64xf32> to vector<1x64xf32>
    %1223 = vector.broadcast %1222 : vector<1x64xf32> to vector<8x64xf32>
    %1224 = arith.mulf %1096, %1223 : vector<8x64xf32>
    %1225 = arith.addf %1220, %1224 : vector<8x64xf32>
    %1226 = vector.extract_strided_slice %1 {offsets = [2, 7, 0], sizes = [1, 1, 64], strides = [1, 1, 1]} : vector<4x8x64xf32> to vector<1x1x64xf32>
    %1227 = vector.shape_cast %1226 : vector<1x1x64xf32> to vector<1x64xf32>
    %1228 = vector.broadcast %1227 : vector<1x64xf32> to vector<8x64xf32>
    %1229 = arith.mulf %1097, %1228 : vector<8x64xf32>
    %1230 = arith.addf %1225, %1229 : vector<8x64xf32>
    %1231 = arith.negf %1230 : vector<8x64xf32>
    %1232 = math.exp %1231 : vector<8x64xf32>
    %cst_358 = arith.constant 1.000000e+00 : f32
    %1233 = vector.broadcast %cst_358 : f32 to vector<8x64xf32>
    %1234 = arith.addf %1233, %1232 : vector<8x64xf32>
    %1235 = arith.divf %1233, %1234 : vector<8x64xf32>
    %c0_359 = arith.constant 0 : index
    %c2_360 = arith.constant 2 : index
    %c0_361 = arith.constant 0 : index
    %c0_362 = arith.constant 0 : index
    %1236 = vector.load %arg6[%c0_359, %c2_360, %c0_361, %c0_362] : memref<1x4x8x64xf32, #tpu.memory_space<vmem>>, vector<1x1x8x64xf32>
    %1237 = vector.shape_cast %1236 : vector<1x1x8x64xf32> to vector<8x64xf32>
    %1238 = vector.shape_cast %1235 : vector<8x64xf32> to vector<1x1x8x64xf32>
    tpu.vector_store %arg6[%c0_359, %c2_360, %c0_361, %c0_362], %1238 {strides = array<i32>} : memref<1x4x8x64xf32, #tpu.memory_space<vmem>>, vector<1x1x8x64xf32>,
    %1239 = vector.extract_strided_slice %1 {offsets = [3, 0, 0], sizes = [1, 1, 64], strides = [1, 1, 1]} : vector<4x8x64xf32> to vector<1x1x64xf32>
    %1240 = vector.shape_cast %1239 : vector<1x1x64xf32> to vector<1x64xf32>
    %1241 = vector.broadcast %1240 : vector<1x64xf32> to vector<8x64xf32>
    %1242 = arith.mulf %1090, %1241 : vector<8x64xf32>
    %1243 = vector.extract_strided_slice %1 {offsets = [3, 1, 0], sizes = [1, 1, 64], strides = [1, 1, 1]} : vector<4x8x64xf32> to vector<1x1x64xf32>
    %1244 = vector.shape_cast %1243 : vector<1x1x64xf32> to vector<1x64xf32>
    %1245 = vector.broadcast %1244 : vector<1x64xf32> to vector<8x64xf32>
    %1246 = arith.mulf %1091, %1245 : vector<8x64xf32>
    %1247 = arith.addf %1242, %1246 : vector<8x64xf32>
    %1248 = vector.extract_strided_slice %1 {offsets = [3, 2, 0], sizes = [1, 1, 64], strides = [1, 1, 1]} : vector<4x8x64xf32> to vector<1x1x64xf32>
    %1249 = vector.shape_cast %1248 : vector<1x1x64xf32> to vector<1x64xf32>
    %1250 = vector.broadcast %1249 : vector<1x64xf32> to vector<8x64xf32>
    %1251 = arith.mulf %1092, %1250 : vector<8x64xf32>
    %1252 = arith.addf %1247, %1251 : vector<8x64xf32>
    %1253 = vector.extract_strided_slice %1 {offsets = [3, 3, 0], sizes = [1, 1, 64], strides = [1, 1, 1]} : vector<4x8x64xf32> to vector<1x1x64xf32>
    %1254 = vector.shape_cast %1253 : vector<1x1x64xf32> to vector<1x64xf32>
    %1255 = vector.broadcast %1254 : vector<1x64xf32> to vector<8x64xf32>
    %1256 = arith.mulf %1093, %1255 : vector<8x64xf32>
    %1257 = arith.addf %1252, %1256 : vector<8x64xf32>
    %1258 = vector.extract_strided_slice %1 {offsets = [3, 4, 0], sizes = [1, 1, 64], strides = [1, 1, 1]} : vector<4x8x64xf32> to vector<1x1x64xf32>
    %1259 = vector.shape_cast %1258 : vector<1x1x64xf32> to vector<1x64xf32>
    %1260 = vector.broadcast %1259 : vector<1x64xf32> to vector<8x64xf32>
    %1261 = arith.mulf %1094, %1260 : vector<8x64xf32>
    %1262 = arith.addf %1257, %1261 : vector<8x64xf32>
    %1263 = vector.extract_strided_slice %1 {offsets = [3, 5, 0], sizes = [1, 1, 64], strides = [1, 1, 1]} : vector<4x8x64xf32> to vector<1x1x64xf32>
    %1264 = vector.shape_cast %1263 : vector<1x1x64xf32> to vector<1x64xf32>
    %1265 = vector.broadcast %1264 : vector<1x64xf32> to vector<8x64xf32>
    %1266 = arith.mulf %1095, %1265 : vector<8x64xf32>
    %1267 = arith.addf %1262, %1266 : vector<8x64xf32>
    %1268 = vector.extract_strided_slice %1 {offsets = [3, 6, 0], sizes = [1, 1, 64], strides = [1, 1, 1]} : vector<4x8x64xf32> to vector<1x1x64xf32>
    %1269 = vector.shape_cast %1268 : vector<1x1x64xf32> to vector<1x64xf32>
    %1270 = vector.broadcast %1269 : vector<1x64xf32> to vector<8x64xf32>
    %1271 = arith.mulf %1096, %1270 : vector<8x64xf32>
    %1272 = arith.addf %1267, %1271 : vector<8x64xf32>
    %1273 = vector.extract_strided_slice %1 {offsets = [3, 7, 0], sizes = [1, 1, 64], strides = [1, 1, 1]} : vector<4x8x64xf32> to vector<1x1x64xf32>
    %1274 = vector.shape_cast %1273 : vector<1x1x64xf32> to vector<1x64xf32>
    %1275 = vector.broadcast %1274 : vector<1x64xf32> to vector<8x64xf32>
    %1276 = arith.mulf %1097, %1275 : vector<8x64xf32>
    %1277 = arith.addf %1272, %1276 : vector<8x64xf32>
    %1278 = arith.negf %1277 : vector<8x64xf32>
    %1279 = math.exp %1278 : vector<8x64xf32>
    %cst_363 = arith.constant 1.000000e+00 : f32
    %1280 = vector.broadcast %cst_363 : f32 to vector<8x64xf32>
    %1281 = arith.addf %1280, %1279 : vector<8x64xf32>
    %1282 = arith.divf %1280, %1281 : vector<8x64xf32>
    %c0_364 = arith.constant 0 : index
    %c3_365 = arith.constant 3 : index
    %c0_366 = arith.constant 0 : index
    %c0_367 = arith.constant 0 : index
    %1283 = vector.load %arg6[%c0_364, %c3_365, %c0_366, %c0_367] : memref<1x4x8x64xf32, #tpu.memory_space<vmem>>, vector<1x1x8x64xf32>
    %1284 = vector.shape_cast %1283 : vector<1x1x8x64xf32> to vector<8x64xf32>
    %1285 = vector.shape_cast %1282 : vector<8x64xf32> to vector<1x1x8x64xf32>
    tpu.vector_store %arg6[%c0_364, %c3_365, %c0_366, %c0_367], %1285 {strides = array<i32>} : memref<1x4x8x64xf32, #tpu.memory_space<vmem>>, vector<1x1x8x64xf32>,
    return
  }
  func.func @transform_0(%arg0: i32) -> (i32, i32, i32, i32) {
    %c0_i32 = arith.constant 0 : i32
    %c0_i32_0 = arith.constant 0 : i32
    %c0_i32_1 = arith.constant 0 : i32
    %c0_i32_2 = arith.constant 0 : i32
    return %arg0, %c0_i32, %c0_i32_0, %c0_i32_1 : i32, i32, i32, i32
  }
  func.func @transform_1(%arg0: i32) -> (i32, i32, i32) {
    %c0_i32 = arith.constant 0 : i32
    %c0_i32_0 = arith.constant 0 : i32
    %c0_i32_1 = arith.constant 0 : i32
    %c0_i32_2 = arith.constant 0 : i32
    return %c0_i32, %c0_i32_0, %c0_i32_1 : i32, i32, i32
  }
  func.func @transform_2(%arg0: i32) -> (i32, i32) {
    %c0_i32 = arith.constant 0 : i32
    %c0_i32_0 = arith.constant 0 : i32
    %c0_i32_1 = arith.constant 0 : i32
    return %c0_i32, %c0_i32_0 : i32, i32
  }
  func.func @transform_3(%arg0: i32) -> i32 {
    %c0_i32 = arith.constant 0 : i32
    %c0_i32_0 = arith.constant 0 : i32
    return %c0_i32 : i32
  }
  func.func @transform_4(%arg0: i32) -> i32 {
    %c0_i32 = arith.constant 0 : i32
    %c0_i32_0 = arith.constant 0 : i32
    return %c0_i32 : i32
  }
  func.func @transform_5(%arg0: i32) -> (i32, i32, i32, i32) {
    %c0_i32 = arith.constant 0 : i32
    %c0_i32_0 = arith.constant 0 : i32
    %c0_i32_1 = arith.constant 0 : i32
    %c0_i32_2 = arith.constant 0 : i32
    return %arg0, %c0_i32, %c0_i32_0, %c0_i32_1 : i32, i32, i32, i32
  }
}

</mosaic_0001>

<llo_original>
// kernel: tpu_custom_call.1
$region0: #{tpu_custom_call.1}
  #allocation0 [shape = 'u32[]', space=smem, size = 0x4, offset = 0x4, fixed_abs, tag = 'smem constant byte address 0x4 - core index']
  #allocation1 [shape = 'u32[72,128]{1,0:T(1,128)}', space=vmem, size = 0x9000, scoped, tag = 'internal scratch']
  %s0 = inlined_call_operand.hbm [shape: f32[1,4,8,64], index: 0, kind: input, shape index: {}]
  %s1 = inlined_call_operand.hbm [shape: f32[8,8,64], index: 1, kind: input, shape index: {}]
  %s2 = inlined_call_operand.hbm [shape: f32[8,8], index: 2, kind: input, shape index: {}]
  %s3 = inlined_call_operand.vmem [shape: f32[8], index: 3, kind: input, shape index: {}]
  %s4 = inlined_call_operand.vmem [shape: f32[8], index: 4, kind: input, shape index: {}]
  %s5 = inlined_call_operand.hbm [shape: f32[1,4,8,64], index: 5, kind: output, shape index: {}]
  %s6 = sld [smem:[#allocation0]]
  $region50: #{tpu_custom_call.1} parent=0
    _
  %s8 = ssub.s32 1, %s6
  %s9 = scalar_select 0, %s8, %s6
  $region1: #{tpu_custom_call.1} parent=0
    #allocation2 [shape = 'u8[16384]{0}', space=vmem, size = 0x4000, scoped, tag = 'input window, operand 0, single buffered']
    #allocation3 [shape = 's32[1]{0}', space=sflag, size = 0x4, scoped, tag = 'scoped memory for tpu_custom_call.1']
    #allocation4 [shape = 's32[1]{0}', space=sflag, size = 0x4, scoped, tag = 'scoped memory for tpu_custom_call.1']
    #allocation5 [shape = 's32[1]{0}', space=sflag, size = 0x4, scoped, tag = 'scoped memory for tpu_custom_call.1']
    #allocation6 [shape = 's32[1]{0}', space=sflag, size = 0x4, scoped, tag = 'scoped memory for tpu_custom_call.1']
    #allocation7 [shape = 'u8[32768]{0}', space=vmem, size = 0x8000, scoped, tag = 'input window, operand 1, single buffered']
    #allocation8 [shape = 's32[1]{0}', space=sflag, size = 0x4, scoped, tag = 'scoped memory for tpu_custom_call.1']
    #allocation9 [shape = 'u8[4096]{0}', space=smem, size = 0x1000, scoped, tag = 'input window, operand 2, single buffered']
    #allocation10 [shape = 'u8[512]{0}', space=smem, size = 0x200, scoped, tag = 'input window, operand 3, single buffered']
    #allocation11 [shape = 'u8[512]{0}', space=smem, size = 0x200, scoped, tag = 'input window, operand 4, single buffered']
    #allocation12 [shape = 's32[1]{0}', space=sflag, size = 0x4, scoped, tag = 'scoped memory for tpu_custom_call.1']
    #allocation13 [shape = 'u8[16384]{0}', space=vmem, size = 0x4000, scoped, tag = 'output window, operand 0, single buffered']
    %10 = vsyncpa [#allocation3], 0
    %11 = vsyncpa [#allocation8], 0
    %12 = vsyncpa [#allocation5], 0
    %13 = vsyncpa [#allocation6], 0
    %14 = vsyncpa [#allocation12], 0
    %15 = vsyncpa [#allocation4], 0
    // Predicated region
    $region2: #{tpu_custom_call.1} parent=1 // pred_check
      _
    $region3: #{tpu_custom_call.1} parent=1 // pred_check_branch
      %17 = sbr.rel (0) target = $region5
    $region4: #{tpu_custom_call.1} parent=1 // pred_region
      %19 = vsyncadd [#allocation3], 0
      %s20 = sshll.u32 %s0, 4
      %s21 = int_to_ptr.hbm [resolvable:$true] %s20
      %s22 = sshll.u32 [#allocation2], 4
      %s23 = int_to_ptr.vmem [resolvable:$true] %s22
      %28 = dma.hbm_to_vmem [thread:$0]  %s21, 512, %s23, [#allocation3], 128, 128, 8
    $region5: #{tpu_custom_call.1} parent=1 // pred_fallthru
      _
    // Predicated region
    $region6: #{tpu_custom_call.1} parent=1 // pred_check
      _
    $region7: #{tpu_custom_call.1} parent=1 // pred_check_branch
      %30 = sbr.rel (0) target = $region9
    $region8: #{tpu_custom_call.1} parent=1 // pred_region
      %32 = vsyncadd [#allocation8], 0
      %s33 = sshll.u32 %s1, 4
      %s34 = int_to_ptr.hbm [resolvable:$true] %s33
      %s35 = sshll.u32 [#allocation7], 4
      %s36 = int_to_ptr.vmem [resolvable:$true] %s35
      %41 = dma.hbm_to_vmem [thread:$0]  %s34, 1024, %s36, [#allocation8], 128, 128, 8
    $region9: #{tpu_custom_call.1} parent=1 // pred_fallthru
      _
    // Predicated region
    $region10: #{tpu_custom_call.1} parent=1 // pred_check
      _
    $region11: #{tpu_custom_call.1} parent=1 // pred_check_branch
      %43 = sbr.rel (0) target = $region13
    $region12: #{tpu_custom_call.1} parent=1 // pred_region
      %45 = vsyncadd [#allocation5], 0
      %s47 = sshll.u32 %s2, 4
      %s48 = int_to_ptr.hbm [resolvable:$true] %s47
      %50 = dma.hbm_to_smem %s48, 128, [#allocation9], [#allocation5]
    $region13: #{tpu_custom_call.1} parent=1 // pred_fallthru
      _
    // Predicated region
    $region14: #{tpu_custom_call.1} parent=1 // pred_check
      _
    $region15: #{tpu_custom_call.1} parent=1 // pred_check_branch
      %52 = sbr.rel (0) target = $region17
    $region16: #{tpu_custom_call.1} parent=1 // pred_region
      %54 = vsyncadd [#allocation6], 0
      %s56 = sshll.u32 %s3, 4
      %s57 = int_to_ptr.vmem [resolvable:$true] %s56
      %59 = dma.vmem_to_smem %s57, 16, [#allocation10], [#allocation6]
    $region17: #{tpu_custom_call.1} parent=1 // pred_fallthru
      _
    // Predicated region
    $region18: #{tpu_custom_call.1} parent=1 // pred_check
      _
    $region19: #{tpu_custom_call.1} parent=1 // pred_check_branch
      %61 = sbr.rel (0) target = $region21
    $region20: #{tpu_custom_call.1} parent=1 // pred_region
      %63 = vsyncadd [#allocation12], 0
      %s65 = sshll.u32 %s4, 4
      %s66 = int_to_ptr.vmem [resolvable:$true] %s65
      %68 = dma.vmem_to_smem %s66, 16, [#allocation11], [#allocation12]
    $region21: #{tpu_custom_call.1} parent=1 // pred_fallthru
      _
    // Predicated region
    $region22: #{tpu_custom_call.1} parent=1 // pred_check
      _
    $region23: #{tpu_custom_call.1} parent=1 // pred_check_branch
      %70 = sbr.rel (0) target = $region25
    $region24: #{tpu_custom_call.1} parent=1 // pred_region
      %72 = dma.done [#allocation3], 512
    $region25: #{tpu_custom_call.1} parent=1 // pred_fallthru
      _
    // Predicated region
    $region26: #{tpu_custom_call.1} parent=1 // pred_check
      _
    $region27: #{tpu_custom_call.1} parent=1 // pred_check_branch
      %74 = sbr.rel (0) target = $region29
    $region28: #{tpu_custom_call.1} parent=1 // pred_region
      %76 = dma.done [#allocation8], 1024
    $region29: #{tpu_custom_call.1} parent=1 // pred_fallthru
      _
    // Predicated region
    $region30: #{tpu_custom_call.1} parent=1 // pred_check
      _
    $region31: #{tpu_custom_call.1} parent=1 // pred_check_branch
      %78 = sbr.rel (0) target = $region33
    $region32: #{tpu_custom_call.1} parent=1 // pred_region
      %80 = dma.done [#allocation5], 128
    $region33: #{tpu_custom_call.1} parent=1 // pred_fallthru
      _
    // Predicated region
    $region34: #{tpu_custom_call.1} parent=1 // pred_check
      _
    $region35: #{tpu_custom_call.1} parent=1 // pred_check_branch
      %82 = sbr.rel (0) target = $region37
    $region36: #{tpu_custom_call.1} parent=1 // pred_region
      %84 = dma.done [#allocation6], 16
    $region37: #{tpu_custom_call.1} parent=1 // pred_fallthru
      _
    // Predicated region
    $region38: #{tpu_custom_call.1} parent=1 // pred_check
      _
    $region39: #{tpu_custom_call.1} parent=1 // pred_check_branch
      %86 = sbr.rel (0) target = $region41
    $region40: #{tpu_custom_call.1} parent=1 // pred_region
      %88 = dma.done [#allocation12], 16
    $region41: #{tpu_custom_call.1} parent=1 // pred_fallthru
      _
    %89 = sfence
    %v90 = vld [vmem:[#allocation2] sm:$0xff]
    %v91 = vld [vmem:[#allocation2 + $0x8] sm:$0xff]
    %v92 = vld [vmem:[#allocation2 + $0x10] sm:$0xff]
    %v93 = vld [vmem:[#allocation2 + $0x18] sm:$0xff]
    %s94 = sld [smem:[#allocation9]]
    %v95 = vstv %s94
    %v96 = vmul.f32 %v90, %v95
    %s97 = sld [smem:[#allocation10]]
    %v98 = vstv %s97
    %v99 = vadd.f32 %v96, %v98
    %s100 = sld [smem:[#allocation9 + $0x4]]
    %v101 = vstv %s100
    %v102 = vmul.f32 %v90, %v101
    %s103 = sld [smem:[#allocation9 + $0x1]]
    %v104 = vstv %s103
    %v105 = vmul.f32 %v91, %v104
    %v106 = vadd.f32 %v99, %v105
    %s107 = sld [smem:[#allocation9 + $0x5]]
    %v108 = vstv %s107
    %v109 = vmul.f32 %v91, %v108
    %v110 = vadd.f32 %v102, %v109
    %s111 = sld [smem:[#allocation9 + $0x2]]
    %v112 = vstv %s111
    %v113 = vmul.f32 %v92, %v112
    %v114 = vadd.f32 %v106, %v113
    %s115 = sld [smem:[#allocation9 + $0x6]]
    %v116 = vstv %s115
    %v117 = vmul.f32 %v92, %v116
    %v118 = vadd.f32 %v110, %v117
    %s119 = sld [smem:[#allocation9 + $0x3]]
    %v120 = vstv %s119
    %v121 = vmul.f32 %v93, %v120
    %v122 = vadd.f32 %v114, %v121
    %s123 = sld [smem:[#allocation9 + $0x7]]
    %v124 = vstv %s123
    %v125 = vmul.f32 %v93, %v124
    %v126 = vadd.f32 %v118, %v125
    %s127 = sld [smem:[#allocation9 + $0x80]]
    %v128 = vstv %s127
    %v129 = vmul.f32 %v90, %v128
    %s130 = sld [smem:[#allocation10 + $0x1]]
    %v131 = vstv %s130
    %v132 = vadd.f32 %v129, %v131
    %s133 = sld [smem:[#allocation9 + $0x84]]
    %v134 = vstv %s133
    %v135 = vmul.f32 %v90, %v134
    %s136 = sld [smem:[#allocation9 + $0x81]]
    %v137 = vstv %s136
    %v138 = vmul.f32 %v91, %v137
    %v139 = vadd.f32 %v132, %v138
    %s140 = sld [smem:[#allocation9 + $0x85]]
    %v141 = vstv %s140
    %v142 = vmul.f32 %v91, %v141
    %v143 = vadd.f32 %v135, %v142
    %s144 = sld [smem:[#allocation9 + $0x82]]
    %v145 = vstv %s144
    %v146 = vmul.f32 %v92, %v145
    %v147 = vadd.f32 %v139, %v146
    %s148 = sld [smem:[#allocation9 + $0x86]]
    %v149 = vstv %s148
    %v150 = vmul.f32 %v92, %v149
    %v151 = vadd.f32 %v143, %v150
    %s152 = sld [smem:[#allocation9 + $0x83]]
    %v153 = vstv %s152
    %v154 = vmul.f32 %v93, %v153
    %v155 = vadd.f32 %v147, %v154
    %s156 = sld [smem:[#allocation9 + $0x87]]
    %v157 = vstv %s156
    %v158 = vmul.f32 %v93, %v157
    %v159 = vadd.f32 %v151, %v158
    %s160 = sld [smem:[#allocation9 + $0x100]]
    %v161 = vstv %s160
    %v162 = vmul.f32 %v90, %v161
    %s163 = sld [smem:[#allocation10 + $0x2]]
    %v164 = vstv %s163
    %v165 = vadd.f32 %v162, %v164
    %s166 = sld [smem:[#allocation9 + $0x104]]
    %v167 = vstv %s166
    %v168 = vmul.f32 %v90, %v167
    %s169 = sld [smem:[#allocation9 + $0x101]]
    %v170 = vstv %s169
    %v171 = vmul.f32 %v91, %v170
    %v172 = vadd.f32 %v165, %v171
    %s173 = sld [smem:[#allocation9 + $0x105]]
    %v174 = vstv %s173
    %v175 = vmul.f32 %v91, %v174
    %v176 = vadd.f32 %v168, %v175
    %s177 = sld [smem:[#allocation9 + $0x102]]
    %v178 = vstv %s177
    %v179 = vmul.f32 %v92, %v178
    %v180 = vadd.f32 %v172, %v179
    %s181 = sld [smem:[#allocation9 + $0x106]]
    %v182 = vstv %s181
    %v183 = vmul.f32 %v92, %v182
    %v184 = vadd.f32 %v176, %v183
    %s185 = sld [smem:[#allocation9 + $0x103]]
    %v186 = vstv %s185
    %v187 = vmul.f32 %v93, %v186
    %v188 = vadd.f32 %v180, %v187
    %s189 = sld [smem:[#allocation9 + $0x107]]
    %v190 = vstv %s189
    %v191 = vmul.f32 %v93, %v190
    %v192 = vadd.f32 %v184, %v191
    %s193 = sld [smem:[#allocation9 + $0x180]]
    %v194 = vstv %s193
    %v195 = vmul.f32 %v90, %v194
    %s196 = sld [smem:[#allocation10 + $0x3]]
    %v197 = vstv %s196
    %v198 = vadd.f32 %v195, %v197
    %s199 = sld [smem:[#allocation9 + $0x184]]
    %v200 = vstv %s199
    %v201 = vmul.f32 %v90, %v200
    %s202 = sld [smem:[#allocation9 + $0x181]]
    %v203 = vstv %s202
    %v204 = vmul.f32 %v91, %v203
    %v205 = vadd.f32 %v198, %v204
    %s206 = sld [smem:[#allocation9 + $0x185]]
    %v207 = vstv %s206
    %v208 = vmul.f32 %v91, %v207
    %v209 = vadd.f32 %v201, %v208
    %s210 = sld [smem:[#allocation9 + $0x182]]
    %v211 = vstv %s210
    %v212 = vmul.f32 %v92, %v211
    %v213 = vadd.f32 %v205, %v212
    %s214 = sld [smem:[#allocation9 + $0x186]]
    %v215 = vstv %s214
    %v216 = vmul.f32 %v92, %v215
    %v217 = vadd.f32 %v209, %v216
    %s218 = sld [smem:[#allocation9 + $0x183]]
    %v219 = vstv %s218
    %v220 = vmul.f32 %v93, %v219
    %v221 = vadd.f32 %v213, %v220
    %s222 = sld [smem:[#allocation9 + $0x187]]
    %v223 = vstv %s222
    %v224 = vmul.f32 %v93, %v223
    %v225 = vadd.f32 %v217, %v224
    %s226 = sld [smem:[#allocation9 + $0x200]]
    %v227 = vstv %s226
    %v228 = vmul.f32 %v90, %v227
    %s229 = sld [smem:[#allocation10 + $0x4]]
    %v230 = vstv %s229
    %v231 = vadd.f32 %v228, %v230
    %s232 = sld [smem:[#allocation9 + $0x204]]
    %v233 = vstv %s232
    %v234 = vmul.f32 %v90, %v233
    %s235 = sld [smem:[#allocation9 + $0x201]]
    %v236 = vstv %s235
    %v237 = vmul.f32 %v91, %v236
    %v238 = vadd.f32 %v231, %v237
    %s239 = sld [smem:[#allocation9 + $0x205]]
    %v240 = vstv %s239
    %v241 = vmul.f32 %v91, %v240
    %v242 = vadd.f32 %v234, %v241
    %s243 = sld [smem:[#allocation9 + $0x202]]
    %v244 = vstv %s243
    %v245 = vmul.f32 %v92, %v244
    %v246 = vadd.f32 %v238, %v245
    %s247 = sld [smem:[#allocation9 + $0x206]]
    %v248 = vstv %s247
    %v249 = vmul.f32 %v92, %v248
    %v250 = vadd.f32 %v242, %v249
    %s251 = sld [smem:[#allocation9 + $0x203]]
    %v252 = vstv %s251
    %v253 = vmul.f32 %v93, %v252
    %v254 = vadd.f32 %v246, %v253
    %s255 = sld [smem:[#allocation9 + $0x207]]
    %v256 = vstv %s255
    %v257 = vmul.f32 %v93, %v256
    %v258 = vadd.f32 %v250, %v257
    %s259 = sld [smem:[#allocation9 + $0x280]]
    %v260 = vstv %s259
    %v261 = vmul.f32 %v90, %v260
    %s262 = sld [smem:[#allocation10 + $0x5]]
    %v263 = vstv %s262
    %v264 = vadd.f32 %v261, %v263
    %s265 = sld [smem:[#allocation9 + $0x284]]
    %v266 = vstv %s265
    %v267 = vmul.f32 %v90, %v266
    %s268 = sld [smem:[#allocation9 + $0x281]]
    %v269 = vstv %s268
    %v270 = vmul.f32 %v91, %v269
    %v271 = vadd.f32 %v264, %v270
    %s272 = sld [smem:[#allocation9 + $0x285]]
    %v273 = vstv %s272
    %v274 = vmul.f32 %v91, %v273
    %v275 = vadd.f32 %v267, %v274
    %s276 = sld [smem:[#allocation9 + $0x282]]
    %v277 = vstv %s276
    %v278 = vmul.f32 %v92, %v277
    %v279 = vadd.f32 %v271, %v278
    %s280 = sld [smem:[#allocation9 + $0x286]]
    %v281 = vstv %s280
    %v282 = vmul.f32 %v92, %v281
    %v283 = vadd.f32 %v275, %v282
    %s284 = sld [smem:[#allocation9 + $0x283]]
    %v285 = vstv %s284
    %v286 = vmul.f32 %v93, %v285
    %v287 = vadd.f32 %v279, %v286
    %s288 = sld [smem:[#allocation9 + $0x287]]
    %v289 = vstv %s288
    %v290 = vmul.f32 %v93, %v289
    %v291 = vadd.f32 %v283, %v290
    %s292 = sld [smem:[#allocation9 + $0x300]]
    %v293 = vstv %s292
    %v294 = vmul.f32 %v90, %v293
    %s295 = sld [smem:[#allocation10 + $0x6]]
    %v296 = vstv %s295
    %v297 = vadd.f32 %v294, %v296
    %s298 = sld [smem:[#allocation9 + $0x304]]
    %v299 = vstv %s298
    %v300 = vmul.f32 %v90, %v299
    %s301 = sld [smem:[#allocation9 + $0x301]]
    %v302 = vstv %s301
    %v303 = vmul.f32 %v91, %v302
    %v304 = vadd.f32 %v297, %v303
    %s305 = sld [smem:[#allocation9 + $0x305]]
    %v306 = vstv %s305
    %v307 = vmul.f32 %v91, %v306
    %v308 = vadd.f32 %v300, %v307
    %s309 = sld [smem:[#allocation9 + $0x302]]
    %v310 = vstv %s309
    %v311 = vmul.f32 %v92, %v310
    %v312 = vadd.f32 %v304, %v311
    %s313 = sld [smem:[#allocation9 + $0x306]]
    %v314 = vstv %s313
    %v315 = vmul.f32 %v92, %v314
    %v316 = vadd.f32 %v308, %v315
    %s317 = sld [smem:[#allocation9 + $0x303]]
    %v318 = vstv %s317
    %v319 = vmul.f32 %v93, %v318
    %v320 = vadd.f32 %v312, %v319
    %s321 = sld [smem:[#allocation9 + $0x307]]
    %v322 = vstv %s321
    %v323 = vmul.f32 %v93, %v322
    %v324 = vadd.f32 %v316, %v323
    %s325 = sld [smem:[#allocation9 + $0x380]]
    %v326 = vstv %s325
    %v327 = vmul.f32 %v90, %v326
    %s328 = sld [smem:[#allocation10 + $0x7]]
    %v329 = vstv %s328
    %v330 = vadd.f32 %v327, %v329
    %s331 = sld [smem:[#allocation9 + $0x384]]
    %v332 = vstv %s331
    %v333 = vmul.f32 %v90, %v332
    %s334 = sld [smem:[#allocation9 + $0x381]]
    %v335 = vstv %s334
    %v336 = vmul.f32 %v91, %v335
    %v337 = vadd.f32 %v330, %v336
    %s338 = sld [smem:[#allocation9 + $0x385]]
    %v339 = vstv %s338
    %v340 = vmul.f32 %v91, %v339
    %v341 = vadd.f32 %v333, %v340
    %s342 = sld [smem:[#allocation9 + $0x382]]
    %v343 = vstv %s342
    %v344 = vmul.f32 %v92, %v343
    %v345 = vadd.f32 %v337, %v344
    %s346 = sld [smem:[#allocation9 + $0x386]]
    %v347 = vstv %s346
    %v348 = vmul.f32 %v92, %v347
    %v349 = vadd.f32 %v341, %v348
    %s350 = sld [smem:[#allocation9 + $0x383]]
    %v351 = vstv %s350
    %v352 = vmul.f32 %v93, %v351
    %v353 = vadd.f32 %v345, %v352
    %s354 = sld [smem:[#allocation9 + $0x387]]
    %v355 = vstv %s354
    %v356 = vmul.f32 %v93, %v355
    %v357 = vadd.f32 %v349, %v356
    %v358 = vld [vmem:[#allocation7] sm:$0xff]
    %v359 = vperm.slane %v126, 0
    %v360 = vadd.f32 %v122, %v359
    %vm361 = vcmp.gt.f32.partialorder %v360, 0.0
    %v362 = vmul.f32 %v360, 0.2
    %v363 = vsel %vm361, %v360, %v362
    %s364 = sld [smem:[#allocation11]]
    %v365 = vstv %s364
    %v366 = vmul.f32 %v365, %v363
    %v367 = vadd.f32 %v358, %v366
    %v368 = vperm.slane %v159, 0
    %v369 = vadd.f32 %v155, %v368
    %vm370 = vcmp.gt.f32.partialorder %v369, 0.0
    %v371 = vmul.f32 %v369, 0.2
    %v372 = vsel %vm370, %v369, %v371
    %s373 = sld [smem:[#allocation11 + $0x1]]
    %v374 = vstv %s373
    %v375 = vmul.f32 %v374, %v372
    %v376 = vadd.f32 %v367, %v375
    %v377 = vperm.slane %v192, 0
    %v378 = vadd.f32 %v188, %v377
    %vm379 = vcmp.gt.f32.partialorder %v378, 0.0
    %v380 = vmul.f32 %v378, 0.2
    %v381 = vsel %vm379, %v378, %v380
    %s382 = sld [smem:[#allocation11 + $0x2]]
    %v383 = vstv %s382
    %v384 = vmul.f32 %v383, %v381
    %v385 = vadd.f32 %v376, %v384
    %v386 = vperm.slane %v225, 0
    %v387 = vadd.f32 %v221, %v386
    %vm388 = vcmp.gt.f32.partialorder %v387, 0.0
    %v389 = vmul.f32 %v387, 0.2
    %v390 = vsel %vm388, %v387, %v389
    %s391 = sld [smem:[#allocation11 + $0x3]]
    %v392 = vstv %s391
    %v393 = vmul.f32 %v392, %v390
    %v394 = vadd.f32 %v385, %v393
    %v395 = vperm.slane %v258, 0
    %v396 = vadd.f32 %v254, %v395
    %vm397 = vcmp.gt.f32.partialorder %v396, 0.0
    %v398 = vmul.f32 %v396, 0.2
    %v399 = vsel %vm397, %v396, %v398
    %s400 = sld [smem:[#allocation11 + $0x4]]
    %v401 = vstv %s400
    %v402 = vmul.f32 %v401, %v399
    %v403 = vadd.f32 %v394, %v402
    %v404 = vperm.slane %v291, 0
    %v405 = vadd.f32 %v287, %v404
    %vm406 = vcmp.gt.f32.partialorder %v405, 0.0
    %v407 = vmul.f32 %v405, 0.2
    %v408 = vsel %vm406, %v405, %v407
    %s409 = sld [smem:[#allocation11 + $0x5]]
    %v410 = vstv %s409
    %v411 = vmul.f32 %v410, %v408
    %v412 = vadd.f32 %v403, %v411
    %v413 = vperm.slane %v324, 0
    %v414 = vadd.f32 %v320, %v413
    %vm415 = vcmp.gt.f32.partialorder %v414, 0.0
    %v416 = vmul.f32 %v414, 0.2
    %v417 = vsel %vm415, %v414, %v416
    %s418 = sld [smem:[#allocation11 + $0x6]]
    %v419 = vstv %s418
    %v420 = vmul.f32 %v419, %v417
    %v421 = vadd.f32 %v412, %v420
    %v422 = vperm.slane %v357, 0
    %v423 = vadd.f32 %v353, %v422
    %vm424 = vcmp.gt.f32.partialorder %v423, 0.0
    %v425 = vmul.f32 %v423, 0.2
    %v426 = vsel %vm424, %v423, %v425
    %s427 = sld [smem:[#allocation11 + $0x7]]
    %v428 = vstv %s427
    %v429 = vmul.f32 %v428, %v426
    %v430 = vadd.f32 %v421, %v429
    %s431 = scalar_lea.vmem [#allocation7], 8
    %v432 = vld [vmem:[%s431] sm:$0xff]
    %v433 = vperm.slane %v126, 1
    %v434 = vadd.f32 %v122, %v433
    %vm435 = vcmp.gt.f32.partialorder %v434, 0.0
    %v436 = vmul.f32 %v434, 0.2
    %v437 = vsel %vm435, %v434, %v436
    %v438 = vmul.f32 %v365, %v437
    %v439 = vadd.f32 %v432, %v438
    %v440 = vperm.slane %v159, 1
    %v441 = vadd.f32 %v155, %v440
    %vm442 = vcmp.gt.f32.partialorder %v441, 0.0
    %v443 = vmul.f32 %v441, 0.2
    %v444 = vsel %vm442, %v441, %v443
    %v445 = vmul.f32 %v374, %v444
    %v446 = vadd.f32 %v439, %v445
    %v447 = vperm.slane %v192, 1
    %v448 = vadd.f32 %v188, %v447
    %vm449 = vcmp.gt.f32.partialorder %v448, 0.0
    %v450 = vmul.f32 %v448, 0.2
    %v451 = vsel %vm449, %v448, %v450
    %v452 = vmul.f32 %v383, %v451
    %v453 = vadd.f32 %v446, %v452
    %v454 = vperm.slane %v225, 1
    %v455 = vadd.f32 %v221, %v454
    %vm456 = vcmp.gt.f32.partialorder %v455, 0.0
    %v457 = vmul.f32 %v455, 0.2
    %v458 = vsel %vm456, %v455, %v457
    %v459 = vmul.f32 %v392, %v458
    %v460 = vadd.f32 %v453, %v459
    %v461 = vperm.slane %v258, 1
    %v462 = vadd.f32 %v254, %v461
    %vm463 = vcmp.gt.f32.partialorder %v462, 0.0
    %v464 = vmul.f32 %v462, 0.2
    %v465 = vsel %vm463, %v462, %v464
    %v466 = vmul.f32 %v401, %v465
    %v467 = vadd.f32 %v460, %v466
    %v468 = vperm.slane %v291, 1
    %v469 = vadd.f32 %v287, %v468
    %vm470 = vcmp.gt.f32.partialorder %v469, 0.0
    %v471 = vmul.f32 %v469, 0.2
    %v472 = vsel %vm470, %v469, %v471
    %v473 = vmul.f32 %v410, %v472
    %v474 = vadd.f32 %v467, %v473
    %v475 = vperm.slane %v324, 1
    %v476 = vadd.f32 %v320, %v475
    %vm477 = vcmp.gt.f32.partialorder %v476, 0.0
    %v478 = vmul.f32 %v476, 0.2
    %v479 = vsel %vm477, %v476, %v478
    %v480 = vmul.f32 %v419, %v479
    %v481 = vadd.f32 %v474, %v480
    %v482 = vperm.slane %v357, 1
    %v483 = vadd.f32 %v353, %v482
    %vm484 = vcmp.gt.f32.partialorder %v483, 0.0
    %v485 = vmul.f32 %v483, 0.2
    %v486 = vsel %vm484, %v483, %v485
    %v487 = vmul.f32 %v428, %v486
    %v488 = vadd.f32 %v481, %v487
    %s489 = scalar_lea.vmem [#allocation7], 16
    %v490 = vld [vmem:[%s489] sm:$0xff]
    %v491 = vperm.slane %v126, 2
    %v492 = vadd.f32 %v122, %v491
    %vm493 = vcmp.gt.f32.partialorder %v492, 0.0
    %v494 = vmul.f32 %v492, 0.2
    %v495 = vsel %vm493, %v492, %v494
    %v496 = vmul.f32 %v365, %v495
    %v497 = vadd.f32 %v490, %v496
    %v498 = vperm.slane %v159, 2
    %v499 = vadd.f32 %v155, %v498
    %vm500 = vcmp.gt.f32.partialorder %v499, 0.0
    %v501 = vmul.f32 %v499, 0.2
    %v502 = vsel %vm500, %v499, %v501
    %v503 = vmul.f32 %v374, %v502
    %v504 = vadd.f32 %v497, %v503
    %v505 = vperm.slane %v192, 2
    %v506 = vadd.f32 %v188, %v505
    %vm507 = vcmp.gt.f32.partialorder %v506, 0.0
    %v508 = vmul.f32 %v506, 0.2
    %v509 = vsel %vm507, %v506, %v508
    %v510 = vmul.f32 %v383, %v509
    %v511 = vadd.f32 %v504, %v510
    %v512 = vperm.slane %v225, 2
    %v513 = vadd.f32 %v221, %v512
    %vm514 = vcmp.gt.f32.partialorder %v513, 0.0
    %v515 = vmul.f32 %v513, 0.2
    %v516 = vsel %vm514, %v513, %v515
    %v517 = vmul.f32 %v392, %v516
    %v518 = vadd.f32 %v511, %v517
    %v519 = vperm.slane %v258, 2
    %v520 = vadd.f32 %v254, %v519
    %vm521 = vcmp.gt.f32.partialorder %v520, 0.0
    %v522 = vmul.f32 %v520, 0.2
    %v523 = vsel %vm521, %v520, %v522
    %v524 = vmul.f32 %v401, %v523
    %v525 = vadd.f32 %v518, %v524
    %v526 = vperm.slane %v291, 2
    %v527 = vadd.f32 %v287, %v526
    %vm528 = vcmp.gt.f32.partialorder %v527, 0.0
    %v529 = vmul.f32 %v527, 0.2
    %v530 = vsel %vm528, %v527, %v529
    %v531 = vmul.f32 %v410, %v530
    %v532 = vadd.f32 %v525, %v531
    %v533 = vperm.slane %v324, 2
    %v534 = vadd.f32 %v320, %v533
    %vm535 = vcmp.gt.f32.partialorder %v534, 0.0
    %v536 = vmul.f32 %v534, 0.2
    %v537 = vsel %vm535, %v534, %v536
    %v538 = vmul.f32 %v419, %v537
    %v539 = vadd.f32 %v532, %v538
    %v540 = vperm.slane %v357, 2
    %v541 = vadd.f32 %v353, %v540
    %vm542 = vcmp.gt.f32.partialorder %v541, 0.0
    %v543 = vmul.f32 %v541, 0.2
    %v544 = vsel %vm542, %v541, %v543
    %v545 = vmul.f32 %v428, %v544
    %v546 = vadd.f32 %v539, %v545
    %s547 = scalar_lea.vmem [#allocation7], 24
    %v548 = vld [vmem:[%s547] sm:$0xff]
    %v549 = vperm.slane %v126, 3
    %v550 = vadd.f32 %v122, %v549
    %vm551 = vcmp.gt.f32.partialorder %v550, 0.0
    %v552 = vmul.f32 %v550, 0.2
    %v553 = vsel %vm551, %v550, %v552
    %v554 = vmul.f32 %v365, %v553
    %v555 = vadd.f32 %v548, %v554
    %v556 = vperm.slane %v159, 3
    %v557 = vadd.f32 %v155, %v556
    %vm558 = vcmp.gt.f32.partialorder %v557, 0.0
    %v559 = vmul.f32 %v557, 0.2
    %v560 = vsel %vm558, %v557, %v559
    %v561 = vmul.f32 %v374, %v560
    %v562 = vadd.f32 %v555, %v561
    %v563 = vperm.slane %v192, 3
    %v564 = vadd.f32 %v188, %v563
    %vm565 = vcmp.gt.f32.partialorder %v564, 0.0
    %v566 = vmul.f32 %v564, 0.2
    %v567 = vsel %vm565, %v564, %v566
    %v568 = vmul.f32 %v383, %v567
    %v569 = vadd.f32 %v562, %v568
    %v570 = vperm.slane %v225, 3
    %v571 = vadd.f32 %v221, %v570
    %vm572 = vcmp.gt.f32.partialorder %v571, 0.0
    %v573 = vmul.f32 %v571, 0.2
    %v574 = vsel %vm572, %v571, %v573
    %v575 = vmul.f32 %v392, %v574
    %v576 = vadd.f32 %v569, %v575
    %v577 = vperm.slane %v258, 3
    %v578 = vadd.f32 %v254, %v577
    %vm579 = vcmp.gt.f32.partialorder %v578, 0.0
    %v580 = vmul.f32 %v578, 0.2
    %v581 = vsel %vm579, %v578, %v580
    %v582 = vmul.f32 %v401, %v581
    %v583 = vadd.f32 %v576, %v582
    %v584 = vperm.slane %v291, 3
    %v585 = vadd.f32 %v287, %v584
    %vm586 = vcmp.gt.f32.partialorder %v585, 0.0
    %v587 = vmul.f32 %v585, 0.2
    %v588 = vsel %vm586, %v585, %v587
    %v589 = vmul.f32 %v410, %v588
    %v590 = vadd.f32 %v583, %v589
    %v591 = vperm.slane %v324, 3
    %v592 = vadd.f32 %v320, %v591
    %vm593 = vcmp.gt.f32.partialorder %v592, 0.0
    %v594 = vmul.f32 %v592, 0.2
    %v595 = vsel %vm593, %v592, %v594
    %v596 = vmul.f32 %v419, %v595
    %v597 = vadd.f32 %v590, %v596
    %v598 = vperm.slane %v357, 3
    %v599 = vadd.f32 %v353, %v598
    %vm600 = vcmp.gt.f32.partialorder %v599, 0.0
    %v601 = vmul.f32 %v599, 0.2
    %v602 = vsel %vm600, %v599, %v601
    %v603 = vmul.f32 %v428, %v602
    %v604 = vadd.f32 %v597, %v603
    %s605 = scalar_lea.vmem [#allocation7], 32
    %v606 = vld [vmem:[%s605] sm:$0xff]
    %v607 = vperm.slane %v126, 4
    %v608 = vadd.f32 %v122, %v607
    %vm609 = vcmp.gt.f32.partialorder %v608, 0.0
    %v610 = vmul.f32 %v608, 0.2
    %v611 = vsel %vm609, %v608, %v610
    %v612 = vmul.f32 %v365, %v611
    %v613 = vadd.f32 %v606, %v612
    %v614 = vperm.slane %v159, 4
    %v615 = vadd.f32 %v155, %v614
    %vm616 = vcmp.gt.f32.partialorder %v615, 0.0
    %v617 = vmul.f32 %v615, 0.2
    %v618 = vsel %vm616, %v615, %v617
    %v619 = vmul.f32 %v374, %v618
    %v620 = vadd.f32 %v613, %v619
    %v621 = vperm.slane %v192, 4
    %v622 = vadd.f32 %v188, %v621
    %vm623 = vcmp.gt.f32.partialorder %v622, 0.0
    %v624 = vmul.f32 %v622, 0.2
    %v625 = vsel %vm623, %v622, %v624
    %v626 = vmul.f32 %v383, %v625
    %v627 = vadd.f32 %v620, %v626
    %v628 = vperm.slane %v225, 4
    %v629 = vadd.f32 %v221, %v628
    %vm630 = vcmp.gt.f32.partialorder %v629, 0.0
    %v631 = vmul.f32 %v629, 0.2
    %v632 = vsel %vm630, %v629, %v631
    %v633 = vmul.f32 %v392, %v632
    %v634 = vadd.f32 %v627, %v633
    %v635 = vperm.slane %v258, 4
    %v636 = vadd.f32 %v254, %v635
    %vm637 = vcmp.gt.f32.partialorder %v636, 0.0
    %v638 = vmul.f32 %v636, 0.2
    %v639 = vsel %vm637, %v636, %v638
    %v640 = vmul.f32 %v401, %v639
    %v641 = vadd.f32 %v634, %v640
    %v642 = vperm.slane %v291, 4
    %v643 = vadd.f32 %v287, %v642
    %vm644 = vcmp.gt.f32.partialorder %v643, 0.0
    %v645 = vmul.f32 %v643, 0.2
    %v646 = vsel %vm644, %v643, %v645
    %v647 = vmul.f32 %v410, %v646
    %v648 = vadd.f32 %v641, %v647
    %v649 = vperm.slane %v324, 4
    %v650 = vadd.f32 %v320, %v649
    %vm651 = vcmp.gt.f32.partialorder %v650, 0.0
    %v652 = vmul.f32 %v650, 0.2
    %v653 = vsel %vm651, %v650, %v652
    %v654 = vmul.f32 %v419, %v653
    %v655 = vadd.f32 %v648, %v654
    %v656 = vperm.slane %v357, 4
    %v657 = vadd.f32 %v353, %v656
    %vm658 = vcmp.gt.f32.partialorder %v657, 0.0
    %v659 = vmul.f32 %v657, 0.2
    %v660 = vsel %vm658, %v657, %v659
    %v661 = vmul.f32 %v428, %v660
    %v662 = vadd.f32 %v655, %v661
    %s663 = scalar_lea.vmem [#allocation7], 40
    %v664 = vld [vmem:[%s663] sm:$0xff]
    %v665 = vperm.slane %v126, 5
    %v666 = vadd.f32 %v122, %v665
    %vm667 = vcmp.gt.f32.partialorder %v666, 0.0
    %v668 = vmul.f32 %v666, 0.2
    %v669 = vsel %vm667, %v666, %v668
    %v670 = vmul.f32 %v365, %v669
    %v671 = vadd.f32 %v664, %v670
    %v672 = vperm.slane %v159, 5
    %v673 = vadd.f32 %v155, %v672
    %vm674 = vcmp.gt.f32.partialorder %v673, 0.0
    %v675 = vmul.f32 %v673, 0.2
    %v676 = vsel %vm674, %v673, %v675
    %v677 = vmul.f32 %v374, %v676
    %v678 = vadd.f32 %v671, %v677
    %v679 = vperm.slane %v192, 5
    %v680 = vadd.f32 %v188, %v679
    %vm681 = vcmp.gt.f32.partialorder %v680, 0.0
    %v682 = vmul.f32 %v680, 0.2
    %v683 = vsel %vm681, %v680, %v682
    %v684 = vmul.f32 %v383, %v683
    %v685 = vadd.f32 %v678, %v684
    %v686 = vperm.slane %v225, 5
    %v687 = vadd.f32 %v221, %v686
    %vm688 = vcmp.gt.f32.partialorder %v687, 0.0
    %v689 = vmul.f32 %v687, 0.2
    %v690 = vsel %vm688, %v687, %v689
    %v691 = vmul.f32 %v392, %v690
    %v692 = vadd.f32 %v685, %v691
    %v693 = vperm.slane %v258, 5
    %v694 = vadd.f32 %v254, %v693
    %vm695 = vcmp.gt.f32.partialorder %v694, 0.0
    %v696 = vmul.f32 %v694, 0.2
    %v697 = vsel %vm695, %v694, %v696
    %v698 = vmul.f32 %v401, %v697
    %v699 = vadd.f32 %v692, %v698
    %v700 = vperm.slane %v291, 5
    %v701 = vadd.f32 %v287, %v700
    %vm702 = vcmp.gt.f32.partialorder %v701, 0.0
    %v703 = vmul.f32 %v701, 0.2
    %v704 = vsel %vm702, %v701, %v703
    %v705 = vmul.f32 %v410, %v704
    %v706 = vadd.f32 %v699, %v705
    %v707 = vperm.slane %v324, 5
    %v708 = vadd.f32 %v320, %v707
    %vm709 = vcmp.gt.f32.partialorder %v708, 0.0
    %v710 = vmul.f32 %v708, 0.2
    %v711 = vsel %vm709, %v708, %v710
    %v712 = vmul.f32 %v419, %v711
    %v713 = vadd.f32 %v706, %v712
    %v714 = vperm.slane %v357, 5
    %v715 = vadd.f32 %v353, %v714
    %vm716 = vcmp.gt.f32.partialorder %v715, 0.0
    %v717 = vmul.f32 %v715, 0.2
    %v718 = vsel %vm716, %v715, %v717
    %v719 = vmul.f32 %v428, %v718
    %v720 = vadd.f32 %v713, %v719
    %s721 = scalar_lea.vmem [#allocation7], 48
    %v722 = vld [vmem:[%s721] sm:$0xff]
    %v723 = vperm.slane %v126, 6
    %v724 = vadd.f32 %v122, %v723
    %vm725 = vcmp.gt.f32.partialorder %v724, 0.0
    %v726 = vmul.f32 %v724, 0.2
    %v727 = vsel %vm725, %v724, %v726
    %v728 = vmul.f32 %v365, %v727
    %v729 = vadd.f32 %v722, %v728
    %v730 = vperm.slane %v159, 6
    %v731 = vadd.f32 %v155, %v730
    %vm732 = vcmp.gt.f32.partialorder %v731, 0.0
    %v733 = vmul.f32 %v731, 0.2
    %v734 = vsel %vm732, %v731, %v733
    %v735 = vmul.f32 %v374, %v734
    %v736 = vadd.f32 %v729, %v735
    %v737 = vperm.slane %v192, 6
    %v738 = vadd.f32 %v188, %v737
    %vm739 = vcmp.gt.f32.partialorder %v738, 0.0
    %v740 = vmul.f32 %v738, 0.2
    %v741 = vsel %vm739, %v738, %v740
    %v742 = vmul.f32 %v383, %v741
    %v743 = vadd.f32 %v736, %v742
    %v744 = vperm.slane %v225, 6
    %v745 = vadd.f32 %v221, %v744
    %vm746 = vcmp.gt.f32.partialorder %v745, 0.0
    %v747 = vmul.f32 %v745, 0.2
    %v748 = vsel %vm746, %v745, %v747
    %v749 = vmul.f32 %v392, %v748
    %v750 = vadd.f32 %v743, %v749
    %v751 = vperm.slane %v258, 6
    %v752 = vadd.f32 %v254, %v751
    %vm753 = vcmp.gt.f32.partialorder %v752, 0.0
    %v754 = vmul.f32 %v752, 0.2
    %v755 = vsel %vm753, %v752, %v754
    %v756 = vmul.f32 %v401, %v755
    %v757 = vadd.f32 %v750, %v756
    %v758 = vperm.slane %v291, 6
    %v759 = vadd.f32 %v287, %v758
    %vm760 = vcmp.gt.f32.partialorder %v759, 0.0
    %v761 = vmul.f32 %v759, 0.2
    %v762 = vsel %vm760, %v759, %v761
    %v763 = vmul.f32 %v410, %v762
    %v764 = vadd.f32 %v757, %v763
    %v765 = vperm.slane %v324, 6
    %v766 = vadd.f32 %v320, %v765
    %vm767 = vcmp.gt.f32.partialorder %v766, 0.0
    %v768 = vmul.f32 %v766, 0.2
    %v769 = vsel %vm767, %v766, %v768
    %v770 = vmul.f32 %v419, %v769
    %v771 = vadd.f32 %v764, %v770
    %v772 = vperm.slane %v357, 6
    %v773 = vadd.f32 %v353, %v772
    %vm774 = vcmp.gt.f32.partialorder %v773, 0.0
    %v775 = vmul.f32 %v773, 0.2
    %v776 = vsel %vm774, %v773, %v775
    %v777 = vmul.f32 %v428, %v776
    %v778 = vadd.f32 %v771, %v777
    %s779 = scalar_lea.vmem [#allocation7], 56
    %v780 = vld [vmem:[%s779] sm:$0xff]
    %v781 = vperm.slane %v126, 7
    %v782 = vadd.f32 %v122, %v781
    %vm783 = vcmp.gt.f32.partialorder %v782, 0.0
    %v784 = vmul.f32 %v782, 0.2
    %v785 = vsel %vm783, %v782, %v784
    %v786 = vmul.f32 %v365, %v785
    %v787 = vadd.f32 %v780, %v786
    %v788 = vperm.slane %v159, 7
    %v789 = vadd.f32 %v155, %v788
    %vm790 = vcmp.gt.f32.partialorder %v789, 0.0
    %v791 = vmul.f32 %v789, 0.2
    %v792 = vsel %vm790, %v789, %v791
    %v793 = vmul.f32 %v374, %v792
    %v794 = vadd.f32 %v787, %v793
    %v795 = vperm.slane %v192, 7
    %v796 = vadd.f32 %v188, %v795
    %vm797 = vcmp.gt.f32.partialorder %v796, 0.0
    %v798 = vmul.f32 %v796, 0.2
    %v799 = vsel %vm797, %v796, %v798
    %v800 = vmul.f32 %v383, %v799
    %v801 = vadd.f32 %v794, %v800
    %v802 = vperm.slane %v225, 7
    %v803 = vadd.f32 %v221, %v802
    %vm804 = vcmp.gt.f32.partialorder %v803, 0.0
    %v805 = vmul.f32 %v803, 0.2
    %v806 = vsel %vm804, %v803, %v805
    %v807 = vmul.f32 %v392, %v806
    %v808 = vadd.f32 %v801, %v807
    %v809 = vperm.slane %v258, 7
    %v810 = vadd.f32 %v254, %v809
    %vm811 = vcmp.gt.f32.partialorder %v810, 0.0
    %v812 = vmul.f32 %v810, 0.2
    %v813 = vsel %vm811, %v810, %v812
    %v814 = vmul.f32 %v401, %v813
    %v815 = vadd.f32 %v808, %v814
    %v816 = vperm.slane %v291, 7
    %v817 = vadd.f32 %v287, %v816
    %vm818 = vcmp.gt.f32.partialorder %v817, 0.0
    %v819 = vmul.f32 %v817, 0.2
    %v820 = vsel %vm818, %v817, %v819
    %v821 = vmul.f32 %v410, %v820
    %v822 = vadd.f32 %v815, %v821
    %v823 = vperm.slane %v324, 7
    %v824 = vadd.f32 %v320, %v823
    %vm825 = vcmp.gt.f32.partialorder %v824, 0.0
    %v826 = vmul.f32 %v824, 0.2
    %v827 = vsel %vm825, %v824, %v826
    %v828 = vmul.f32 %v419, %v827
    %v829 = vadd.f32 %v822, %v828
    %v830 = vperm.slane %v357, 7
    %v831 = vadd.f32 %v353, %v830
    %vm832 = vcmp.gt.f32.partialorder %v831, 0.0
    %v833 = vmul.f32 %v831, 0.2
    %v834 = vsel %vm832, %v831, %v833
    %v835 = vmul.f32 %v428, %v834
    %v836 = vadd.f32 %v829, %v835
    %v837 = vmax.f32 %v430, %v488
    %v838 = vmax.f32 %v837, %v546
    %v839 = vmax.f32 %v838, %v604
    %v840 = vmax.f32 %v839, %v662
    %v841 = vmax.f32 %v840, %v720
    %v842 = vmax.f32 %v841, %v778
    %v843 = vmax.f32 %v842, %v836
    %v844 = vsub.f32 %v430, %v843
    %v845 = vmul.f32 %v844, 1.442695
    %v846 = vpow.pop %v845
    %v847 = vsub.f32 %v488, %v843
    %v848 = vmul.f32 %v847, 1.442695
    %v849 = vpow.pop %v848
    %v850 = vsub.f32 %v546, %v843
    %v851 = vmul.f32 %v850, 1.442695
    %v852 = vpow.pop %v851
    %v853 = vsub.f32 %v604, %v843
    %v854 = vmul.f32 %v853, 1.442695
    %v855 = vpow.pop %v854
    %v856 = vsub.f32 %v662, %v843
    %v857 = vmul.f32 %v856, 1.442695
    %v858 = vpow.pop %v857
    %v859 = vsub.f32 %v720, %v843
    %v860 = vmul.f32 %v859, 1.442695
    %v861 = vpow.pop %v860
    %v862 = vsub.f32 %v778, %v843
    %v863 = vmul.f32 %v862, 1.442695
    %v864 = vpow.pop %v863
    %v865 = vsub.f32 %v836, %v843
    %v866 = vmul.f32 %v865, 1.442695
    %v867 = vpow.pop %v866
    %v868 = vadd.f32 %v846, %v849
    %v869 = vadd.f32 %v868, %v852
    %v870 = vadd.f32 %v869, %v855
    %v871 = vadd.f32 %v870, %v858
    %v872 = vadd.f32 %v871, %v861
    %v873 = vadd.f32 %v872, %v864
    %v874 = vadd.f32 %v873, %v867
    %v875 = vrcp.pop %v874
    %v876 = vmul.f32 %v874, %v875
    %v877 = vsub.f32 1.0, %v876
    %v878 = vmul.f32 %v875, %v877
    %v879 = vadd.f32 %v875, %v878
    %vm880 = vweird.f32 %v874
    %vm881 = vweird.f32 %v875
    %vm882 = vmor %vm880, %vm881
    %v883 = vsel %vm882, %v875, %v879
    %v884 = vand.u32 2147483647, %v874
    %vm885 = vcmp.eq.f32.partialorder %v884, 8.507059e+37
    %v886 = vand.u32 %v874, 2147483648
    %v887 = vor.u32 1.1754944e-38, %v886
    %v888 = vsel %vm885, %v887, %v883
    %v889 = vmul.f32 1.0, %v888
    %v890 = vmul.f32 %v846, %v889
    %v891 = vmul.f32 %v849, %v889
    %v892 = vmul.f32 %v852, %v889
    %v893 = vmul.f32 %v855, %v889
    %v894 = vmul.f32 %v858, %v889
    %v895 = vmul.f32 %v861, %v889
    %v896 = vmul.f32 %v864, %v889
    %v897 = vmul.f32 %v867, %v889
    %v898 = vperm.slane %v90, 0
    %v899 = vmul.f32 %v890, %v898
    %v900 = vperm.slane %v90, 1
    %v901 = vmul.f32 %v891, %v900
    %v902 = vadd.f32 %v899, %v901
    %v903 = vperm.slane %v90, 2
    %v904 = vmul.f32 %v892, %v903
    %v905 = vadd.f32 %v902, %v904
    %v906 = vperm.slane %v90, 3
    %v907 = vmul.f32 %v893, %v906
    %v908 = vadd.f32 %v905, %v907
    %v909 = vperm.slane %v90, 4
    %v910 = vmul.f32 %v894, %v909
    %v911 = vadd.f32 %v908, %v910
    %v912 = vperm.slane %v90, 5
    %v913 = vmul.f32 %v895, %v912
    %v914 = vadd.f32 %v911, %v913
    %v915 = vperm.slane %v90, 6
    %v916 = vmul.f32 %v896, %v915
    %v917 = vadd.f32 %v914, %v916
    %v918 = vperm.slane %v90, 7
    %v919 = vmul.f32 %v897, %v918
    %v920 = vadd.f32 %v917, %v919
    %v921 = vxor.u32 %v920, 2147483648
    %v922 = vmul.f32 %v921, 1.442695
    %v923 = vpow.pop %v922
    %v924 = vadd.f32 %v923, 1.0
    %v925 = vrcp.pop %v924
    %v926 = vmul.f32 %v924, %v925
    %v927 = vsub.f32 1.0, %v926
    %v928 = vmul.f32 %v925, %v927
    %v929 = vadd.f32 %v925, %v928
    %vm930 = vweird.f32 %v924
    %vm931 = vweird.f32 %v925
    %vm932 = vmor %vm930, %vm931
    %v933 = vsel %vm932, %v925, %v929
    %v934 = vand.u32 2147483647, %v924
    %vm935 = vcmp.eq.f32.partialorder %v934, 8.507059e+37
    %v936 = vand.u32 %v924, 2147483648
    %v937 = vor.u32 1.1754944e-38, %v936
    %v938 = vsel %vm935, %v937, %v933
    %v939 = vmul.f32 1.0, %v938
    %vm940 = vcmask 523264
    %941 = vst.msk [vmem:[#allocation13] sm:$0xff] %vm940, %v939
    %v942 = vperm.slane %v91, 0
    %v943 = vmul.f32 %v890, %v942
    %v944 = vperm.slane %v91, 1
    %v945 = vmul.f32 %v891, %v944
    %v946 = vadd.f32 %v943, %v945
    %v947 = vperm.slane %v91, 2
    %v948 = vmul.f32 %v892, %v947
    %v949 = vadd.f32 %v946, %v948
    %v950 = vperm.slane %v91, 3
    %v951 = vmul.f32 %v893, %v950
    %v952 = vadd.f32 %v949, %v951
    %v953 = vperm.slane %v91, 4
    %v954 = vmul.f32 %v894, %v953
    %v955 = vadd.f32 %v952, %v954
    %v956 = vperm.slane %v91, 5
    %v957 = vmul.f32 %v895, %v956
    %v958 = vadd.f32 %v955, %v957
    %v959 = vperm.slane %v91, 6
    %v960 = vmul.f32 %v896, %v959
    %v961 = vadd.f32 %v958, %v960
    %v962 = vperm.slane %v91, 7
    %v963 = vmul.f32 %v897, %v962
    %v964 = vadd.f32 %v961, %v963
    %v965 = vxor.u32 %v964, 2147483648
    %v966 = vmul.f32 %v965, 1.442695
    %v967 = vpow.pop %v966
    %v968 = vadd.f32 %v967, 1.0
    %v969 = vrcp.pop %v968
    %v970 = vmul.f32 %v968, %v969
    %v971 = vsub.f32 1.0, %v970
    %v972 = vmul.f32 %v969, %v971
    %v973 = vadd.f32 %v969, %v972
    %vm974 = vweird.f32 %v968
    %vm975 = vweird.f32 %v969
    %vm976 = vmor %vm974, %vm975
    %v977 = vsel %vm976, %v969, %v973
    %v978 = vand.u32 2147483647, %v968
    %vm979 = vcmp.eq.f32.partialorder %v978, 8.507059e+37
    %v980 = vand.u32 %v968, 2147483648
    %v981 = vor.u32 1.1754944e-38, %v980
    %v982 = vsel %vm979, %v981, %v977
    %v983 = vmul.f32 1.0, %v982
    %s984 = scalar_lea.vmem [#allocation13], 8
    %985 = vst.msk [vmem:[%s984] sm:$0xff] %vm940, %v983
    %v986 = vperm.slane %v92, 0
    %v987 = vmul.f32 %v890, %v986
    %v988 = vperm.slane %v92, 1
    %v989 = vmul.f32 %v891, %v988
    %v990 = vadd.f32 %v987, %v989
    %v991 = vperm.slane %v92, 2
    %v992 = vmul.f32 %v892, %v991
    %v993 = vadd.f32 %v990, %v992
    %v994 = vperm.slane %v92, 3
    %v995 = vmul.f32 %v893, %v994
    %v996 = vadd.f32 %v993, %v995
    %v997 = vperm.slane %v92, 4
    %v998 = vmul.f32 %v894, %v997
    %v999 = vadd.f32 %v996, %v998
    %v1000 = vperm.slane %v92, 5
    %v1001 = vmul.f32 %v895, %v1000
    %v1002 = vadd.f32 %v999, %v1001
    %v1003 = vperm.slane %v92, 6
    %v1004 = vmul.f32 %v896, %v1003
    %v1005 = vadd.f32 %v1002, %v1004
    %v1006 = vperm.slane %v92, 7
    %v1007 = vmul.f32 %v897, %v1006
    %v1008 = vadd.f32 %v1005, %v1007
    %v1009 = vxor.u32 %v1008, 2147483648
    %v1010 = vmul.f32 %v1009, 1.442695
    %v1011 = vpow.pop %v1010
    %v1012 = vadd.f32 %v1011, 1.0
    %v1013 = vrcp.pop %v1012
    %v1014 = vmul.f32 %v1012, %v1013
    %v1015 = vsub.f32 1.0, %v1014
    %v1016 = vmul.f32 %v1013, %v1015
    %v1017 = vadd.f32 %v1013, %v1016
    %vm1018 = vweird.f32 %v1012
    %vm1019 = vweird.f32 %v1013
    %vm1020 = vmor %vm1018, %vm1019
    %v1021 = vsel %vm1020, %v1013, %v1017
    %v1022 = vand.u32 2147483647, %v1012
    %vm1023 = vcmp.eq.f32.partialorder %v1022, 8.507059e+37
    %v1024 = vand.u32 %v1012, 2147483648
    %v1025 = vor.u32 1.1754944e-38, %v1024
    %v1026 = vsel %vm1023, %v1025, %v1021
    %v1027 = vmul.f32 1.0, %v1026
    %s1028 = scalar_lea.vmem [#allocation13], 16
    %1029 = vst.msk [vmem:[%s1028] sm:$0xff] %vm940, %v1027
    %v1030 = vperm.slane %v93, 0
    %v1031 = vmul.f32 %v890, %v1030
    %v1032 = vperm.slane %v93, 1
    %v1033 = vmul.f32 %v891, %v1032
    %v1034 = vadd.f32 %v1031, %v1033
    %v1035 = vperm.slane %v93, 2
    %v1036 = vmul.f32 %v892, %v1035
    %v1037 = vadd.f32 %v1034, %v1036
    %v1038 = vperm.slane %v93, 3
    %v1039 = vmul.f32 %v893, %v1038
    %v1040 = vadd.f32 %v1037, %v1039
    %v1041 = vperm.slane %v93, 4
    %v1042 = vmul.f32 %v894, %v1041
    %v1043 = vadd.f32 %v1040, %v1042
    %v1044 = vperm.slane %v93, 5
    %v1045 = vmul.f32 %v895, %v1044
    %v1046 = vadd.f32 %v1043, %v1045
    %v1047 = vperm.slane %v93, 6
    %v1048 = vmul.f32 %v896, %v1047
    %v1049 = vadd.f32 %v1046, %v1048
    %v1050 = vperm.slane %v93, 7
    %v1051 = vmul.f32 %v897, %v1050
    %v1052 = vadd.f32 %v1049, %v1051
    %v1053 = vxor.u32 %v1052, 2147483648
    %v1054 = vmul.f32 %v1053, 1.442695
    %v1055 = vpow.pop %v1054
    %v1056 = vadd.f32 %v1055, 1.0
    %v1057 = vrcp.pop %v1056
    %v1058 = vmul.f32 %v1056, %v1057
    %v1059 = vsub.f32 1.0, %v1058
    %v1060 = vmul.f32 %v1057, %v1059
    %v1061 = vadd.f32 %v1057, %v1060
    %vm1062 = vweird.f32 %v1056
    %vm1063 = vweird.f32 %v1057
    %vm1064 = vmor %vm1062, %vm1063
    %v1065 = vsel %vm1064, %v1057, %v1061
    %v1066 = vand.u32 2147483647, %v1056
    %vm1067 = vcmp.eq.f32.partialorder %v1066, 8.507059e+37
    %v1068 = vand.u32 %v1056, 2147483648
    %v1069 = vor.u32 1.1754944e-38, %v1068
    %v1070 = vsel %vm1067, %v1069, %v1065
    %v1071 = vmul.f32 1.0, %v1070
    %s1072 = scalar_lea.vmem [#allocation13], 24
    %1073 = vst.msk [vmem:[%s1072] sm:$0xff] %vm940, %v1071
    // Predicated region
    $region42: #{tpu_custom_call.1} parent=1 // pred_check
      _
    $region43: #{tpu_custom_call.1} parent=1 // pred_check_branch
      %1075 = sbr.rel (0) target = $region45
    $region44: #{tpu_custom_call.1} parent=1 // pred_region
      %1077 = vsyncadd [#allocation4], 0
      %s1078 = sshll.u32 [#allocation13], 4
      %s1079 = int_to_ptr.vmem [resolvable:$true] %s1078
      %s1080 = sshll.u32 %s5, 4
      %s1081 = int_to_ptr.hbm [resolvable:$true] %s1080
      %1086 = dma.vmem_to_hbm [thread:$0]  %s1079, 512, %s1081, [#allocation4], 128, 128, 8
    $region45: #{tpu_custom_call.1} parent=1 // pred_fallthru
      _
    // Predicated region
    $region46: #{tpu_custom_call.1} parent=1 // pred_check
      _
    $region47: #{tpu_custom_call.1} parent=1 // pred_check_branch
      %1088 = sbr.rel (0) target = $region49
    $region48: #{tpu_custom_call.1} parent=1 // pred_region
      %1090 = dma.done [#allocation4], 512
    $region49: #{tpu_custom_call.1} parent=1 // pred_fallthru
      _
    %1091 = vsyncpa [#allocation3], 1
    %1092 = vsyncpa [#allocation8], 1
    %1093 = vsyncpa [#allocation4], 1
    %1094 = vsyncpa [#allocation5], 1
    %1095 = vsyncpa [#allocation6], 1
    %1096 = vsyncpa [#allocation12], 1

</llo_original>
